<compile_context>
chip_gen: v7x
topology: tpu7x:2x2x1
jax: 0.10.0
libtpu: 0.0.40
codegen_flags: <defaults>
</compile_context>

<pallas_src>
import math

import jax
import jax.numpy as jnp
from jax.experimental import pallas as pl
from jax.experimental.pallas import tpu as pltpu

VOCAB = 2000     # Embedding(2000, 32)
EMB = 32
C1 = 256         # conv1 output channels
C2 = 32          # conv2 output channels
KW = 3           # conv kernel width
POOL = 3         # maxpool kernel == stride
NW = 3           # pooled windows (T1 // POOL)
HID = 256        # Linear(32, 256)
OUT = 10         # Linear(256, 10)
OUT_PAD = 128    # lane-padded output width (sliced back to OUT in the wrapper)
KPAD = 128       # conv1 contraction dim, zero-padded 96 -> 128 (lane-dense MXU)
SEQ = 11         # chosen so flatten() produces exactly 32 features
MAX_BLOCK_B = 256  # batch tile cap (review range 128-512; safe on v7x VMEM)


def _cdiv(a, b):
    return (a + b - 1) // b


def _round_up(a, b):
    return _cdiv(a, b) * b


def recruitment2_kernel(x_ref, w1_ref, b1_ref, wf_ref, bf_ref, out_ref):
    """One batch-tile: conv1(k=3)+ReLU -> maxpool(3,3) -> fused affine tail.

    x_ref  : (TB*T1, 128)  bf16   im2col'd + K-padded activations
    w1_ref : (128, 256)    bf16   conv1 weight (taps fused, K-padded)
    b1_ref : (1, 256)      f32
    wf_ref : (768, 128)    f32    fused conv2->dense1->dense2 weight (lane-padded)
    bf_ref : (1, 128)      f32
    out_ref: (TB, 128)     f32
    """
    TB = out_ref.shape[0]
    T1 = x_ref.shape[0] // TB            # = 9
    c1 = w1_ref.shape[1]                 # = 256

    # --- Conv1d(32 -> 256, k=3): one lane-dense (M,128)@(128,256) MXU matmul --
    y1 = jnp.dot(x_ref[...], w1_ref[...], preferred_element_type=jnp.float32)
    y1 = jnp.maximum(y1 + b1_ref[...], 0.0)          # (TB*T1, 256), f32
    y1 = y1.reshape(TB, T1, c1)

    # --- MaxPool1d(3,3) + fused affine tail, no lane-concat ------------------
    # Each pooled window feeds its 256-row block of the fused (768,128) weight;
    # accumulate straight into the (TB, 128) output tile.
    wf = wf_ref[...]
    o = jnp.zeros((TB, out_ref.shape[1]), jnp.float32)
    for w in range(T1 // POOL):                      # static 3-iteration loop
        pw = jnp.max(y1[:, w * POOL:(w + 1) * POOL, :], axis=1)   # (TB, 256)
        o = o + jnp.dot(pw, wf[w * c1:(w + 1) * c1, :],
                        preferred_element_type=jnp.float32)
    out_ref[...] = (o + bf_ref[...]).astype(out_ref.dtype)        # (TB, 128)


def recruitment2_forward(ids, params, *, max_block_b=MAX_BLOCK_B):
    emb, w1, b1, w2, b2, wd1, bd1, wd2, bd2 = params
    B, L = ids.shape
    T1 = L - KW + 1
    assert T1 == NW * POOL, "seq_len must give T1 == 9 (flatten -> 32 features)"

    # --- Batch tiling: clamp the tile to the actual batch --------------------
    # Spread the (8-rounded) batch over the minimum number of steps that keeps
    # block_b <= max_block_b, then round the per-step tile up to 8.  Small
    # batches -> one small tile (no dead work); large batches -> near-full
    # tiles and multiple "parallel" grid steps (megacore on v7x).
    b8 = _round_up(B, 8)
    n_steps = max(1, _cdiv(b8, max_block_b))
    block_b = _round_up(_cdiv(b8, n_steps), 8)
    Bp = n_steps * block_b

    ids_p = jnp.pad(ids, ((0, Bp - B), (0, 0)))

    # --- Embedding gather (cheap XLA gather) in bf16 --------------------------
    x = emb.astype(jnp.bfloat16)[ids_p]                           # (Bp, L, 32)

    # --- Wrapper-side im2col, K zero-padded 96 -> 128, flattened to 2-D ------
    xw = jnp.concatenate([x[:, k:k + T1, :] for k in range(KW)], axis=-1)
    xw = jnp.pad(xw, ((0, 0), (0, 0), (0, KPAD - KW * EMB)))      # (Bp, T1, 128)
    x2 = xw.reshape(Bp * T1, KPAD)                                # (Bp*T1, 128)

    # Conv1 weight: taps fused along K, zero-padded to 128, bf16 for the MXU.
    w1f = jnp.pad(w1.reshape(KW * EMB, C1),
                  ((0, KPAD - KW * EMB), (0, 0))).astype(jnp.bfloat16)

    # --- Fuse the entirely-affine tail (computed & kept in f32) --------------
    # flat = pf @ w2f + b2; h = flat@wd1 + bd1; o = h@wd2 + bd2
    #   ==> o = pf @ (w2f@wd1@wd2) + (b2@wd1@wd2 + bd1@wd2 + bd2)
    w2f = w2.reshape(KW * C1, C2)                                 # (768, 32)
    wf = w2f @ wd1 @ wd2                                          # (768, 10)
    bf = b2 @ wd1 @ wd2 + bd1 @ wd2 + bd2                         # (1, 10)
    wf = jnp.pad(wf, ((0, 0), (0, OUT_PAD - OUT)))                # (768, 128)
    bf = jnp.pad(bf, ((0, 0), (0, OUT_PAD - OUT)))                # (1, 128)

    flops = 2 * Bp * (T1 * KPAD * C1 + KW * C1 * OUT_PAD)
    bytes_accessed = (x2.size * 2 + Bp * OUT_PAD * 4
                      + w1f.size * 2 + b1.size * 4 + wf.size * 4 + bf.size * 4)

    out = pl.pallas_call(
        recruitment2_kernel,
        out_shape=jax.ShapeDtypeStruct((Bp, OUT_PAD), jnp.float32),
        grid=(n_steps,),
        in_specs=[
            pl.BlockSpec((block_b * T1, KPAD), lambda i: (i, 0)),   # activations
            pl.BlockSpec((KPAD, C1), lambda i: (0, 0)),             # conv1 W (bf16)
            pl.BlockSpec((1, C1), lambda i: (0, 0)),                # conv1 b
            pl.BlockSpec((KW * C1, OUT_PAD), lambda i: (0, 0)),     # fused tail W
            pl.BlockSpec((1, OUT_PAD), lambda i: (0, 0)),           # fused tail b
        ],
        out_specs=pl.BlockSpec((block_b, OUT_PAD), lambda i: (i, 0)),
        compiler_params=pltpu.CompilerParams(
            dimension_semantics=("parallel",)),
        cost_estimate=pl.CostEstimate(
            flops=flops, transcendentals=0, bytes_accessed=bytes_accessed),
    )(x2, w1f, b1, wf, bf)

    return out[:B, :OUT]


def init_params(key):
    ks = jax.random.split(key, 9)

    def u(k, shape, fan_in):
        s = 1.0 / math.sqrt(fan_in)
        return jax.random.uniform(k, shape, jnp.float32, -s, s)

    emb = jax.random.normal(ks[0], (VOCAB, EMB), jnp.float32)   # nn.Embedding ~ N(0,1)
    w1 = u(ks[1], (KW, EMB, C1), EMB * KW)                      # conv1 (k, in, out)
    b1 = u(ks[2], (1, C1), EMB * KW)
    w2 = u(ks[3], (KW, C1, C2), C1 * KW)                        # conv2 (k, in, out)
    b2 = u(ks[4], (1, C2), C1 * KW)
    wd1 = u(ks[5], (32, HID), 32)                               # Linear(32, 256) as (in, out)
    bd1 = u(ks[6], (1, HID), 32)
    wd2 = u(ks[7], (HID, OUT), HID)                             # Linear(256, 10) as (in, out)
    bd2 = u(ks[8], (1, OUT), HID)
    return (emb, w1, b1, w2, b2, wd1, bd1, wd2, bd2)


def reference_forward(ids, params, *, input_dtype=jnp.bfloat16):
    """Pure-JAX reference with identical structure.

    Uses the same precision policy as the kernel (bf16-rounded activations and
    conv1 weight, f32 products/accumulation everywhere) so the comparison is
    tight; the un-fused sequential tail checks the wrapper's affine fusion.
    """
    emb, w1, b1, w2, b2, wd1, bd1, wd2, bd2 = params
    x = emb.astype(input_dtype)[ids].astype(jnp.float32)        # (B, L, 32)
    w1c = w1.astype(input_dtype).astype(jnp.float32)
    B, L, _ = x.shape
    T1 = L - KW + 1
    acc1 = jnp.zeros((B, T1, C1), jnp.float32)
    for k in range(KW):
        acc1 = acc1 + jnp.einsum('ble,ec->blc', x[:, k:k + T1], w1c[k])
    y1 = jax.nn.relu(acc1 + b1[None])                           # (B, 9, 256)
    p = jnp.max(y1.reshape(B, T1 // POOL, POOL, C1), axis=2)    # (B, 3, 256)
    acc2 = jnp.zeros((B, C2), jnp.float32)
    for k in range(KW):
        acc2 = acc2 + p[:, k] @ w2[k]
    flat = acc2 + b2                                            # (B, 32)
    h = flat @ wd1 + bd1
    return h @ wd2 + bd2                                        # (B, 10)


if __name__ == "__main__":
    root = jax.random.PRNGKey(0)
    pkey, ikey1, ikey2 = jax.random.split(root, 3)
    params = init_params(pkey)

    fwd = jax.jit(recruitment2_forward)

    # Small batch: exercises the block_b clamp (tile shrinks to 16) + padding.
    B1 = 12
    ids1 = jax.random.randint(ikey1, (B1, SEQ), 0, VOCAB, dtype=jnp.int32)
    out1 = jax.block_until_ready(fwd(ids1, params))
    ref1 = reference_forward(ids1, params)
    assert out1.shape == (B1, OUT) and out1.dtype == jnp.float32
    assert jnp.allclose(out1, ref1, atol=2e-3, rtol=2e-3), "mismatch (small batch)"

    # Larger batch: 2 grid steps of a 152-row tile (parallel across TCs),
    # exercises multi-step pipelining + the padded final tile.
    B2 = 300
    ids2 = jax.random.randint(ikey2, (B2, SEQ), 0, VOCAB, dtype=jnp.int32)
    out2 = jax.block_until_ready(fwd(ids2, params))
    ref2 = reference_forward(ids2, params)
    assert out2.shape == (B2, OUT) and out2.dtype == jnp.float32
    assert jnp.allclose(out2, ref2, atol=2e-3, rtol=2e-3), "mismatch (large batch)"

    print("KERNEL_OK")
</pallas_src>

<mosaic_0001>
module attributes {stable_mosaic.version = 11 : i64} {
  func.func @recruitment2_kernel(%arg0: i32, %arg1: memref<144x128xbf16, #tpu.memory_space<vmem>>, %arg2: memref<128x256xbf16, #tpu.memory_space<vmem>>, %arg3: memref<1x256xf32, #tpu.memory_space<vmem>>, %arg4: memref<768x128xf32, #tpu.memory_space<vmem>>, %arg5: memref<1x128xf32, #tpu.memory_space<vmem>>, %arg6: memref<16x128xf32, #tpu.memory_space<vmem>>) attributes {dimension_semantics = [#tpu.dimension_semantics<parallel>], iteration_bounds = array<i64: 1>, scalar_prefetch = 0 : i64, scratch_operands = 0 : i64, tpu.core_type = #tpu.core_type<tc>, window_params = [{transform_indices = @transform_0, window_bounds = array<i64: 144, 128>}, {pipeline_mode = #tpu.pipeline_mode<synchronous>, transform_indices = @transform_1, window_bounds = array<i64: 128, 256>}, {pipeline_mode = #tpu.pipeline_mode<synchronous>, transform_indices = @transform_2, window_bounds = array<i64: 1, 256>}, {pipeline_mode = #tpu.pipeline_mode<synchronous>, transform_indices = @transform_3, window_bounds = array<i64: 768, 128>}, {pipeline_mode = #tpu.pipeline_mode<synchronous>, transform_indices = @transform_4, window_bounds = array<i64: 1, 128>}, {transform_indices = @transform_5, window_bounds = array<i64: 16, 128>}]} {
    %c0 = arith.constant 0 : index
    %c0_0 = arith.constant 0 : index
    %0 = vector.load %arg1[%c0, %c0_0] : memref<144x128xbf16, #tpu.memory_space<vmem>>, vector<144x128xbf16>
    %c0_1 = arith.constant 0 : index
    %c0_2 = arith.constant 0 : index
    %1 = vector.load %arg2[%c0_1, %c0_2] : memref<128x256xbf16, #tpu.memory_space<vmem>>, vector<128x256xbf16>
    %cst = arith.constant dense<0.000000e+00> : vector<144x256xf32>
    %2 = tpu.matmul %0, %1, %cst {dimension_numbers = #tpu.dot_dimension_numbers<[1], [0], [0], [1], [0, 0, 1, 1], [], []>} : vector<144x128xbf16>, vector<128x256xbf16>, vector<144x256xf32> -> vector<144x256xf32>
    %c0_3 = arith.constant 0 : index
    %c0_4 = arith.constant 0 : index
    %3 = vector.load %arg3[%c0_3, %c0_4] : memref<1x256xf32, #tpu.memory_space<vmem>>, vector<1x256xf32>
    %4 = vector.broadcast %3 : vector<1x256xf32> to vector<144x256xf32>
    %5 = arith.addf %2, %4 : vector<144x256xf32>
    %cst_5 = arith.constant 0.000000e+00 : f32
    %6 = vector.broadcast %cst_5 : f32 to vector<144x256xf32>
    %7 = arith.maximumf %5, %6 : vector<144x256xf32>
    %8 = vector.shape_cast %7 : vector<144x256xf32> to vector<16x9x256xf32>
    %c0_6 = arith.constant 0 : index
    %c0_7 = arith.constant 0 : index
    %9 = vector.load %arg4[%c0_6, %c0_7] : memref<768x128xf32, #tpu.memory_space<vmem>>, vector<768x128xf32>
    %cst_8 = arith.constant 0.000000e+00 : f32
    %10 = vector.broadcast %cst_8 : f32 to vector<16x128xf32>
    %11 = vector.extract_strided_slice %8 {offsets = [0, 0, 0], sizes = [16, 3, 256], strides = [1, 1, 1]} : vector<16x9x256xf32> to vector<16x3x256xf32>
    %cst_9 = arith.constant dense<0xFF800000> : vector<16x256xf32>
    %12 = vector.multi_reduction <maximumf>, %11, %cst_9 [1] : vector<16x3x256xf32> to vector<16x256xf32>
    %13 = vector.extract_strided_slice %9 {offsets = [0, 0], sizes = [256, 128], strides = [1, 1]} : vector<768x128xf32> to vector<256x128xf32>
    %cst_10 = arith.constant dense<0.000000e+00> : vector<16x128xf32>
    %14 = tpu.matmul %12, %13, %cst_10 {dimension_numbers = #tpu.dot_dimension_numbers<[1], [0], [0], [1], [0, 0, 1, 1], [], []>} : vector<16x256xf32>, vector<256x128xf32>, vector<16x128xf32> -> vector<16x128xf32>
    %15 = arith.addf %10, %14 : vector<16x128xf32>
    %16 = vector.extract_strided_slice %8 {offsets = [0, 3, 0], sizes = [16, 3, 256], strides = [1, 1, 1]} : vector<16x9x256xf32> to vector<16x3x256xf32>
    %cst_11 = arith.constant dense<0xFF800000> : vector<16x256xf32>
    %17 = vector.multi_reduction <maximumf>, %16, %cst_11 [1] : vector<16x3x256xf32> to vector<16x256xf32>
    %18 = vector.extract_strided_slice %9 {offsets = [256, 0], sizes = [256, 128], strides = [1, 1]} : vector<768x128xf32> to vector<256x128xf32>
    %cst_12 = arith.constant dense<0.000000e+00> : vector<16x128xf32>
    %19 = tpu.matmul %17, %18, %cst_12 {dimension_numbers = #tpu.dot_dimension_numbers<[1], [0], [0], [1], [0, 0, 1, 1], [], []>} : vector<16x256xf32>, vector<256x128xf32>, vector<16x128xf32> -> vector<16x128xf32>
    %20 = arith.addf %15, %19 : vector<16x128xf32>
    %21 = vector.extract_strided_slice %8 {offsets = [0, 6, 0], sizes = [16, 3, 256], strides = [1, 1, 1]} : vector<16x9x256xf32> to vector<16x3x256xf32>
    %cst_13 = arith.constant dense<0xFF800000> : vector<16x256xf32>
    %22 = vector.multi_reduction <maximumf>, %21, %cst_13 [1] : vector<16x3x256xf32> to vector<16x256xf32>
    %23 = vector.extract_strided_slice %9 {offsets = [512, 0], sizes = [256, 128], strides = [1, 1]} : vector<768x128xf32> to vector<256x128xf32>
    %cst_14 = arith.constant dense<0.000000e+00> : vector<16x128xf32>
    %24 = tpu.matmul %22, %23, %cst_14 {dimension_numbers = #tpu.dot_dimension_numbers<[1], [0], [0], [1], [0, 0, 1, 1], [], []>} : vector<16x256xf32>, vector<256x128xf32>, vector<16x128xf32> -> vector<16x128xf32>
    %25 = arith.addf %20, %24 : vector<16x128xf32>
    %c0_15 = arith.constant 0 : index
    %c0_16 = arith.constant 0 : index
    %26 = vector.load %arg5[%c0_15, %c0_16] : memref<1x128xf32, #tpu.memory_space<vmem>>, vector<1x128xf32>
    %27 = vector.broadcast %26 : vector<1x128xf32> to vector<16x128xf32>
    %28 = arith.addf %25, %27 : vector<16x128xf32>
    %c0_17 = arith.constant 0 : index
    %c0_18 = arith.constant 0 : index
    %29 = vector.load %arg6[%c0_17, %c0_18] : memref<16x128xf32, #tpu.memory_space<vmem>>, vector<16x128xf32>
    tpu.vector_store %arg6[%c0_17, %c0_18], %28 {strides = array<i32>} : memref<16x128xf32, #tpu.memory_space<vmem>>, vector<16x128xf32>,
    return
  }
  func.func @transform_0(%arg0: i32) -> (i32, i32) {
    %c0_i32 = arith.constant 0 : i32
    %c0_i32_0 = arith.constant 0 : i32
    return %arg0, %c0_i32 : i32, i32
  }
  func.func @transform_1(%arg0: i32) -> (i32, i32) {
    %c0_i32 = arith.constant 0 : i32
    %c0_i32_0 = arith.constant 0 : i32
    %c0_i32_1 = arith.constant 0 : i32
    return %c0_i32, %c0_i32_0 : i32, i32
  }
  func.func @transform_2(%arg0: i32) -> (i32, i32) {
    %c0_i32 = arith.constant 0 : i32
    %c0_i32_0 = arith.constant 0 : i32
    %c0_i32_1 = arith.constant 0 : i32
    return %c0_i32, %c0_i32_0 : i32, i32
  }
  func.func @transform_3(%arg0: i32) -> (i32, i32) {
    %c0_i32 = arith.constant 0 : i32
    %c0_i32_0 = arith.constant 0 : i32
    %c0_i32_1 = arith.constant 0 : i32
    return %c0_i32, %c0_i32_0 : i32, i32
  }
  func.func @transform_4(%arg0: i32) -> (i32, i32) {
    %c0_i32 = arith.constant 0 : i32
    %c0_i32_0 = arith.constant 0 : i32
    %c0_i32_1 = arith.constant 0 : i32
    return %c0_i32, %c0_i32_0 : i32, i32
  }
  func.func @transform_5(%arg0: i32) -> (i32, i32) {
    %c0_i32 = arith.constant 0 : i32
    %c0_i32_0 = arith.constant 0 : i32
    return %arg0, %c0_i32 : i32, i32
  }
}

</mosaic_0001>

<llo_original>
// kernel: recruitment2_forward.1
$region0: #{recruitment2_forward.1}
  #allocation0 [shape = 'u32[]', space=smem, size = 0x4, offset = 0x4, fixed_abs, tag = 'smem constant byte address 0x4 - core index']
  #allocation1 [shape = 'u32[144,128]{1,0:T(1,128)}', space=vmem, size = 0x12000, scoped, tag = 'internal scratch']
  %s0 = inlined_call_operand.vmem [shape: bf16[144,128], index: 0, kind: input, shape index: {}]
  %s1 = inlined_call_operand.vmem [shape: bf16[128,256], index: 1, kind: input, shape index: {}]
  %s2 = inlined_call_operand.vmem [shape: f32[1,256], index: 2, kind: input, shape index: {}]
  %s3 = inlined_call_operand.vmem [shape: f32[768,128], index: 3, kind: input, shape index: {}]
  %s4 = inlined_call_operand.vmem [shape: f32[1,128], index: 4, kind: input, shape index: {}]
  %s5 = inlined_call_operand.hbm [shape: f32[16,128], index: 5, kind: output, shape index: {}]
  %s6 = sld [smem:[#allocation0]]
  $region30: #{recruitment2_forward.1} parent=0
    _
  %s8 = ssub.s32 1, %s6
  %s9 = scalar_select 0, %s8, %s6
  $region1: #{recruitment2_forward.1} parent=0
    #allocation2 [shape = 'u8[8192]{0}', space=vmem, size = 0x2000, scoped, tag = 'output window, operand 0, single buffered']
    #allocation3 [shape = 's32[1]{0}', space=sflag, size = 0x4, scoped, tag = 'scoped memory for recruitment2_forward.1']
    %10 = vsyncpa [#allocation3], 0
    // Predicated region
    $region2: #{recruitment2_forward.1} parent=1 // pred_check
      _
    $region3: #{recruitment2_forward.1} parent=1 // pred_check_branch
      %12 = sbr.rel (0) target = $region5
    $region4: #{recruitment2_forward.1} parent=1 // pred_region
      _
    $region5: #{recruitment2_forward.1} parent=1 // pred_fallthru
      _
    // Predicated region
    $region6: #{recruitment2_forward.1} parent=1 // pred_check
      _
    $region7: #{recruitment2_forward.1} parent=1 // pred_check_branch
      %14 = sbr.rel (0) target = $region9
    $region8: #{recruitment2_forward.1} parent=1 // pred_region
      _
    $region9: #{recruitment2_forward.1} parent=1 // pred_fallthru
      _
    // Predicated region
    $region10: #{recruitment2_forward.1} parent=1 // pred_check
      _
    $region11: #{recruitment2_forward.1} parent=1 // pred_check_branch
      %16 = sbr.rel (0) target = $region13
    $region12: #{recruitment2_forward.1} parent=1 // pred_region
      _
    $region13: #{recruitment2_forward.1} parent=1 // pred_fallthru
      _
    // Predicated region
    $region14: #{recruitment2_forward.1} parent=1 // pred_check
      _
    $region15: #{recruitment2_forward.1} parent=1 // pred_check_branch
      %18 = sbr.rel (0) target = $region17
    $region16: #{recruitment2_forward.1} parent=1 // pred_region
      _
    $region17: #{recruitment2_forward.1} parent=1 // pred_fallthru
      _
    // Predicated region
    $region18: #{recruitment2_forward.1} parent=1 // pred_check
      _
    $region19: #{recruitment2_forward.1} parent=1 // pred_check_branch
      %20 = sbr.rel (0) target = $region21
    $region20: #{recruitment2_forward.1} parent=1 // pred_region
      _
    $region21: #{recruitment2_forward.1} parent=1 // pred_fallthru
      _
    %v22 = vld [vmem:[%s0] sm:$0xf]
    %v23 = vld [vmem:[%s0 + $0x4] sm:$0xf]
    %v24 = vld [vmem:[%s0 + $0x8] sm:$0xf]
    %v25 = vld [vmem:[%s0 + $0xc] sm:$0xf]
    %v26 = vld [vmem:[%s0 + $0x10] sm:$0xf]
    %v27 = vld [vmem:[%s0 + $0x14] sm:$0xf]
    %v28 = vld [vmem:[%s0 + $0x18] sm:$0xf]
    %v29 = vld [vmem:[%s0 + $0x1c] sm:$0xf]
    %v30 = vld [vmem:[%s0 + $0x20] sm:$0xf]
    %v31 = vld [vmem:[%s0 + $0x24] sm:$0xf]
    %v32 = vld [vmem:[%s0 + $0x28] sm:$0xf]
    %v33 = vld [vmem:[%s0 + $0x2c] sm:$0xf]
    %v34 = vld [vmem:[%s0 + $0x30] sm:$0xf]
    %v35 = vld [vmem:[%s0 + $0x34] sm:$0xf]
    %v36 = vld [vmem:[%s0 + $0x38] sm:$0xf]
    %v37 = vld [vmem:[%s0 + $0x3c] sm:$0xf]
    %v38 = vld [vmem:[%s0 + $0x40] sm:$0xf]
    %v39 = vld [vmem:[%s0 + $0x44] sm:$0xf]
    %v40 = vld [vmem:[%s1] sm:$0xff]
    %v41 = vld [vmem:[%s1 + $0x8] sm:$0xff]
    %v42 = vld [vmem:[%s1 + $0x10] sm:$0xff]
    %v43 = vld [vmem:[%s1 + $0x18] sm:$0xff]
    %v44 = vld [vmem:[%s1 + $0x20] sm:$0xff]
    %v45 = vld [vmem:[%s1 + $0x28] sm:$0xff]
    %v46 = vld [vmem:[%s1 + $0x30] sm:$0xff]
    %v47 = vld [vmem:[%s1 + $0x38] sm:$0xff]
    %v48 = vld [vmem:[%s1 + $0x40] sm:$0xff]
    %v49 = vld [vmem:[%s1 + $0x48] sm:$0xff]
    %v50 = vld [vmem:[%s1 + $0x50] sm:$0xff]
    %v51 = vld [vmem:[%s1 + $0x58] sm:$0xff]
    %v52 = vld [vmem:[%s1 + $0x60] sm:$0xff]
    %v53 = vld [vmem:[%s1 + $0x68] sm:$0xff]
    %v54 = vld [vmem:[%s1 + $0x70] sm:$0xff]
    %v55 = vld [vmem:[%s1 + $0x78] sm:$0xff]
    %v56 = vld [vmem:[%s2] sm:$0x3]
    %v58 = vlaneseq
    %v59 = vshrl.u32 %v58, 7
    %v60 = vsub.s32 0, %v59
    %v61 = vrot.slane %v56, %v60
    %v62 = vlaneseq
    %v63 = vshrl.u32 %v62, 7
    %v64 = vsub.s32 1, %v63
    %v65 = vrot.slane %v56, %v64
    %v86 = vunpack.c.l.b16 %v22
    %v87 = vunpack.c.l.b16 %v23
    %v88 = vunpack.c.l.b16 %v24
    %v89 = vunpack.c.l.b16 %v25
    %v90 = vunpack.c.l.b16 %v26
    %v91 = vunpack.c.l.b16 %v27
    %v92 = vunpack.c.l.b16 %v28
    %v93 = vunpack.c.l.b16 %v29
    %v94 = vunpack.c.l.b16 %v30
    %v95 = vunpack.c.l.b16 %v31
    %v96 = vunpack.c.l.b16 %v32
    %v97 = vunpack.c.l.b16 %v33
    %v98 = vunpack.c.l.b16 %v34
    %v99 = vunpack.c.l.b16 %v35
    %v100 = vunpack.c.l.b16 %v36
    %v101 = vunpack.c.l.b16 %v37
    %v102 = vunpack.c.l.b16 %v38
    %v103 = vunpack.c.l.b16 %v39
    %v104 = vpack.c.b16 %v87, %v86
    %v105 = vpack.c.b16 %v89, %v88
    %v106 = vpack.c.b16 %v91, %v90
    %v107 = vpack.c.b16 %v93, %v92
    %v108 = vpack.c.b16 %v95, %v94
    %v109 = vpack.c.b16 %v97, %v96
    %v110 = vpack.c.b16 %v99, %v98
    %v111 = vpack.c.b16 %v101, %v100
    %v112 = vpack.c.b16 %v103, %v102
    %v138 = vunpack.c.l.b16 %v40
    %v139 = vunpack.c.h.b16 %v40
    %v140 = vunpack.c.l.b16 %v41
    %v141 = vunpack.c.h.b16 %v41
    %v142 = vunpack.c.l.b16 %v42
    %v143 = vunpack.c.h.b16 %v42
    %v144 = vunpack.c.l.b16 %v43
    %v145 = vunpack.c.h.b16 %v43
    %v146 = vunpack.c.l.b16 %v44
    %v147 = vunpack.c.h.b16 %v44
    %v148 = vunpack.c.l.b16 %v45
    %v149 = vunpack.c.h.b16 %v45
    %v150 = vunpack.c.l.b16 %v46
    %v151 = vunpack.c.h.b16 %v46
    %v152 = vunpack.c.l.b16 %v47
    %v153 = vunpack.c.h.b16 %v47
    %v154 = vunpack.c.l.b16 %v48
    %v155 = vunpack.c.h.b16 %v48
    %v156 = vunpack.c.l.b16 %v49
    %v157 = vunpack.c.h.b16 %v49
    %v158 = vunpack.c.l.b16 %v50
    %v159 = vunpack.c.h.b16 %v50
    %v160 = vunpack.c.l.b16 %v51
    %v161 = vunpack.c.h.b16 %v51
    %v162 = vunpack.c.l.b16 %v52
    %v163 = vunpack.c.h.b16 %v52
    %v164 = vunpack.c.l.b16 %v53
    %v165 = vunpack.c.h.b16 %v53
    %v166 = vunpack.c.l.b16 %v54
    %v167 = vunpack.c.h.b16 %v54
    %v168 = vunpack.c.l.b16 %v55
    %v169 = vunpack.c.h.b16 %v55
    %v170 = vpack.c.b16 %v140, %v138
    %v171 = vpack.c.b16 %v141, %v139
    %v172 = vpack.c.b16 %v144, %v142
    %v173 = vpack.c.b16 %v145, %v143
    %v174 = vpack.c.b16 %v148, %v146
    %v175 = vpack.c.b16 %v149, %v147
    %v176 = vpack.c.b16 %v152, %v150
    %v177 = vpack.c.b16 %v153, %v151
    %v178 = vpack.c.b16 %v156, %v154
    %v179 = vpack.c.b16 %v157, %v155
    %v180 = vpack.c.b16 %v160, %v158
    %v181 = vpack.c.b16 %v161, %v159
    %v182 = vpack.c.b16 %v164, %v162
    %v183 = vpack.c.b16 %v165, %v163
    %v184 = vpack.c.b16 %v168, %v166
    %v185 = vpack.c.b16 %v169, %v167
    %202 = vmatprep.subr.bf16.mxu0 %v171
    %203 = vmatpush1.bf16.msra.mxu0 %v170
    %204 = vmatprep.subr.bf16.mxu0 %v173
    %205 = vmatpush1.bf16.msra.mxu0 %v172
    %206 = vmatprep.subr.bf16.mxu0 %v175
    %207 = vmatpush1.bf16.msra.mxu0 %v174
    %208 = vmatprep.subr.bf16.mxu0 %v177
    %209 = vmatpush1.bf16.msra.mxu0 %v176
    %210 = vmatprep.subr.bf16.mxu0 %v179
    %211 = vmatpush1.bf16.msra.mxu0 %v178
    %212 = vmatprep.subr.bf16.mxu0 %v181
    %213 = vmatpush1.bf16.msra.mxu0 %v180
    %214 = vmatprep.subr.bf16.mxu0 %v183
    %215 = vmatpush1.bf16.msra.mxu0 %v182
    %216 = vmatprep.subr.bf16.mxu0 %v185
    %217 = vmatpush1.bf16.msra.mxu0 %v184
    %218 = vmatprep.subr.bf16.mxu0 0
    %219 = vmatpush1.bf16.msra.mxu0 0
    %220 = vmatprep.subr.bf16.mxu0 0
    %221 = vmatpush1.bf16.msra.mxu0 0
    %222 = vmatprep.subr.bf16.mxu0 0
    %223 = vmatpush1.bf16.msra.mxu0 0
    %224 = vmatprep.subr.bf16.mxu0 0
    %225 = vmatpush1.bf16.msra.mxu0 0
    %226 = vmatprep.subr.bf16.mxu0 0
    %227 = vmatpush1.bf16.msra.mxu0 0
    %228 = vmatprep.subr.bf16.mxu0 0
    %229 = vmatpush1.bf16.msra.mxu0 0
    %230 = vmatprep.subr.bf16.mxu0 0
    %231 = vmatpush1.bf16.msra.mxu0 0
    %232 = vmatprep.subr.bf16.mxu0 0
    %233 = vmatpush1.bf16.msra.mxu0 0
    %234 = vmatprep.mubr.bf16.mxu0 0
    %235 = vmatmul.mubr.bf16.gmra.mrb[0].mxu0 %v104
    %v236 = vpop.f32.mrb[0].mxu0
    %v237 = vadd.f32 %v61, %v236
    %v238 = vpop.f32.mrb[0].mxu0
    %v239 = vadd.f32 %v65, %v238
    %v240 = vpop.f32.mrb[0].mxu0
    %v241 = vadd.f32 %v61, %v240
    %v242 = vpop.f32.mrb[0].mxu0
    %v243 = vadd.f32 %v65, %v242
    %244 = vmatprep.mubr.bf16.mxu0 0
    %245 = vmatmul.mubr.bf16.gmra.mrb[0].mxu0 %v105
    %v246 = vpop.f32.mrb[0].mxu0
    %v247 = vadd.f32 %v61, %v246
    %v248 = vpop.f32.mrb[0].mxu0
    %v249 = vadd.f32 %v65, %v248
    %v250 = vpop.f32.mrb[0].mxu0
    %v251 = vadd.f32 %v61, %v250
    %v252 = vpop.f32.mrb[0].mxu0
    %v253 = vadd.f32 %v65, %v252
    %254 = vmatprep.mubr.bf16.mxu0 0
    %255 = vmatmul.mubr.bf16.gmra.mrb[0].mxu0 %v106
    %v256 = vpop.f32.mrb[0].mxu0
    %v257 = vadd.f32 %v61, %v256
    %v258 = vpop.f32.mrb[0].mxu0
    %v259 = vadd.f32 %v65, %v258
    %v260 = vpop.f32.mrb[0].mxu0
    %v261 = vadd.f32 %v61, %v260
    %v262 = vpop.f32.mrb[0].mxu0
    %v263 = vadd.f32 %v65, %v262
    %264 = vmatprep.mubr.bf16.mxu0 0
    %265 = vmatmul.mubr.bf16.gmra.mrb[0].mxu0 %v107
    %v266 = vpop.f32.mrb[0].mxu0
    %v267 = vadd.f32 %v61, %v266
    %v268 = vpop.f32.mrb[0].mxu0
    %v269 = vadd.f32 %v65, %v268
    %v270 = vpop.f32.mrb[0].mxu0
    %v271 = vadd.f32 %v61, %v270
    %v272 = vpop.f32.mrb[0].mxu0
    %v273 = vadd.f32 %v65, %v272
    %274 = vmatprep.mubr.bf16.mxu0 0
    %275 = vmatmul.mubr.bf16.gmra.mrb[0].mxu0 %v108
    %v276 = vpop.f32.mrb[0].mxu0
    %v277 = vadd.f32 %v61, %v276
    %v278 = vpop.f32.mrb[0].mxu0
    %v279 = vadd.f32 %v65, %v278
    %v280 = vpop.f32.mrb[0].mxu0
    %v281 = vadd.f32 %v61, %v280
    %v282 = vpop.f32.mrb[0].mxu0
    %v283 = vadd.f32 %v65, %v282
    %284 = vmatprep.mubr.bf16.mxu0 0
    %285 = vmatmul.mubr.bf16.gmra.mrb[0].mxu0 %v109
    %v286 = vpop.f32.mrb[0].mxu0
    %v287 = vadd.f32 %v61, %v286
    %v288 = vpop.f32.mrb[0].mxu0
    %v289 = vadd.f32 %v65, %v288
    %v290 = vpop.f32.mrb[0].mxu0
    %v291 = vadd.f32 %v61, %v290
    %v292 = vpop.f32.mrb[0].mxu0
    %v293 = vadd.f32 %v65, %v292
    %294 = vmatprep.mubr.bf16.mxu0 0
    %295 = vmatmul.mubr.bf16.gmra.mrb[0].mxu0 %v110
    %v296 = vpop.f32.mrb[0].mxu0
    %v297 = vadd.f32 %v61, %v296
    %v298 = vpop.f32.mrb[0].mxu0
    %v299 = vadd.f32 %v65, %v298
    %v300 = vpop.f32.mrb[0].mxu0
    %v301 = vadd.f32 %v61, %v300
    %v302 = vpop.f32.mrb[0].mxu0
    %v303 = vadd.f32 %v65, %v302
    %304 = vmatprep.mubr.bf16.mxu0 0
    %305 = vmatmul.mubr.bf16.gmra.mrb[0].mxu0 %v111
    %v306 = vpop.f32.mrb[0].mxu0
    %v307 = vadd.f32 %v61, %v306
    %v308 = vpop.f32.mrb[0].mxu0
    %v309 = vadd.f32 %v65, %v308
    %v310 = vpop.f32.mrb[0].mxu0
    %v311 = vadd.f32 %v61, %v310
    %v312 = vpop.f32.mrb[0].mxu0
    %v313 = vadd.f32 %v65, %v312
    %314 = vmatprep.mubr.bf16.mxu0 0
    %315 = vmatmul.mubr.bf16.gmra.mrb[0].mxu0 %v112
    %v316 = vpop.f32.mrb[0].mxu0
    %v317 = vadd.f32 %v61, %v316
    %v318 = vpop.f32.mrb[0].mxu0
    %v319 = vadd.f32 %v65, %v318
    %v320 = vpop.f32.mrb[0].mxu0
    %v321 = vadd.f32 %v61, %v320
    %v322 = vpop.f32.mrb[0].mxu0
    %v323 = vadd.f32 %v65, %v322
    %324 = vdwg.mxu0
    %v325 = vmax.f32 %v237, 0.0
    %v326 = vmax.f32 %v239, 0.0
    %v327 = vmax.f32 %v241, 0.0
    %v328 = vmax.f32 %v243, 0.0
    %v329 = vmax.f32 %v247, 0.0
    %v330 = vmax.f32 %v249, 0.0
    %v331 = vmax.f32 %v251, 0.0
    %v332 = vmax.f32 %v253, 0.0
    %v333 = vmax.f32 %v257, 0.0
    %v334 = vmax.f32 %v259, 0.0
    %v335 = vmax.f32 %v261, 0.0
    %v336 = vmax.f32 %v263, 0.0
    %v337 = vmax.f32 %v267, 0.0
    %v338 = vmax.f32 %v269, 0.0
    %v339 = vmax.f32 %v271, 0.0
    %v340 = vmax.f32 %v273, 0.0
    %v341 = vmax.f32 %v277, 0.0
    %v342 = vmax.f32 %v279, 0.0
    %v343 = vmax.f32 %v281, 0.0
    %v344 = vmax.f32 %v283, 0.0
    %v345 = vmax.f32 %v287, 0.0
    %v346 = vmax.f32 %v289, 0.0
    %v347 = vmax.f32 %v291, 0.0
    %v348 = vmax.f32 %v293, 0.0
    %v349 = vmax.f32 %v297, 0.0
    %v350 = vmax.f32 %v299, 0.0
    %v351 = vmax.f32 %v301, 0.0
    %v352 = vmax.f32 %v303, 0.0
    %v353 = vmax.f32 %v307, 0.0
    %v354 = vmax.f32 %v309, 0.0
    %v355 = vmax.f32 %v311, 0.0
    %v356 = vmax.f32 %v313, 0.0
    %v357 = vmax.f32 %v317, 0.0
    %v358 = vmax.f32 %v319, 0.0
    %v359 = vmax.f32 %v321, 0.0
    %v360 = vmax.f32 %v323, 0.0
    %v397 = vcombine.low %v325, %v326
    %v398 = vcombine.high %v325, %v326
    %v400 = vunpack.c.l.s4 1966171168
    %v401 = vunpack.c.0.s8 %v400
    %v402 = vlaneseq
    %v403 = vshrl.u32 %v402, 7
    %v404 = vsub.s32 %v401, %v403
    %v405 = vrot.slane %v397, %v404
    %v407 = vunpack.c.l.s4 1966171168
    %v408 = vunpack.c.0.s8 %v407
    %v409 = vlaneseq
    %v410 = vshrl.u32 %v409, 7
    %v411 = vsub.s32 %v408, %v410
    %v412 = vrot.slane %v398, %v411
    %v413 = vcombine.high %v405, %v405
    %v414 = vcombine.high %v412, %v412
    %v416 = vunpack.c.l.s4 1966171168
    %v417 = vunpack.c.0.s8 %v416
    %v418 = vlaneseq
    %v419 = vshrl.u32 %v418, 7
    %v420 = vsub.s32 %v417, %v419
    %v421 = vrot.slane %v405, %v420
    %v423 = vunpack.c.l.s4 1966171168
    %v424 = vunpack.c.0.s8 %v423
    %v425 = vlaneseq
    %v426 = vshrl.u32 %v425, 7
    %v427 = vsub.s32 %v424, %v426
    %v428 = vrot.slane %v412, %v427
    %v430 = vunpack.c.l.s4 1966171168
    %v431 = vunpack.c.0.s8 %v430
    %v432 = vlaneseq
    %v433 = vshrl.u32 %v432, 7
    %v434 = vsub.s32 %v431, %v433
    %v435 = vrot.slane %v413, %v434
    %v437 = vunpack.c.l.s4 1966171168
    %v438 = vunpack.c.0.s8 %v437
    %v439 = vlaneseq
    %v440 = vshrl.u32 %v439, 7
    %v441 = vsub.s32 %v438, %v440
    %v442 = vrot.slane %v414, %v441
    %v443 = vcombine.high %v421, %v421
    %v444 = vcombine.high %v428, %v428
    %v445 = vcombine.high %v435, %v435
    %v446 = vcombine.high %v442, %v442
    %v447 = vcombine.low %v327, %v328
    %v448 = vcombine.high %v327, %v328
    %v450 = vunpack.c.l.s4 1966171168
    %v451 = vunpack.c.0.s8 %v450
    %v452 = vlaneseq
    %v453 = vshrl.u32 %v452, 7
    %v454 = vsub.s32 %v451, %v453
    %v455 = vrot.slane %v447, %v454
    %v457 = vunpack.c.l.s4 1966171168
    %v458 = vunpack.c.0.s8 %v457
    %v459 = vlaneseq
    %v460 = vshrl.u32 %v459, 7
    %v461 = vsub.s32 %v458, %v460
    %v462 = vrot.slane %v448, %v461
    %v463 = vcombine.high %v455, %v455
    %v464 = vcombine.high %v462, %v462
    %v466 = vunpack.c.l.s4 1966171168
    %v467 = vunpack.c.0.s8 %v466
    %v468 = vlaneseq
    %v469 = vshrl.u32 %v468, 7
    %v470 = vsub.s32 %v467, %v469
    %v471 = vrot.slane %v455, %v470
    %v473 = vunpack.c.l.s4 1966171168
    %v474 = vunpack.c.0.s8 %v473
    %v475 = vlaneseq
    %v476 = vshrl.u32 %v475, 7
    %v477 = vsub.s32 %v474, %v476
    %v478 = vrot.slane %v462, %v477
    %v480 = vunpack.c.l.s4 1966171168
    %v481 = vunpack.c.0.s8 %v480
    %v482 = vlaneseq
    %v483 = vshrl.u32 %v482, 7
    %v484 = vsub.s32 %v481, %v483
    %v485 = vrot.slane %v463, %v484
    %v487 = vunpack.c.l.s4 1966171168
    %v488 = vunpack.c.0.s8 %v487
    %v489 = vlaneseq
    %v490 = vshrl.u32 %v489, 7
    %v491 = vsub.s32 %v488, %v490
    %v492 = vrot.slane %v464, %v491
    %v493 = vcombine.high %v471, %v471
    %v494 = vcombine.high %v478, %v478
    %v495 = vcombine.high %v485, %v485
    %v496 = vcombine.high %v492, %v492
    %v497 = vcombine.low %v329, %v330
    %v498 = vcombine.high %v329, %v330
    %v500 = vunpack.c.l.s4 1966171168
    %v501 = vunpack.c.0.s8 %v500
    %v502 = vlaneseq
    %v503 = vshrl.u32 %v502, 7
    %v504 = vsub.s32 %v501, %v503
    %v505 = vrot.slane %v497, %v504
    %v507 = vunpack.c.l.s4 1966171168
    %v508 = vunpack.c.0.s8 %v507
    %v509 = vlaneseq
    %v510 = vshrl.u32 %v509, 7
    %v511 = vsub.s32 %v508, %v510
    %v512 = vrot.slane %v498, %v511
    %v513 = vcombine.high %v505, %v505
    %v514 = vcombine.high %v512, %v512
    %v516 = vunpack.c.l.s4 1966171168
    %v517 = vunpack.c.0.s8 %v516
    %v518 = vlaneseq
    %v519 = vshrl.u32 %v518, 7
    %v520 = vsub.s32 %v517, %v519
    %v521 = vrot.slane %v505, %v520
    %v523 = vunpack.c.l.s4 1966171168
    %v524 = vunpack.c.0.s8 %v523
    %v525 = vlaneseq
    %v526 = vshrl.u32 %v525, 7
    %v527 = vsub.s32 %v524, %v526
    %v528 = vrot.slane %v512, %v527
    %v530 = vunpack.c.l.s4 1966171168
    %v531 = vunpack.c.0.s8 %v530
    %v532 = vlaneseq
    %v533 = vshrl.u32 %v532, 7
    %v534 = vsub.s32 %v531, %v533
    %v535 = vrot.slane %v513, %v534
    %v537 = vunpack.c.l.s4 1966171168
    %v538 = vunpack.c.0.s8 %v537
    %v539 = vlaneseq
    %v540 = vshrl.u32 %v539, 7
    %v541 = vsub.s32 %v538, %v540
    %v542 = vrot.slane %v514, %v541
    %v543 = vcombine.high %v521, %v521
    %v544 = vcombine.high %v528, %v528
    %v545 = vcombine.high %v535, %v535
    %v546 = vcombine.high %v542, %v542
    %v547 = vcombine.low %v331, %v332
    %v548 = vcombine.high %v331, %v332
    %v550 = vunpack.c.l.s4 1966171168
    %v551 = vunpack.c.0.s8 %v550
    %v552 = vlaneseq
    %v553 = vshrl.u32 %v552, 7
    %v554 = vsub.s32 %v551, %v553
    %v555 = vrot.slane %v547, %v554
    %v557 = vunpack.c.l.s4 1966171168
    %v558 = vunpack.c.0.s8 %v557
    %v559 = vlaneseq
    %v560 = vshrl.u32 %v559, 7
    %v561 = vsub.s32 %v558, %v560
    %v562 = vrot.slane %v548, %v561
    %v563 = vcombine.high %v555, %v555
    %v564 = vcombine.high %v562, %v562
    %v566 = vunpack.c.l.s4 1966171168
    %v567 = vunpack.c.0.s8 %v566
    %v568 = vlaneseq
    %v569 = vshrl.u32 %v568, 7
    %v570 = vsub.s32 %v567, %v569
    %v571 = vrot.slane %v555, %v570
    %v573 = vunpack.c.l.s4 1966171168
    %v574 = vunpack.c.0.s8 %v573
    %v575 = vlaneseq
    %v576 = vshrl.u32 %v575, 7
    %v577 = vsub.s32 %v574, %v576
    %v578 = vrot.slane %v562, %v577
    %v580 = vunpack.c.l.s4 1966171168
    %v581 = vunpack.c.0.s8 %v580
    %v582 = vlaneseq
    %v583 = vshrl.u32 %v582, 7
    %v584 = vsub.s32 %v581, %v583
    %v585 = vrot.slane %v563, %v584
    %v587 = vunpack.c.l.s4 1966171168
    %v588 = vunpack.c.0.s8 %v587
    %v589 = vlaneseq
    %v590 = vshrl.u32 %v589, 7
    %v591 = vsub.s32 %v588, %v590
    %v592 = vrot.slane %v564, %v591
    %v593 = vcombine.high %v571, %v571
    %v594 = vcombine.high %v578, %v578
    %v595 = vcombine.high %v585, %v585
    %v596 = vcombine.high %v592, %v592
    %v597 = vcombine.low %v333, %v334
    %v598 = vcombine.high %v333, %v334
    %v600 = vunpack.c.l.s4 1966171168
    %v601 = vunpack.c.0.s8 %v600
    %v602 = vlaneseq
    %v603 = vshrl.u32 %v602, 7
    %v604 = vsub.s32 %v601, %v603
    %v605 = vrot.slane %v597, %v604
    %v607 = vunpack.c.l.s4 1966171168
    %v608 = vunpack.c.0.s8 %v607
    %v609 = vlaneseq
    %v610 = vshrl.u32 %v609, 7
    %v611 = vsub.s32 %v608, %v610
    %v612 = vrot.slane %v598, %v611
    %v613 = vcombine.high %v605, %v605
    %v614 = vcombine.high %v612, %v612
    %v616 = vunpack.c.l.s4 1966171168
    %v617 = vunpack.c.0.s8 %v616
    %v618 = vlaneseq
    %v619 = vshrl.u32 %v618, 7
    %v620 = vsub.s32 %v617, %v619
    %v621 = vrot.slane %v605, %v620
    %v623 = vunpack.c.l.s4 1966171168
    %v624 = vunpack.c.0.s8 %v623
    %v625 = vlaneseq
    %v626 = vshrl.u32 %v625, 7
    %v627 = vsub.s32 %v624, %v626
    %v628 = vrot.slane %v612, %v627
    %v630 = vunpack.c.l.s4 1966171168
    %v631 = vunpack.c.0.s8 %v630
    %v632 = vlaneseq
    %v633 = vshrl.u32 %v632, 7
    %v634 = vsub.s32 %v631, %v633
    %v635 = vrot.slane %v613, %v634
    %v637 = vunpack.c.l.s4 1966171168
    %v638 = vunpack.c.0.s8 %v637
    %v639 = vlaneseq
    %v640 = vshrl.u32 %v639, 7
    %v641 = vsub.s32 %v638, %v640
    %v642 = vrot.slane %v614, %v641
    %v643 = vcombine.high %v621, %v621
    %v644 = vcombine.high %v628, %v628
    %v645 = vcombine.high %v635, %v635
    %v646 = vcombine.high %v642, %v642
    %v647 = vcombine.low %v335, %v336
    %v648 = vcombine.high %v335, %v336
    %v650 = vunpack.c.l.s4 1966171168
    %v651 = vunpack.c.0.s8 %v650
    %v652 = vlaneseq
    %v653 = vshrl.u32 %v652, 7
    %v654 = vsub.s32 %v651, %v653
    %v655 = vrot.slane %v647, %v654
    %v657 = vunpack.c.l.s4 1966171168
    %v658 = vunpack.c.0.s8 %v657
    %v659 = vlaneseq
    %v660 = vshrl.u32 %v659, 7
    %v661 = vsub.s32 %v658, %v660
    %v662 = vrot.slane %v648, %v661
    %v663 = vcombine.high %v655, %v655
    %v664 = vcombine.high %v662, %v662
    %v666 = vunpack.c.l.s4 1966171168
    %v667 = vunpack.c.0.s8 %v666
    %v668 = vlaneseq
    %v669 = vshrl.u32 %v668, 7
    %v670 = vsub.s32 %v667, %v669
    %v671 = vrot.slane %v655, %v670
    %v673 = vunpack.c.l.s4 1966171168
    %v674 = vunpack.c.0.s8 %v673
    %v675 = vlaneseq
    %v676 = vshrl.u32 %v675, 7
    %v677 = vsub.s32 %v674, %v676
    %v678 = vrot.slane %v662, %v677
    %v680 = vunpack.c.l.s4 1966171168
    %v681 = vunpack.c.0.s8 %v680
    %v682 = vlaneseq
    %v683 = vshrl.u32 %v682, 7
    %v684 = vsub.s32 %v681, %v683
    %v685 = vrot.slane %v663, %v684
    %v687 = vunpack.c.l.s4 1966171168
    %v688 = vunpack.c.0.s8 %v687
    %v689 = vlaneseq
    %v690 = vshrl.u32 %v689, 7
    %v691 = vsub.s32 %v688, %v690
    %v692 = vrot.slane %v664, %v691
    %v693 = vcombine.high %v671, %v671
    %v694 = vcombine.high %v678, %v678
    %v695 = vcombine.high %v685, %v685
    %v696 = vcombine.high %v692, %v692
    %v697 = vcombine.low %v337, %v338
    %v698 = vcombine.high %v337, %v338
    %v700 = vunpack.c.l.s4 1966171168
    %v701 = vunpack.c.0.s8 %v700
    %v702 = vlaneseq
    %v703 = vshrl.u32 %v702, 7
    %v704 = vsub.s32 %v701, %v703
    %v705 = vrot.slane %v697, %v704
    %v707 = vunpack.c.l.s4 1966171168
    %v708 = vunpack.c.0.s8 %v707
    %v709 = vlaneseq
    %v710 = vshrl.u32 %v709, 7
    %v711 = vsub.s32 %v708, %v710
    %v712 = vrot.slane %v698, %v711
    %v713 = vcombine.high %v705, %v705
    %v714 = vcombine.high %v712, %v712
    %v716 = vunpack.c.l.s4 1966171168
    %v717 = vunpack.c.0.s8 %v716
    %v718 = vlaneseq
    %v719 = vshrl.u32 %v718, 7
    %v720 = vsub.s32 %v717, %v719
    %v721 = vrot.slane %v705, %v720
    %v723 = vunpack.c.l.s4 1966171168
    %v724 = vunpack.c.0.s8 %v723
    %v725 = vlaneseq
    %v726 = vshrl.u32 %v725, 7
    %v727 = vsub.s32 %v724, %v726
    %v728 = vrot.slane %v712, %v727
    %v730 = vunpack.c.l.s4 1966171168
    %v731 = vunpack.c.0.s8 %v730
    %v732 = vlaneseq
    %v733 = vshrl.u32 %v732, 7
    %v734 = vsub.s32 %v731, %v733
    %v735 = vrot.slane %v713, %v734
    %v737 = vunpack.c.l.s4 1966171168
    %v738 = vunpack.c.0.s8 %v737
    %v739 = vlaneseq
    %v740 = vshrl.u32 %v739, 7
    %v741 = vsub.s32 %v738, %v740
    %v742 = vrot.slane %v714, %v741
    %v743 = vcombine.high %v721, %v721
    %v744 = vcombine.high %v728, %v728
    %v745 = vcombine.high %v735, %v735
    %v746 = vcombine.high %v742, %v742
    %v747 = vcombine.low %v339, %v340
    %v748 = vcombine.high %v339, %v340
    %v750 = vunpack.c.l.s4 1966171168
    %v751 = vunpack.c.0.s8 %v750
    %v752 = vlaneseq
    %v753 = vshrl.u32 %v752, 7
    %v754 = vsub.s32 %v751, %v753
    %v755 = vrot.slane %v747, %v754
    %v757 = vunpack.c.l.s4 1966171168
    %v758 = vunpack.c.0.s8 %v757
    %v759 = vlaneseq
    %v760 = vshrl.u32 %v759, 7
    %v761 = vsub.s32 %v758, %v760
    %v762 = vrot.slane %v748, %v761
    %v763 = vcombine.high %v755, %v755
    %v764 = vcombine.high %v762, %v762
    %v766 = vunpack.c.l.s4 1966171168
    %v767 = vunpack.c.0.s8 %v766
    %v768 = vlaneseq
    %v769 = vshrl.u32 %v768, 7
    %v770 = vsub.s32 %v767, %v769
    %v771 = vrot.slane %v755, %v770
    %v773 = vunpack.c.l.s4 1966171168
    %v774 = vunpack.c.0.s8 %v773
    %v775 = vlaneseq
    %v776 = vshrl.u32 %v775, 7
    %v777 = vsub.s32 %v774, %v776
    %v778 = vrot.slane %v762, %v777
    %v780 = vunpack.c.l.s4 1966171168
    %v781 = vunpack.c.0.s8 %v780
    %v782 = vlaneseq
    %v783 = vshrl.u32 %v782, 7
    %v784 = vsub.s32 %v781, %v783
    %v785 = vrot.slane %v763, %v784
    %v787 = vunpack.c.l.s4 1966171168
    %v788 = vunpack.c.0.s8 %v787
    %v789 = vlaneseq
    %v790 = vshrl.u32 %v789, 7
    %v791 = vsub.s32 %v788, %v790
    %v792 = vrot.slane %v764, %v791
    %v793 = vcombine.high %v771, %v771
    %v794 = vcombine.high %v778, %v778
    %v795 = vcombine.high %v785, %v785
    %v796 = vcombine.high %v792, %v792
    %v797 = vcombine.low %v341, %v342
    %v798 = vcombine.high %v341, %v342
    %v800 = vunpack.c.l.s4 1966171168
    %v801 = vunpack.c.0.s8 %v800
    %v802 = vlaneseq
    %v803 = vshrl.u32 %v802, 7
    %v804 = vsub.s32 %v801, %v803
    %v805 = vrot.slane %v797, %v804
    %v807 = vunpack.c.l.s4 1966171168
    %v808 = vunpack.c.0.s8 %v807
    %v809 = vlaneseq
    %v810 = vshrl.u32 %v809, 7
    %v811 = vsub.s32 %v808, %v810
    %v812 = vrot.slane %v798, %v811
    %v813 = vcombine.high %v805, %v805
    %v814 = vcombine.high %v812, %v812
    %v816 = vunpack.c.l.s4 1966171168
    %v817 = vunpack.c.0.s8 %v816
    %v818 = vlaneseq
    %v819 = vshrl.u32 %v818, 7
    %v820 = vsub.s32 %v817, %v819
    %v821 = vrot.slane %v805, %v820
    %v823 = vunpack.c.l.s4 1966171168
    %v824 = vunpack.c.0.s8 %v823
    %v825 = vlaneseq
    %v826 = vshrl.u32 %v825, 7
    %v827 = vsub.s32 %v824, %v826
    %v828 = vrot.slane %v812, %v827
    %v830 = vunpack.c.l.s4 1966171168
    %v831 = vunpack.c.0.s8 %v830
    %v832 = vlaneseq
    %v833 = vshrl.u32 %v832, 7
    %v834 = vsub.s32 %v831, %v833
    %v835 = vrot.slane %v813, %v834
    %v837 = vunpack.c.l.s4 1966171168
    %v838 = vunpack.c.0.s8 %v837
    %v839 = vlaneseq
    %v840 = vshrl.u32 %v839, 7
    %v841 = vsub.s32 %v838, %v840
    %v842 = vrot.slane %v814, %v841
    %v843 = vcombine.high %v821, %v821
    %v844 = vcombine.high %v828, %v828
    %v845 = vcombine.high %v835, %v835
    %v846 = vcombine.high %v842, %v842
    %v847 = vcombine.low %v343, %v344
    %v848 = vcombine.high %v343, %v344
    %v850 = vunpack.c.l.s4 1966171168
    %v851 = vunpack.c.0.s8 %v850
    %v852 = vlaneseq
    %v853 = vshrl.u32 %v852, 7
    %v854 = vsub.s32 %v851, %v853
    %v855 = vrot.slane %v847, %v854
    %v857 = vunpack.c.l.s4 1966171168
    %v858 = vunpack.c.0.s8 %v857
    %v859 = vlaneseq
    %v860 = vshrl.u32 %v859, 7
    %v861 = vsub.s32 %v858, %v860
    %v862 = vrot.slane %v848, %v861
    %v863 = vcombine.high %v855, %v855
    %v864 = vcombine.high %v862, %v862
    %v866 = vunpack.c.l.s4 1966171168
    %v867 = vunpack.c.0.s8 %v866
    %v868 = vlaneseq
    %v869 = vshrl.u32 %v868, 7
    %v870 = vsub.s32 %v867, %v869
    %v871 = vrot.slane %v855, %v870
    %v873 = vunpack.c.l.s4 1966171168
    %v874 = vunpack.c.0.s8 %v873
    %v875 = vlaneseq
    %v876 = vshrl.u32 %v875, 7
    %v877 = vsub.s32 %v874, %v876
    %v878 = vrot.slane %v862, %v877
    %v880 = vunpack.c.l.s4 1966171168
    %v881 = vunpack.c.0.s8 %v880
    %v882 = vlaneseq
    %v883 = vshrl.u32 %v882, 7
    %v884 = vsub.s32 %v881, %v883
    %v885 = vrot.slane %v863, %v884
    %v887 = vunpack.c.l.s4 1966171168
    %v888 = vunpack.c.0.s8 %v887
    %v889 = vlaneseq
    %v890 = vshrl.u32 %v889, 7
    %v891 = vsub.s32 %v888, %v890
    %v892 = vrot.slane %v864, %v891
    %v893 = vcombine.high %v871, %v871
    %v894 = vcombine.high %v878, %v878
    %v895 = vcombine.high %v885, %v885
    %v896 = vcombine.high %v892, %v892
    %v897 = vcombine.low %v345, %v346
    %v898 = vcombine.high %v345, %v346
    %v900 = vunpack.c.l.s4 1966171168
    %v901 = vunpack.c.0.s8 %v900
    %v902 = vlaneseq
    %v903 = vshrl.u32 %v902, 7
    %v904 = vsub.s32 %v901, %v903
    %v905 = vrot.slane %v897, %v904
    %v907 = vunpack.c.l.s4 1966171168
    %v908 = vunpack.c.0.s8 %v907
    %v909 = vlaneseq
    %v910 = vshrl.u32 %v909, 7
    %v911 = vsub.s32 %v908, %v910
    %v912 = vrot.slane %v898, %v911
    %v913 = vcombine.high %v905, %v905
    %v914 = vcombine.high %v912, %v912
    %v916 = vunpack.c.l.s4 1966171168
    %v917 = vunpack.c.0.s8 %v916
    %v918 = vlaneseq
    %v919 = vshrl.u32 %v918, 7
    %v920 = vsub.s32 %v917, %v919
    %v921 = vrot.slane %v905, %v920
    %v923 = vunpack.c.l.s4 1966171168
    %v924 = vunpack.c.0.s8 %v923
    %v925 = vlaneseq
    %v926 = vshrl.u32 %v925, 7
    %v927 = vsub.s32 %v924, %v926
    %v928 = vrot.slane %v912, %v927
    %v930 = vunpack.c.l.s4 1966171168
    %v931 = vunpack.c.0.s8 %v930
    %v932 = vlaneseq
    %v933 = vshrl.u32 %v932, 7
    %v934 = vsub.s32 %v931, %v933
    %v935 = vrot.slane %v913, %v934
    %v937 = vunpack.c.l.s4 1966171168
    %v938 = vunpack.c.0.s8 %v937
    %v939 = vlaneseq
    %v940 = vshrl.u32 %v939, 7
    %v941 = vsub.s32 %v938, %v940
    %v942 = vrot.slane %v914, %v941
    %v943 = vcombine.high %v921, %v921
    %v944 = vcombine.high %v928, %v928
    %v945 = vcombine.high %v935, %v935
    %v946 = vcombine.high %v942, %v942
    %v947 = vcombine.low %v347, %v348
    %v948 = vcombine.high %v347, %v348
    %v950 = vunpack.c.l.s4 1966171168
    %v951 = vunpack.c.0.s8 %v950
    %v952 = vlaneseq
    %v953 = vshrl.u32 %v952, 7
    %v954 = vsub.s32 %v951, %v953
    %v955 = vrot.slane %v947, %v954
    %v957 = vunpack.c.l.s4 1966171168
    %v958 = vunpack.c.0.s8 %v957
    %v959 = vlaneseq
    %v960 = vshrl.u32 %v959, 7
    %v961 = vsub.s32 %v958, %v960
    %v962 = vrot.slane %v948, %v961
    %v963 = vcombine.high %v955, %v955
    %v964 = vcombine.high %v962, %v962
    %v966 = vunpack.c.l.s4 1966171168
    %v967 = vunpack.c.0.s8 %v966
    %v968 = vlaneseq
    %v969 = vshrl.u32 %v968, 7
    %v970 = vsub.s32 %v967, %v969
    %v971 = vrot.slane %v955, %v970
    %v973 = vunpack.c.l.s4 1966171168
    %v974 = vunpack.c.0.s8 %v973
    %v975 = vlaneseq
    %v976 = vshrl.u32 %v975, 7
    %v977 = vsub.s32 %v974, %v976
    %v978 = vrot.slane %v962, %v977
    %v980 = vunpack.c.l.s4 1966171168
    %v981 = vunpack.c.0.s8 %v980
    %v982 = vlaneseq
    %v983 = vshrl.u32 %v982, 7
    %v984 = vsub.s32 %v981, %v983
    %v985 = vrot.slane %v963, %v984
    %v987 = vunpack.c.l.s4 1966171168
    %v988 = vunpack.c.0.s8 %v987
    %v989 = vlaneseq
    %v990 = vshrl.u32 %v989, 7
    %v991 = vsub.s32 %v988, %v990
    %v992 = vrot.slane %v964, %v991
    %v993 = vcombine.high %v971, %v971
    %v994 = vcombine.high %v978, %v978
    %v995 = vcombine.high %v985, %v985
    %v996 = vcombine.high %v992, %v992
    %v997 = vcombine.low %v349, %v350
    %v998 = vcombine.high %v349, %v350
    %v1000 = vunpack.c.l.s4 1966171168
    %v1001 = vunpack.c.0.s8 %v1000
    %v1002 = vlaneseq
    %v1003 = vshrl.u32 %v1002, 7
    %v1004 = vsub.s32 %v1001, %v1003
    %v1005 = vrot.slane %v997, %v1004
    %v1007 = vunpack.c.l.s4 1966171168
    %v1008 = vunpack.c.0.s8 %v1007
    %v1009 = vlaneseq
    %v1010 = vshrl.u32 %v1009, 7
    %v1011 = vsub.s32 %v1008, %v1010
    %v1012 = vrot.slane %v998, %v1011
    %v1013 = vcombine.high %v1005, %v1005
    %v1014 = vcombine.high %v1012, %v1012
    %v1016 = vunpack.c.l.s4 1966171168
    %v1017 = vunpack.c.0.s8 %v1016
    %v1018 = vlaneseq
    %v1019 = vshrl.u32 %v1018, 7
    %v1020 = vsub.s32 %v1017, %v1019
    %v1021 = vrot.slane %v1005, %v1020
    %v1023 = vunpack.c.l.s4 1966171168
    %v1024 = vunpack.c.0.s8 %v1023
    %v1025 = vlaneseq
    %v1026 = vshrl.u32 %v1025, 7
    %v1027 = vsub.s32 %v1024, %v1026
    %v1028 = vrot.slane %v1012, %v1027
    %v1030 = vunpack.c.l.s4 1966171168
    %v1031 = vunpack.c.0.s8 %v1030
    %v1032 = vlaneseq
    %v1033 = vshrl.u32 %v1032, 7
    %v1034 = vsub.s32 %v1031, %v1033
    %v1035 = vrot.slane %v1013, %v1034
    %v1037 = vunpack.c.l.s4 1966171168
    %v1038 = vunpack.c.0.s8 %v1037
    %v1039 = vlaneseq
    %v1040 = vshrl.u32 %v1039, 7
    %v1041 = vsub.s32 %v1038, %v1040
    %v1042 = vrot.slane %v1014, %v1041
    %v1043 = vcombine.high %v1021, %v1021
    %v1044 = vcombine.high %v1028, %v1028
    %v1045 = vcombine.high %v1035, %v1035
    %v1046 = vcombine.high %v1042, %v1042
    %v1047 = vcombine.low %v351, %v352
    %v1048 = vcombine.high %v351, %v352
    %v1050 = vunpack.c.l.s4 1966171168
    %v1051 = vunpack.c.0.s8 %v1050
    %v1052 = vlaneseq
    %v1053 = vshrl.u32 %v1052, 7
    %v1054 = vsub.s32 %v1051, %v1053
    %v1055 = vrot.slane %v1047, %v1054
    %v1057 = vunpack.c.l.s4 1966171168
    %v1058 = vunpack.c.0.s8 %v1057
    %v1059 = vlaneseq
    %v1060 = vshrl.u32 %v1059, 7
    %v1061 = vsub.s32 %v1058, %v1060
    %v1062 = vrot.slane %v1048, %v1061
    %v1063 = vcombine.high %v1055, %v1055
    %v1064 = vcombine.high %v1062, %v1062
    %v1066 = vunpack.c.l.s4 1966171168
    %v1067 = vunpack.c.0.s8 %v1066
    %v1068 = vlaneseq
    %v1069 = vshrl.u32 %v1068, 7
    %v1070 = vsub.s32 %v1067, %v1069
    %v1071 = vrot.slane %v1055, %v1070
    %v1073 = vunpack.c.l.s4 1966171168
    %v1074 = vunpack.c.0.s8 %v1073
    %v1075 = vlaneseq
    %v1076 = vshrl.u32 %v1075, 7
    %v1077 = vsub.s32 %v1074, %v1076
    %v1078 = vrot.slane %v1062, %v1077
    %v1080 = vunpack.c.l.s4 1966171168
    %v1081 = vunpack.c.0.s8 %v1080
    %v1082 = vlaneseq
    %v1083 = vshrl.u32 %v1082, 7
    %v1084 = vsub.s32 %v1081, %v1083
    %v1085 = vrot.slane %v1063, %v1084
    %v1087 = vunpack.c.l.s4 1966171168
    %v1088 = vunpack.c.0.s8 %v1087
    %v1089 = vlaneseq
    %v1090 = vshrl.u32 %v1089, 7
    %v1091 = vsub.s32 %v1088, %v1090
    %v1092 = vrot.slane %v1064, %v1091
    %v1093 = vcombine.high %v1071, %v1071
    %v1094 = vcombine.high %v1078, %v1078
    %v1095 = vcombine.high %v1085, %v1085
    %v1096 = vcombine.high %v1092, %v1092
    %v1097 = vcombine.low %v353, %v354
    %v1098 = vcombine.high %v353, %v354
    %v1100 = vunpack.c.l.s4 1966171168
    %v1101 = vunpack.c.0.s8 %v1100
    %v1102 = vlaneseq
    %v1103 = vshrl.u32 %v1102, 7
    %v1104 = vsub.s32 %v1101, %v1103
    %v1105 = vrot.slane %v1097, %v1104
    %v1107 = vunpack.c.l.s4 1966171168
    %v1108 = vunpack.c.0.s8 %v1107
    %v1109 = vlaneseq
    %v1110 = vshrl.u32 %v1109, 7
    %v1111 = vsub.s32 %v1108, %v1110
    %v1112 = vrot.slane %v1098, %v1111
    %v1113 = vcombine.high %v1105, %v1105
    %v1114 = vcombine.high %v1112, %v1112
    %v1116 = vunpack.c.l.s4 1966171168
    %v1117 = vunpack.c.0.s8 %v1116
    %v1118 = vlaneseq
    %v1119 = vshrl.u32 %v1118, 7
    %v1120 = vsub.s32 %v1117, %v1119
    %v1121 = vrot.slane %v1105, %v1120
    %v1123 = vunpack.c.l.s4 1966171168
    %v1124 = vunpack.c.0.s8 %v1123
    %v1125 = vlaneseq
    %v1126 = vshrl.u32 %v1125, 7
    %v1127 = vsub.s32 %v1124, %v1126
    %v1128 = vrot.slane %v1112, %v1127
    %v1130 = vunpack.c.l.s4 1966171168
    %v1131 = vunpack.c.0.s8 %v1130
    %v1132 = vlaneseq
    %v1133 = vshrl.u32 %v1132, 7
    %v1134 = vsub.s32 %v1131, %v1133
    %v1135 = vrot.slane %v1113, %v1134
    %v1137 = vunpack.c.l.s4 1966171168
    %v1138 = vunpack.c.0.s8 %v1137
    %v1139 = vlaneseq
    %v1140 = vshrl.u32 %v1139, 7
    %v1141 = vsub.s32 %v1138, %v1140
    %v1142 = vrot.slane %v1114, %v1141
    %v1143 = vcombine.high %v1121, %v1121
    %v1144 = vcombine.high %v1128, %v1128
    %v1145 = vcombine.high %v1135, %v1135
    %v1146 = vcombine.high %v1142, %v1142
    %v1147 = vcombine.low %v355, %v356
    %v1148 = vcombine.high %v355, %v356
    %v1150 = vunpack.c.l.s4 1966171168
    %v1151 = vunpack.c.0.s8 %v1150
    %v1152 = vlaneseq
    %v1153 = vshrl.u32 %v1152, 7
    %v1154 = vsub.s32 %v1151, %v1153
    %v1155 = vrot.slane %v1147, %v1154
    %v1157 = vunpack.c.l.s4 1966171168
    %v1158 = vunpack.c.0.s8 %v1157
    %v1159 = vlaneseq
    %v1160 = vshrl.u32 %v1159, 7
    %v1161 = vsub.s32 %v1158, %v1160
    %v1162 = vrot.slane %v1148, %v1161
    %v1163 = vcombine.high %v1155, %v1155
    %v1164 = vcombine.high %v1162, %v1162
    %v1166 = vunpack.c.l.s4 1966171168
    %v1167 = vunpack.c.0.s8 %v1166
    %v1168 = vlaneseq
    %v1169 = vshrl.u32 %v1168, 7
    %v1170 = vsub.s32 %v1167, %v1169
    %v1171 = vrot.slane %v1155, %v1170
    %v1173 = vunpack.c.l.s4 1966171168
    %v1174 = vunpack.c.0.s8 %v1173
    %v1175 = vlaneseq
    %v1176 = vshrl.u32 %v1175, 7
    %v1177 = vsub.s32 %v1174, %v1176
    %v1178 = vrot.slane %v1162, %v1177
    %v1180 = vunpack.c.l.s4 1966171168
    %v1181 = vunpack.c.0.s8 %v1180
    %v1182 = vlaneseq
    %v1183 = vshrl.u32 %v1182, 7
    %v1184 = vsub.s32 %v1181, %v1183
    %v1185 = vrot.slane %v1163, %v1184
    %v1187 = vunpack.c.l.s4 1966171168
    %v1188 = vunpack.c.0.s8 %v1187
    %v1189 = vlaneseq
    %v1190 = vshrl.u32 %v1189, 7
    %v1191 = vsub.s32 %v1188, %v1190
    %v1192 = vrot.slane %v1164, %v1191
    %v1193 = vcombine.high %v1171, %v1171
    %v1194 = vcombine.high %v1178, %v1178
    %v1195 = vcombine.high %v1185, %v1185
    %v1196 = vcombine.high %v1192, %v1192
    %v1197 = vcombine.low %v357, %v358
    %v1198 = vcombine.high %v357, %v358
    %v1200 = vunpack.c.l.s4 1966171168
    %v1201 = vunpack.c.0.s8 %v1200
    %v1202 = vlaneseq
    %v1203 = vshrl.u32 %v1202, 7
    %v1204 = vsub.s32 %v1201, %v1203
    %v1205 = vrot.slane %v1197, %v1204
    %v1207 = vunpack.c.l.s4 1966171168
    %v1208 = vunpack.c.0.s8 %v1207
    %v1209 = vlaneseq
    %v1210 = vshrl.u32 %v1209, 7
    %v1211 = vsub.s32 %v1208, %v1210
    %v1212 = vrot.slane %v1198, %v1211
    %v1213 = vcombine.high %v1205, %v1205
    %v1214 = vcombine.high %v1212, %v1212
    %v1216 = vunpack.c.l.s4 1966171168
    %v1217 = vunpack.c.0.s8 %v1216
    %v1218 = vlaneseq
    %v1219 = vshrl.u32 %v1218, 7
    %v1220 = vsub.s32 %v1217, %v1219
    %v1221 = vrot.slane %v1205, %v1220
    %v1223 = vunpack.c.l.s4 1966171168
    %v1224 = vunpack.c.0.s8 %v1223
    %v1225 = vlaneseq
    %v1226 = vshrl.u32 %v1225, 7
    %v1227 = vsub.s32 %v1224, %v1226
    %v1228 = vrot.slane %v1212, %v1227
    %v1230 = vunpack.c.l.s4 1966171168
    %v1231 = vunpack.c.0.s8 %v1230
    %v1232 = vlaneseq
    %v1233 = vshrl.u32 %v1232, 7
    %v1234 = vsub.s32 %v1231, %v1233
    %v1235 = vrot.slane %v1213, %v1234
    %v1237 = vunpack.c.l.s4 1966171168
    %v1238 = vunpack.c.0.s8 %v1237
    %v1239 = vlaneseq
    %v1240 = vshrl.u32 %v1239, 7
    %v1241 = vsub.s32 %v1238, %v1240
    %v1242 = vrot.slane %v1214, %v1241
    %v1243 = vcombine.high %v1221, %v1221
    %v1244 = vcombine.high %v1228, %v1228
    %v1245 = vcombine.high %v1235, %v1235
    %v1246 = vcombine.high %v1242, %v1242
    %v1247 = vcombine.low %v359, %v360
    %v1248 = vcombine.high %v359, %v360
    %v1250 = vunpack.c.l.s4 1966171168
    %v1251 = vunpack.c.0.s8 %v1250
    %v1252 = vlaneseq
    %v1253 = vshrl.u32 %v1252, 7
    %v1254 = vsub.s32 %v1251, %v1253
    %v1255 = vrot.slane %v1247, %v1254
    %v1257 = vunpack.c.l.s4 1966171168
    %v1258 = vunpack.c.0.s8 %v1257
    %v1259 = vlaneseq
    %v1260 = vshrl.u32 %v1259, 7
    %v1261 = vsub.s32 %v1258, %v1260
    %v1262 = vrot.slane %v1248, %v1261
    %v1263 = vcombine.high %v1255, %v1255
    %v1264 = vcombine.high %v1262, %v1262
    %v1266 = vunpack.c.l.s4 1966171168
    %v1267 = vunpack.c.0.s8 %v1266
    %v1268 = vlaneseq
    %v1269 = vshrl.u32 %v1268, 7
    %v1270 = vsub.s32 %v1267, %v1269
    %v1271 = vrot.slane %v1255, %v1270
    %v1273 = vunpack.c.l.s4 1966171168
    %v1274 = vunpack.c.0.s8 %v1273
    %v1275 = vlaneseq
    %v1276 = vshrl.u32 %v1275, 7
    %v1277 = vsub.s32 %v1274, %v1276
    %v1278 = vrot.slane %v1262, %v1277
    %v1280 = vunpack.c.l.s4 1966171168
    %v1281 = vunpack.c.0.s8 %v1280
    %v1282 = vlaneseq
    %v1283 = vshrl.u32 %v1282, 7
    %v1284 = vsub.s32 %v1281, %v1283
    %v1285 = vrot.slane %v1263, %v1284
    %v1287 = vunpack.c.l.s4 1966171168
    %v1288 = vunpack.c.0.s8 %v1287
    %v1289 = vlaneseq
    %v1290 = vshrl.u32 %v1289, 7
    %v1291 = vsub.s32 %v1288, %v1290
    %v1292 = vrot.slane %v1264, %v1291
    %v1293 = vcombine.high %v1271, %v1271
    %v1294 = vcombine.high %v1278, %v1278
    %v1295 = vcombine.high %v1285, %v1285
    %v1296 = vcombine.high %v1292, %v1292
    %v1297 = vld [vmem:[%s3] sm:$0xff]
    %v1298 = vld [vmem:[%s3 + $0x8] sm:$0xff]
    %v1299 = vld [vmem:[%s3 + $0x10] sm:$0xff]
    %v1300 = vld [vmem:[%s3 + $0x18] sm:$0xff]
    %v1301 = vld [vmem:[%s3 + $0x20] sm:$0xff]
    %v1302 = vld [vmem:[%s3 + $0x28] sm:$0xff]
    %v1303 = vld [vmem:[%s3 + $0x30] sm:$0xff]
    %v1304 = vld [vmem:[%s3 + $0x38] sm:$0xff]
    %v1305 = vld [vmem:[%s3 + $0x40] sm:$0xff]
    %v1306 = vld [vmem:[%s3 + $0x48] sm:$0xff]
    %v1307 = vld [vmem:[%s3 + $0x50] sm:$0xff]
    %v1308 = vld [vmem:[%s3 + $0x58] sm:$0xff]
    %v1309 = vld [vmem:[%s3 + $0x60] sm:$0xff]
    %v1310 = vld [vmem:[%s3 + $0x68] sm:$0xff]
    %v1311 = vld [vmem:[%s3 + $0x70] sm:$0xff]
    %v1312 = vld [vmem:[%s3 + $0x78] sm:$0xff]
    %v1313 = vld [vmem:[%s3 + $0x80] sm:$0xff]
    %v1314 = vld [vmem:[%s3 + $0x88] sm:$0xff]
    %v1315 = vld [vmem:[%s3 + $0x90] sm:$0xff]
    %v1316 = vld [vmem:[%s3 + $0x98] sm:$0xff]
    %v1317 = vld [vmem:[%s3 + $0xa0] sm:$0xff]
    %v1318 = vld [vmem:[%s3 + $0xa8] sm:$0xff]
    %v1319 = vld [vmem:[%s3 + $0xb0] sm:$0xff]
    %v1320 = vld [vmem:[%s3 + $0xb8] sm:$0xff]
    %v1321 = vld [vmem:[%s3 + $0xc0] sm:$0xff]
    %v1322 = vld [vmem:[%s3 + $0xc8] sm:$0xff]
    %v1323 = vld [vmem:[%s3 + $0xd0] sm:$0xff]
    %v1324 = vld [vmem:[%s3 + $0xd8] sm:$0xff]
    %v1325 = vld [vmem:[%s3 + $0xe0] sm:$0xff]
    %v1326 = vld [vmem:[%s3 + $0xe8] sm:$0xff]
    %v1327 = vld [vmem:[%s3 + $0xf0] sm:$0xff]
    %v1328 = vld [vmem:[%s3 + $0xf8] sm:$0xff]
    %v1329 = vld [vmem:[%s3 + $0x100] sm:$0xff]
    %v1330 = vld [vmem:[%s3 + $0x108] sm:$0xff]
    %v1331 = vld [vmem:[%s3 + $0x110] sm:$0xff]
    %v1332 = vld [vmem:[%s3 + $0x118] sm:$0xff]
    %v1333 = vld [vmem:[%s3 + $0x120] sm:$0xff]
    %v1334 = vld [vmem:[%s3 + $0x128] sm:$0xff]
    %v1335 = vld [vmem:[%s3 + $0x130] sm:$0xff]
    %v1336 = vld [vmem:[%s3 + $0x138] sm:$0xff]
    %v1337 = vld [vmem:[%s3 + $0x140] sm:$0xff]
    %v1338 = vld [vmem:[%s3 + $0x148] sm:$0xff]
    %v1339 = vld [vmem:[%s3 + $0x150] sm:$0xff]
    %v1340 = vld [vmem:[%s3 + $0x158] sm:$0xff]
    %v1341 = vld [vmem:[%s3 + $0x160] sm:$0xff]
    %v1342 = vld [vmem:[%s3 + $0x168] sm:$0xff]
    %v1343 = vld [vmem:[%s3 + $0x170] sm:$0xff]
    %v1344 = vld [vmem:[%s3 + $0x178] sm:$0xff]
    %v1345 = vld [vmem:[%s3 + $0x180] sm:$0xff]
    %v1346 = vld [vmem:[%s3 + $0x188] sm:$0xff]
    %v1347 = vld [vmem:[%s3 + $0x190] sm:$0xff]
    %v1348 = vld [vmem:[%s3 + $0x198] sm:$0xff]
    %v1349 = vld [vmem:[%s3 + $0x1a0] sm:$0xff]
    %v1350 = vld [vmem:[%s3 + $0x1a8] sm:$0xff]
    %v1351 = vld [vmem:[%s3 + $0x1b0] sm:$0xff]
    %v1352 = vld [vmem:[%s3 + $0x1b8] sm:$0xff]
    %v1353 = vld [vmem:[%s3 + $0x1c0] sm:$0xff]
    %v1354 = vld [vmem:[%s3 + $0x1c8] sm:$0xff]
    %v1355 = vld [vmem:[%s3 + $0x1d0] sm:$0xff]
    %v1356 = vld [vmem:[%s3 + $0x1d8] sm:$0xff]
    %v1357 = vld [vmem:[%s3 + $0x1e0] sm:$0xff]
    %v1358 = vld [vmem:[%s3 + $0x1e8] sm:$0xff]
    %v1359 = vld [vmem:[%s3 + $0x1f0] sm:$0xff]
    %v1360 = vld [vmem:[%s3 + $0x1f8] sm:$0xff]
    %v1361 = vld [vmem:[%s3 + $0x200] sm:$0xff]
    %v1362 = vld [vmem:[%s3 + $0x208] sm:$0xff]
    %v1363 = vld [vmem:[%s3 + $0x210] sm:$0xff]
    %v1364 = vld [vmem:[%s3 + $0x218] sm:$0xff]
    %v1365 = vld [vmem:[%s3 + $0x220] sm:$0xff]
    %v1366 = vld [vmem:[%s3 + $0x228] sm:$0xff]
    %v1367 = vld [vmem:[%s3 + $0x230] sm:$0xff]
    %v1368 = vld [vmem:[%s3 + $0x238] sm:$0xff]
    %v1369 = vld [vmem:[%s3 + $0x240] sm:$0xff]
    %v1370 = vld [vmem:[%s3 + $0x248] sm:$0xff]
    %v1371 = vld [vmem:[%s3 + $0x250] sm:$0xff]
    %v1372 = vld [vmem:[%s3 + $0x258] sm:$0xff]
    %v1373 = vld [vmem:[%s3 + $0x260] sm:$0xff]
    %v1374 = vld [vmem:[%s3 + $0x268] sm:$0xff]
    %v1375 = vld [vmem:[%s3 + $0x270] sm:$0xff]
    %v1376 = vld [vmem:[%s3 + $0x278] sm:$0xff]
    %v1377 = vld [vmem:[%s3 + $0x280] sm:$0xff]
    %v1378 = vld [vmem:[%s3 + $0x288] sm:$0xff]
    %v1379 = vld [vmem:[%s3 + $0x290] sm:$0xff]
    %v1380 = vld [vmem:[%s3 + $0x298] sm:$0xff]
    %v1381 = vld [vmem:[%s3 + $0x2a0] sm:$0xff]
    %v1382 = vld [vmem:[%s3 + $0x2a8] sm:$0xff]
    %v1383 = vld [vmem:[%s3 + $0x2b0] sm:$0xff]
    %v1384 = vld [vmem:[%s3 + $0x2b8] sm:$0xff]
    %v1385 = vld [vmem:[%s3 + $0x2c0] sm:$0xff]
    %v1386 = vld [vmem:[%s3 + $0x2c8] sm:$0xff]
    %v1387 = vld [vmem:[%s3 + $0x2d0] sm:$0xff]
    %v1388 = vld [vmem:[%s3 + $0x2d8] sm:$0xff]
    %v1389 = vld [vmem:[%s3 + $0x2e0] sm:$0xff]
    %v1390 = vld [vmem:[%s3 + $0x2e8] sm:$0xff]
    %v1391 = vld [vmem:[%s3 + $0x2f0] sm:$0xff]
    %v1392 = vld [vmem:[%s3 + $0x2f8] sm:$0xff]
    %v1393 = vcombine.low %v421, %v435
    %v1395 = vunpack.c.l.s4 1966171168
    %v1396 = vunpack.c.0.s8 %v1395
    %v1397 = vlaneseq
    %v1398 = vshrl.u32 %v1397, 7
    %v1399 = vsub.s32 %v1396, %v1398
    %v1400 = vrot.slane %v1393, %v1399
    %v1402 = vunpack.c.l.s4 1966171168
    %v1403 = vunpack.c.0.s8 %v1402
    %v1404 = vlaneseq
    %v1405 = vshrl.u32 %v1404, 7
    %v1406 = vsub.s32 %v1403, %v1405
    %v1407 = vrot.slane %v443, %v1406
    %v1408 = vcombine.low %v1400, %v1407
    %v1409 = vcombine.high %v1400, %v1407
    %v1411 = vunpack.c.l.s4 1966171168
    %v1412 = vunpack.c.0.s8 %v1411
    %v1413 = vlaneseq
    %v1414 = vshrl.u32 %v1413, 7
    %v1415 = vsub.s32 %v1412, %v1414
    %v1416 = vrot.slane %v1408, %v1415
    %v1418 = vunpack.c.l.s4 1966171168
    %v1419 = vunpack.c.0.s8 %v1418
    %v1420 = vlaneseq
    %v1421 = vshrl.u32 %v1420, 7
    %v1422 = vsub.s32 %v1419, %v1421
    %v1423 = vrot.slane %v1409, %v1422
    %v1424 = vcombine.low %v485, %v493
    %v1426 = vunpack.c.l.s4 1966171168
    %v1427 = vunpack.c.0.s8 %v1426
    %v1428 = vlaneseq
    %v1429 = vshrl.u32 %v1428, 7
    %v1430 = vsub.s32 %v1427, %v1429
    %v1431 = vrot.slane %v1424, %v1430
    %v1433 = vunpack.c.l.s4 1966171168
    %v1434 = vunpack.c.0.s8 %v1433
    %v1435 = vlaneseq
    %v1436 = vshrl.u32 %v1435, 7
    %v1437 = vsub.s32 %v1434, %v1436
    %v1438 = vrot.slane %v495, %v1437
    %v1439 = vcombine.low %v1431, %v1438
    %v1440 = vcombine.high %v1431, %v1438
    %v1442 = vunpack.c.l.s4 1966171168
    %v1443 = vunpack.c.0.s8 %v1442
    %v1444 = vlaneseq
    %v1445 = vshrl.u32 %v1444, 7
    %v1446 = vsub.s32 %v1443, %v1445
    %v1447 = vrot.slane %v1439, %v1446
    %v1449 = vunpack.c.l.s4 1966171168
    %v1450 = vunpack.c.0.s8 %v1449
    %v1451 = vlaneseq
    %v1452 = vshrl.u32 %v1451, 7
    %v1453 = vsub.s32 %v1450, %v1452
    %v1454 = vrot.slane %v1440, %v1453
    %v1455 = vcombine.low %v543, %v545
    %v1457 = vunpack.c.l.s4 1966171168
    %v1458 = vunpack.c.0.s8 %v1457
    %v1459 = vlaneseq
    %v1460 = vshrl.u32 %v1459, 7
    %v1461 = vsub.s32 %v1458, %v1460
    %v1462 = vrot.slane %v1455, %v1461
    %v1464 = vunpack.c.l.s4 1966171168
    %v1465 = vunpack.c.0.s8 %v1464
    %v1466 = vlaneseq
    %v1467 = vshrl.u32 %v1466, 7
    %v1468 = vsub.s32 %v1465, %v1467
    %v1469 = vrot.slane %v528, %v1468
    %v1470 = vcombine.low %v1462, %v1469
    %v1471 = vcombine.high %v1462, %v1469
    %v1473 = vunpack.c.l.s4 1966171168
    %v1474 = vunpack.c.0.s8 %v1473
    %v1475 = vlaneseq
    %v1476 = vshrl.u32 %v1475, 7
    %v1477 = vsub.s32 %v1474, %v1476
    %v1478 = vrot.slane %v1470, %v1477
    %v1480 = vunpack.c.l.s4 1966171168
    %v1481 = vunpack.c.0.s8 %v1480
    %v1482 = vlaneseq
    %v1483 = vshrl.u32 %v1482, 7
    %v1484 = vsub.s32 %v1481, %v1483
    %v1485 = vrot.slane %v1471, %v1484
    %v1486 = vcombine.low %v595, %v578
    %v1488 = vunpack.c.l.s4 1966171168
    %v1489 = vunpack.c.0.s8 %v1488
    %v1490 = vlaneseq
    %v1491 = vshrl.u32 %v1490, 7
    %v1492 = vsub.s32 %v1489, %v1491
    %v1493 = vrot.slane %v1486, %v1492
    %v1495 = vunpack.c.l.s4 1966171168
    %v1496 = vunpack.c.0.s8 %v1495
    %v1497 = vlaneseq
    %v1498 = vshrl.u32 %v1497, 7
    %v1499 = vsub.s32 %v1496, %v1498
    %v1500 = vrot.slane %v592, %v1499
    %v1501 = vcombine.low %v1493, %v1500
    %v1502 = vcombine.high %v1493, %v1500
    %v1504 = vunpack.c.l.s4 1966171168
    %v1505 = vunpack.c.0.s8 %v1504
    %v1506 = vlaneseq
    %v1507 = vshrl.u32 %v1506, 7
    %v1508 = vsub.s32 %v1505, %v1507
    %v1509 = vrot.slane %v1501, %v1508
    %v1511 = vunpack.c.l.s4 1966171168
    %v1512 = vunpack.c.0.s8 %v1511
    %v1513 = vlaneseq
    %v1514 = vshrl.u32 %v1513, 7
    %v1515 = vsub.s32 %v1512, %v1514
    %v1516 = vrot.slane %v1502, %v1515
    %v1517 = vcombine.low %v628, %v642
    %v1519 = vunpack.c.l.s4 1966171168
    %v1520 = vunpack.c.0.s8 %v1519
    %v1521 = vlaneseq
    %v1522 = vshrl.u32 %v1521, 7
    %v1523 = vsub.s32 %v1520, %v1522
    %v1524 = vrot.slane %v1517, %v1523
    %v1526 = vunpack.c.l.s4 1966171168
    %v1527 = vunpack.c.0.s8 %v1526
    %v1528 = vlaneseq
    %v1529 = vshrl.u32 %v1528, 7
    %v1530 = vsub.s32 %v1527, %v1529
    %v1531 = vrot.slane %v644, %v1530
    %v1532 = vcombine.low %v1524, %v1531
    %v1533 = vcombine.high %v1524, %v1531
    %v1535 = vunpack.c.l.s4 1966171168
    %v1536 = vunpack.c.0.s8 %v1535
    %v1537 = vlaneseq
    %v1538 = vshrl.u32 %v1537, 7
    %v1539 = vsub.s32 %v1536, %v1538
    %v1540 = vrot.slane %v1532, %v1539
    %v1542 = vunpack.c.l.s4 1966171168
    %v1543 = vunpack.c.0.s8 %v1542
    %v1544 = vlaneseq
    %v1545 = vshrl.u32 %v1544, 7
    %v1546 = vsub.s32 %v1543, %v1545
    %v1547 = vrot.slane %v1533, %v1546
    %v1548 = vcombine.low %v692, %v694
    %v1550 = vunpack.c.l.s4 1966171168
    %v1551 = vunpack.c.0.s8 %v1550
    %v1552 = vlaneseq
    %v1553 = vshrl.u32 %v1552, 7
    %v1554 = vsub.s32 %v1551, %v1553
    %v1555 = vrot.slane %v1548, %v1554
    %v1557 = vunpack.c.l.s4 1966171168
    %v1558 = vunpack.c.0.s8 %v1557
    %v1559 = vlaneseq
    %v1560 = vshrl.u32 %v1559, 7
    %v1561 = vsub.s32 %v1558, %v1560
    %v1562 = vrot.slane %v696, %v1561
    %v1563 = vcombine.low %v1555, %v1562
    %v1564 = vcombine.high %v1555, %v1562
    %v1566 = vunpack.c.l.s4 1966171168
    %v1567 = vunpack.c.0.s8 %v1566
    %v1568 = vlaneseq
    %v1569 = vshrl.u32 %v1568, 7
    %v1570 = vsub.s32 %v1567, %v1569
    %v1571 = vrot.slane %v1563, %v1570
    %v1573 = vunpack.c.l.s4 1966171168
    %v1574 = vunpack.c.0.s8 %v1573
    %v1575 = vlaneseq
    %v1576 = vshrl.u32 %v1575, 7
    %v1577 = vsub.s32 %v1574, %v1576
    %v1578 = vrot.slane %v1564, %v1577
    %v1579 = vcombine.low %v744, %v746
    %v1581 = vunpack.c.l.s4 1966171168
    %v1582 = vunpack.c.0.s8 %v1581
    %v1583 = vlaneseq
    %v1584 = vshrl.u32 %v1583, 7
    %v1585 = vsub.s32 %v1582, %v1584
    %v1586 = vrot.slane %v1579, %v1585
    %v1588 = vunpack.c.l.s4 1966171168
    %v1589 = vunpack.c.0.s8 %v1588
    %v1590 = vlaneseq
    %v1591 = vshrl.u32 %v1590, 7
    %v1592 = vsub.s32 %v1589, %v1591
    %v1593 = vrot.slane %v771, %v1592
    %v1594 = vcombine.low %v1586, %v1593
    %v1595 = vcombine.high %v1586, %v1593
    %v1597 = vunpack.c.l.s4 1966171168
    %v1598 = vunpack.c.0.s8 %v1597
    %v1599 = vlaneseq
    %v1600 = vshrl.u32 %v1599, 7
    %v1601 = vsub.s32 %v1598, %v1600
    %v1602 = vrot.slane %v1594, %v1601
    %v1604 = vunpack.c.l.s4 1966171168
    %v1605 = vunpack.c.0.s8 %v1604
    %v1606 = vlaneseq
    %v1607 = vshrl.u32 %v1606, 7
    %v1608 = vsub.s32 %v1605, %v1607
    %v1609 = vrot.slane %v1595, %v1608
    %v1610 = vcombine.low %v796, %v821
    %v1612 = vunpack.c.l.s4 1966171168
    %v1613 = vunpack.c.0.s8 %v1612
    %v1614 = vlaneseq
    %v1615 = vshrl.u32 %v1614, 7
    %v1616 = vsub.s32 %v1613, %v1615
    %v1617 = vrot.slane %v1610, %v1616
    %v1619 = vunpack.c.l.s4 1966171168
    %v1620 = vunpack.c.0.s8 %v1619
    %v1621 = vlaneseq
    %v1622 = vshrl.u32 %v1621, 7
    %v1623 = vsub.s32 %v1620, %v1622
    %v1624 = vrot.slane %v835, %v1623
    %v1625 = vcombine.low %v1617, %v1624
    %v1626 = vcombine.high %v1617, %v1624
    %v1628 = vunpack.c.l.s4 1966171168
    %v1629 = vunpack.c.0.s8 %v1628
    %v1630 = vlaneseq
    %v1631 = vshrl.u32 %v1630, 7
    %v1632 = vsub.s32 %v1629, %v1631
    %v1633 = vrot.slane %v1625, %v1632
    %v1635 = vunpack.c.l.s4 1966171168
    %v1636 = vunpack.c.0.s8 %v1635
    %v1637 = vlaneseq
    %v1638 = vshrl.u32 %v1637, 7
    %v1639 = vsub.s32 %v1636, %v1638
    %v1640 = vrot.slane %v1626, %v1639
    %v1641 = vcombine.low %v871, %v885
    %v1643 = vunpack.c.l.s4 1966171168
    %v1644 = vunpack.c.0.s8 %v1643
    %v1645 = vlaneseq
    %v1646 = vshrl.u32 %v1645, 7
    %v1647 = vsub.s32 %v1644, %v1646
    %v1648 = vrot.slane %v1641, %v1647
    %v1650 = vunpack.c.l.s4 1966171168
    %v1651 = vunpack.c.0.s8 %v1650
    %v1652 = vlaneseq
    %v1653 = vshrl.u32 %v1652, 7
    %v1654 = vsub.s32 %v1651, %v1653
    %v1655 = vrot.slane %v893, %v1654
    %v1656 = vcombine.low %v1648, %v1655
    %v1657 = vcombine.high %v1648, %v1655
    %v1659 = vunpack.c.l.s4 1966171168
    %v1660 = vunpack.c.0.s8 %v1659
    %v1661 = vlaneseq
    %v1662 = vshrl.u32 %v1661, 7
    %v1663 = vsub.s32 %v1660, %v1662
    %v1664 = vrot.slane %v1656, %v1663
    %v1666 = vunpack.c.l.s4 1966171168
    %v1667 = vunpack.c.0.s8 %v1666
    %v1668 = vlaneseq
    %v1669 = vshrl.u32 %v1668, 7
    %v1670 = vsub.s32 %v1667, %v1669
    %v1671 = vrot.slane %v1657, %v1670
    %v1672 = vcombine.low %v935, %v943
    %v1674 = vunpack.c.l.s4 1966171168
    %v1675 = vunpack.c.0.s8 %v1674
    %v1676 = vlaneseq
    %v1677 = vshrl.u32 %v1676, 7
    %v1678 = vsub.s32 %v1675, %v1677
    %v1679 = vrot.slane %v1672, %v1678
    %v1681 = vunpack.c.l.s4 1966171168
    %v1682 = vunpack.c.0.s8 %v1681
    %v1683 = vlaneseq
    %v1684 = vshrl.u32 %v1683, 7
    %v1685 = vsub.s32 %v1682, %v1684
    %v1686 = vrot.slane %v945, %v1685
    %v1687 = vcombine.low %v1679, %v1686
    %v1688 = vcombine.high %v1679, %v1686
    %v1690 = vunpack.c.l.s4 1966171168
    %v1691 = vunpack.c.0.s8 %v1690
    %v1692 = vlaneseq
    %v1693 = vshrl.u32 %v1692, 7
    %v1694 = vsub.s32 %v1691, %v1693
    %v1695 = vrot.slane %v1687, %v1694
    %v1697 = vunpack.c.l.s4 1966171168
    %v1698 = vunpack.c.0.s8 %v1697
    %v1699 = vlaneseq
    %v1700 = vshrl.u32 %v1699, 7
    %v1701 = vsub.s32 %v1698, %v1700
    %v1702 = vrot.slane %v1688, %v1701
    %v1703 = vcombine.low %v993, %v995
    %v1705 = vunpack.c.l.s4 1966171168
    %v1706 = vunpack.c.0.s8 %v1705
    %v1707 = vlaneseq
    %v1708 = vshrl.u32 %v1707, 7
    %v1709 = vsub.s32 %v1706, %v1708
    %v1710 = vrot.slane %v1703, %v1709
    %v1712 = vunpack.c.l.s4 1966171168
    %v1713 = vunpack.c.0.s8 %v1712
    %v1714 = vlaneseq
    %v1715 = vshrl.u32 %v1714, 7
    %v1716 = vsub.s32 %v1713, %v1715
    %v1717 = vrot.slane %v978, %v1716
    %v1718 = vcombine.low %v1710, %v1717
    %v1719 = vcombine.high %v1710, %v1717
    %v1721 = vunpack.c.l.s4 1966171168
    %v1722 = vunpack.c.0.s8 %v1721
    %v1723 = vlaneseq
    %v1724 = vshrl.u32 %v1723, 7
    %v1725 = vsub.s32 %v1722, %v1724
    %v1726 = vrot.slane %v1718, %v1725
    %v1728 = vunpack.c.l.s4 1966171168
    %v1729 = vunpack.c.0.s8 %v1728
    %v1730 = vlaneseq
    %v1731 = vshrl.u32 %v1730, 7
    %v1732 = vsub.s32 %v1729, %v1731
    %v1733 = vrot.slane %v1719, %v1732
    %v1734 = vcombine.low %v1045, %v1028
    %v1736 = vunpack.c.l.s4 1966171168
    %v1737 = vunpack.c.0.s8 %v1736
    %v1738 = vlaneseq
    %v1739 = vshrl.u32 %v1738, 7
    %v1740 = vsub.s32 %v1737, %v1739
    %v1741 = vrot.slane %v1734, %v1740
    %v1743 = vunpack.c.l.s4 1966171168
    %v1744 = vunpack.c.0.s8 %v1743
    %v1745 = vlaneseq
    %v1746 = vshrl.u32 %v1745, 7
    %v1747 = vsub.s32 %v1744, %v1746
    %v1748 = vrot.slane %v1042, %v1747
    %v1749 = vcombine.low %v1741, %v1748
    %v1750 = vcombine.high %v1741, %v1748
    %v1752 = vunpack.c.l.s4 1966171168
    %v1753 = vunpack.c.0.s8 %v1752
    %v1754 = vlaneseq
    %v1755 = vshrl.u32 %v1754, 7
    %v1756 = vsub.s32 %v1753, %v1755
    %v1757 = vrot.slane %v1749, %v1756
    %v1759 = vunpack.c.l.s4 1966171168
    %v1760 = vunpack.c.0.s8 %v1759
    %v1761 = vlaneseq
    %v1762 = vshrl.u32 %v1761, 7
    %v1763 = vsub.s32 %v1760, %v1762
    %v1764 = vrot.slane %v1750, %v1763
    %v1765 = vcombine.low %v1078, %v1092
    %v1767 = vunpack.c.l.s4 1966171168
    %v1768 = vunpack.c.0.s8 %v1767
    %v1769 = vlaneseq
    %v1770 = vshrl.u32 %v1769, 7
    %v1771 = vsub.s32 %v1768, %v1770
    %v1772 = vrot.slane %v1765, %v1771
    %v1774 = vunpack.c.l.s4 1966171168
    %v1775 = vunpack.c.0.s8 %v1774
    %v1776 = vlaneseq
    %v1777 = vshrl.u32 %v1776, 7
    %v1778 = vsub.s32 %v1775, %v1777
    %v1779 = vrot.slane %v1094, %v1778
    %v1780 = vcombine.low %v1772, %v1779
    %v1781 = vcombine.high %v1772, %v1779
    %v1783 = vunpack.c.l.s4 1966171168
    %v1784 = vunpack.c.0.s8 %v1783
    %v1785 = vlaneseq
    %v1786 = vshrl.u32 %v1785, 7
    %v1787 = vsub.s32 %v1784, %v1786
    %v1788 = vrot.slane %v1780, %v1787
    %v1790 = vunpack.c.l.s4 1966171168
    %v1791 = vunpack.c.0.s8 %v1790
    %v1792 = vlaneseq
    %v1793 = vshrl.u32 %v1792, 7
    %v1794 = vsub.s32 %v1791, %v1793
    %v1795 = vrot.slane %v1781, %v1794
    %v1796 = vcombine.low %v1142, %v1144
    %v1798 = vunpack.c.l.s4 1966171168
    %v1799 = vunpack.c.0.s8 %v1798
    %v1800 = vlaneseq
    %v1801 = vshrl.u32 %v1800, 7
    %v1802 = vsub.s32 %v1799, %v1801
    %v1803 = vrot.slane %v1796, %v1802
    %v1805 = vunpack.c.l.s4 1966171168
    %v1806 = vunpack.c.0.s8 %v1805
    %v1807 = vlaneseq
    %v1808 = vshrl.u32 %v1807, 7
    %v1809 = vsub.s32 %v1806, %v1808
    %v1810 = vrot.slane %v1146, %v1809
    %v1811 = vcombine.low %v1803, %v1810
    %v1812 = vcombine.high %v1803, %v1810
    %v1814 = vunpack.c.l.s4 1966171168
    %v1815 = vunpack.c.0.s8 %v1814
    %v1816 = vlaneseq
    %v1817 = vshrl.u32 %v1816, 7
    %v1818 = vsub.s32 %v1815, %v1817
    %v1819 = vrot.slane %v1811, %v1818
    %v1821 = vunpack.c.l.s4 1966171168
    %v1822 = vunpack.c.0.s8 %v1821
    %v1823 = vlaneseq
    %v1824 = vshrl.u32 %v1823, 7
    %v1825 = vsub.s32 %v1822, %v1824
    %v1826 = vrot.slane %v1812, %v1825
    %v1827 = vcombine.low %v1194, %v1196
    %v1829 = vunpack.c.l.s4 1966171168
    %v1830 = vunpack.c.0.s8 %v1829
    %v1831 = vlaneseq
    %v1832 = vshrl.u32 %v1831, 7
    %v1833 = vsub.s32 %v1830, %v1832
    %v1834 = vrot.slane %v1827, %v1833
    %v1836 = vunpack.c.l.s4 1966171168
    %v1837 = vunpack.c.0.s8 %v1836
    %v1838 = vlaneseq
    %v1839 = vshrl.u32 %v1838, 7
    %v1840 = vsub.s32 %v1837, %v1839
    %v1841 = vrot.slane %v1221, %v1840
    %v1842 = vcombine.low %v1834, %v1841
    %v1843 = vcombine.high %v1834, %v1841
    %v1845 = vunpack.c.l.s4 1966171168
    %v1846 = vunpack.c.0.s8 %v1845
    %v1847 = vlaneseq
    %v1848 = vshrl.u32 %v1847, 7
    %v1849 = vsub.s32 %v1846, %v1848
    %v1850 = vrot.slane %v1842, %v1849
    %v1852 = vunpack.c.l.s4 1966171168
    %v1853 = vunpack.c.0.s8 %v1852
    %v1854 = vlaneseq
    %v1855 = vshrl.u32 %v1854, 7
    %v1856 = vsub.s32 %v1853, %v1855
    %v1857 = vrot.slane %v1843, %v1856
    %v1858 = vcombine.low %v1246, %v1271
    %v1860 = vunpack.c.l.s4 1966171168
    %v1861 = vunpack.c.0.s8 %v1860
    %v1862 = vlaneseq
    %v1863 = vshrl.u32 %v1862, 7
    %v1864 = vsub.s32 %v1861, %v1863
    %v1865 = vrot.slane %v1858, %v1864
    %v1867 = vunpack.c.l.s4 1966171168
    %v1868 = vunpack.c.0.s8 %v1867
    %v1869 = vlaneseq
    %v1870 = vshrl.u32 %v1869, 7
    %v1871 = vsub.s32 %v1868, %v1870
    %v1872 = vrot.slane %v1285, %v1871
    %v1873 = vcombine.low %v1865, %v1872
    %v1874 = vcombine.high %v1865, %v1872
    %v1876 = vunpack.c.l.s4 1966171168
    %v1877 = vunpack.c.0.s8 %v1876
    %v1878 = vlaneseq
    %v1879 = vshrl.u32 %v1878, 7
    %v1880 = vsub.s32 %v1877, %v1879
    %v1881 = vrot.slane %v1873, %v1880
    %v1883 = vunpack.c.l.s4 1966171168
    %v1884 = vunpack.c.0.s8 %v1883
    %v1885 = vlaneseq
    %v1886 = vshrl.u32 %v1885, 7
    %v1887 = vsub.s32 %v1884, %v1886
    %v1888 = vrot.slane %v1874, %v1887
    %vm1921 = vcmask 1042432
    %v1922 = vsel %vm1921, %v1416, -inf
    %v1923 = vrot.slane %v1922, 4
    %v1924 = vmax.f32 %v1922, %v1923
    %v1925 = vrot.slane %v1924, 2
    %v1926 = vmax.f32 %v1924, %v1925
    %v1927 = vrot.slane %v1926, 1
    %v1928 = vmax.f32 %v1926, %v1927
    %v1929 = vsel %vm1921, %v1423, -inf
    %v1930 = vrot.slane %v1929, 4
    %v1931 = vmax.f32 %v1929, %v1930
    %v1932 = vrot.slane %v1931, 2
    %v1933 = vmax.f32 %v1931, %v1932
    %v1934 = vrot.slane %v1933, 1
    %v1935 = vmax.f32 %v1933, %v1934
    %v1936 = vsel %vm1921, %v1447, -inf
    %v1937 = vrot.slane %v1936, 4
    %v1938 = vmax.f32 %v1936, %v1937
    %v1939 = vrot.slane %v1938, 2
    %v1940 = vmax.f32 %v1938, %v1939
    %v1941 = vrot.slane %v1940, 1
    %v1942 = vmax.f32 %v1940, %v1941
    %v1943 = vsel %vm1921, %v1454, -inf
    %v1944 = vrot.slane %v1943, 4
    %v1945 = vmax.f32 %v1943, %v1944
    %v1946 = vrot.slane %v1945, 2
    %v1947 = vmax.f32 %v1945, %v1946
    %v1948 = vrot.slane %v1947, 1
    %v1949 = vmax.f32 %v1947, %v1948
    %v1950 = vsel %vm1921, %v1478, -inf
    %v1951 = vrot.slane %v1950, 4
    %v1952 = vmax.f32 %v1950, %v1951
    %v1953 = vrot.slane %v1952, 2
    %v1954 = vmax.f32 %v1952, %v1953
    %v1955 = vrot.slane %v1954, 1
    %v1956 = vmax.f32 %v1954, %v1955
    %v1957 = vsel %vm1921, %v1485, -inf
    %v1958 = vrot.slane %v1957, 4
    %v1959 = vmax.f32 %v1957, %v1958
    %v1960 = vrot.slane %v1959, 2
    %v1961 = vmax.f32 %v1959, %v1960
    %v1962 = vrot.slane %v1961, 1
    %v1963 = vmax.f32 %v1961, %v1962
    %v1964 = vsel %vm1921, %v1509, -inf
    %v1965 = vrot.slane %v1964, 4
    %v1966 = vmax.f32 %v1964, %v1965
    %v1967 = vrot.slane %v1966, 2
    %v1968 = vmax.f32 %v1966, %v1967
    %v1969 = vrot.slane %v1968, 1
    %v1970 = vmax.f32 %v1968, %v1969
    %v1971 = vsel %vm1921, %v1516, -inf
    %v1972 = vrot.slane %v1971, 4
    %v1973 = vmax.f32 %v1971, %v1972
    %v1974 = vrot.slane %v1973, 2
    %v1975 = vmax.f32 %v1973, %v1974
    %v1976 = vrot.slane %v1975, 1
    %v1977 = vmax.f32 %v1975, %v1976
    %v1978 = vsel %vm1921, %v1540, -inf
    %v1979 = vrot.slane %v1978, 4
    %v1980 = vmax.f32 %v1978, %v1979
    %v1981 = vrot.slane %v1980, 2
    %v1982 = vmax.f32 %v1980, %v1981
    %v1983 = vrot.slane %v1982, 1
    %v1984 = vmax.f32 %v1982, %v1983
    %v1985 = vsel %vm1921, %v1547, -inf
    %v1986 = vrot.slane %v1985, 4
    %v1987 = vmax.f32 %v1985, %v1986
    %v1988 = vrot.slane %v1987, 2
    %v1989 = vmax.f32 %v1987, %v1988
    %v1990 = vrot.slane %v1989, 1
    %v1991 = vmax.f32 %v1989, %v1990
    %v1992 = vsel %vm1921, %v1571, -inf
    %v1993 = vrot.slane %v1992, 4
    %v1994 = vmax.f32 %v1992, %v1993
    %v1995 = vrot.slane %v1994, 2
    %v1996 = vmax.f32 %v1994, %v1995
    %v1997 = vrot.slane %v1996, 1
    %v1998 = vmax.f32 %v1996, %v1997
    %v1999 = vsel %vm1921, %v1578, -inf
    %v2000 = vrot.slane %v1999, 4
    %v2001 = vmax.f32 %v1999, %v2000
    %v2002 = vrot.slane %v2001, 2
    %v2003 = vmax.f32 %v2001, %v2002
    %v2004 = vrot.slane %v2003, 1
    %v2005 = vmax.f32 %v2003, %v2004
    %v2006 = vsel %vm1921, %v1602, -inf
    %v2007 = vrot.slane %v2006, 4
    %v2008 = vmax.f32 %v2006, %v2007
    %v2009 = vrot.slane %v2008, 2
    %v2010 = vmax.f32 %v2008, %v2009
    %v2011 = vrot.slane %v2010, 1
    %v2012 = vmax.f32 %v2010, %v2011
    %v2013 = vsel %vm1921, %v1609, -inf
    %v2014 = vrot.slane %v2013, 4
    %v2015 = vmax.f32 %v2013, %v2014
    %v2016 = vrot.slane %v2015, 2
    %v2017 = vmax.f32 %v2015, %v2016
    %v2018 = vrot.slane %v2017, 1
    %v2019 = vmax.f32 %v2017, %v2018
    %v2020 = vsel %vm1921, %v1633, -inf
    %v2021 = vrot.slane %v2020, 4
    %v2022 = vmax.f32 %v2020, %v2021
    %v2023 = vrot.slane %v2022, 2
    %v2024 = vmax.f32 %v2022, %v2023
    %v2025 = vrot.slane %v2024, 1
    %v2026 = vmax.f32 %v2024, %v2025
    %v2027 = vsel %vm1921, %v1640, -inf
    %v2028 = vrot.slane %v2027, 4
    %v2029 = vmax.f32 %v2027, %v2028
    %v2030 = vrot.slane %v2029, 2
    %v2031 = vmax.f32 %v2029, %v2030
    %v2032 = vrot.slane %v2031, 1
    %v2033 = vmax.f32 %v2031, %v2032
    %v2034 = vsel %vm1921, %v1664, -inf
    %v2035 = vrot.slane %v2034, 4
    %v2036 = vmax.f32 %v2034, %v2035
    %v2037 = vrot.slane %v2036, 2
    %v2038 = vmax.f32 %v2036, %v2037
    %v2039 = vrot.slane %v2038, 1
    %v2040 = vmax.f32 %v2038, %v2039
    %v2041 = vsel %vm1921, %v1671, -inf
    %v2042 = vrot.slane %v2041, 4
    %v2043 = vmax.f32 %v2041, %v2042
    %v2044 = vrot.slane %v2043, 2
    %v2045 = vmax.f32 %v2043, %v2044
    %v2046 = vrot.slane %v2045, 1
    %v2047 = vmax.f32 %v2045, %v2046
    %v2048 = vsel %vm1921, %v1695, -inf
    %v2049 = vrot.slane %v2048, 4
    %v2050 = vmax.f32 %v2048, %v2049
    %v2051 = vrot.slane %v2050, 2
    %v2052 = vmax.f32 %v2050, %v2051
    %v2053 = vrot.slane %v2052, 1
    %v2054 = vmax.f32 %v2052, %v2053
    %v2055 = vsel %vm1921, %v1702, -inf
    %v2056 = vrot.slane %v2055, 4
    %v2057 = vmax.f32 %v2055, %v2056
    %v2058 = vrot.slane %v2057, 2
    %v2059 = vmax.f32 %v2057, %v2058
    %v2060 = vrot.slane %v2059, 1
    %v2061 = vmax.f32 %v2059, %v2060
    %v2062 = vsel %vm1921, %v1726, -inf
    %v2063 = vrot.slane %v2062, 4
    %v2064 = vmax.f32 %v2062, %v2063
    %v2065 = vrot.slane %v2064, 2
    %v2066 = vmax.f32 %v2064, %v2065
    %v2067 = vrot.slane %v2066, 1
    %v2068 = vmax.f32 %v2066, %v2067
    %v2069 = vsel %vm1921, %v1733, -inf
    %v2070 = vrot.slane %v2069, 4
    %v2071 = vmax.f32 %v2069, %v2070
    %v2072 = vrot.slane %v2071, 2
    %v2073 = vmax.f32 %v2071, %v2072
    %v2074 = vrot.slane %v2073, 1
    %v2075 = vmax.f32 %v2073, %v2074
    %v2076 = vsel %vm1921, %v1757, -inf
    %v2077 = vrot.slane %v2076, 4
    %v2078 = vmax.f32 %v2076, %v2077
    %v2079 = vrot.slane %v2078, 2
    %v2080 = vmax.f32 %v2078, %v2079
    %v2081 = vrot.slane %v2080, 1
    %v2082 = vmax.f32 %v2080, %v2081
    %v2083 = vsel %vm1921, %v1764, -inf
    %v2084 = vrot.slane %v2083, 4
    %v2085 = vmax.f32 %v2083, %v2084
    %v2086 = vrot.slane %v2085, 2
    %v2087 = vmax.f32 %v2085, %v2086
    %v2088 = vrot.slane %v2087, 1
    %v2089 = vmax.f32 %v2087, %v2088
    %v2090 = vsel %vm1921, %v1788, -inf
    %v2091 = vrot.slane %v2090, 4
    %v2092 = vmax.f32 %v2090, %v2091
    %v2093 = vrot.slane %v2092, 2
    %v2094 = vmax.f32 %v2092, %v2093
    %v2095 = vrot.slane %v2094, 1
    %v2096 = vmax.f32 %v2094, %v2095
    %v2097 = vsel %vm1921, %v1795, -inf
    %v2098 = vrot.slane %v2097, 4
    %v2099 = vmax.f32 %v2097, %v2098
    %v2100 = vrot.slane %v2099, 2
    %v2101 = vmax.f32 %v2099, %v2100
    %v2102 = vrot.slane %v2101, 1
    %v2103 = vmax.f32 %v2101, %v2102
    %v2104 = vsel %vm1921, %v1819, -inf
    %v2105 = vrot.slane %v2104, 4
    %v2106 = vmax.f32 %v2104, %v2105
    %v2107 = vrot.slane %v2106, 2
    %v2108 = vmax.f32 %v2106, %v2107
    %v2109 = vrot.slane %v2108, 1
    %v2110 = vmax.f32 %v2108, %v2109
    %v2111 = vsel %vm1921, %v1826, -inf
    %v2112 = vrot.slane %v2111, 4
    %v2113 = vmax.f32 %v2111, %v2112
    %v2114 = vrot.slane %v2113, 2
    %v2115 = vmax.f32 %v2113, %v2114
    %v2116 = vrot.slane %v2115, 1
    %v2117 = vmax.f32 %v2115, %v2116
    %v2118 = vsel %vm1921, %v1850, -inf
    %v2119 = vrot.slane %v2118, 4
    %v2120 = vmax.f32 %v2118, %v2119
    %v2121 = vrot.slane %v2120, 2
    %v2122 = vmax.f32 %v2120, %v2121
    %v2123 = vrot.slane %v2122, 1
    %v2124 = vmax.f32 %v2122, %v2123
    %v2125 = vsel %vm1921, %v1857, -inf
    %v2126 = vrot.slane %v2125, 4
    %v2127 = vmax.f32 %v2125, %v2126
    %v2128 = vrot.slane %v2127, 2
    %v2129 = vmax.f32 %v2127, %v2128
    %v2130 = vrot.slane %v2129, 1
    %v2131 = vmax.f32 %v2129, %v2130
    %v2132 = vsel %vm1921, %v1881, -inf
    %v2133 = vrot.slane %v2132, 4
    %v2134 = vmax.f32 %v2132, %v2133
    %v2135 = vrot.slane %v2134, 2
    %v2136 = vmax.f32 %v2134, %v2135
    %v2137 = vrot.slane %v2136, 1
    %v2138 = vmax.f32 %v2136, %v2137
    %v2139 = vsel %vm1921, %v1888, -inf
    %v2140 = vrot.slane %v2139, 4
    %v2141 = vmax.f32 %v2139, %v2140
    %v2142 = vrot.slane %v2141, 2
    %v2143 = vmax.f32 %v2141, %v2142
    %v2144 = vrot.slane %v2143, 1
    %v2145 = vmax.f32 %v2143, %v2144
    %v2146 = vcombine.low %v445, %v428
    %v2148 = vunpack.c.l.s4 1966171168
    %v2149 = vunpack.c.0.s8 %v2148
    %v2150 = vlaneseq
    %v2151 = vshrl.u32 %v2150, 7
    %v2152 = vsub.s32 %v2149, %v2151
    %v2153 = vrot.slane %v2146, %v2152
    %v2155 = vunpack.c.l.s4 1966171168
    %v2156 = vunpack.c.0.s8 %v2155
    %v2157 = vlaneseq
    %v2158 = vshrl.u32 %v2157, 7
    %v2159 = vsub.s32 %v2156, %v2158
    %v2160 = vrot.slane %v442, %v2159
    %v2161 = vcombine.low %v2153, %v2160
    %v2162 = vcombine.high %v2153, %v2160
    %v2164 = vunpack.c.l.s4 1966171168
    %v2165 = vunpack.c.0.s8 %v2164
    %v2166 = vlaneseq
    %v2167 = vshrl.u32 %v2166, 7
    %v2168 = vsub.s32 %v2165, %v2167
    %v2169 = vrot.slane %v2161, %v2168
    %v2171 = vunpack.c.l.s4 1966171168
    %v2172 = vunpack.c.0.s8 %v2171
    %v2173 = vlaneseq
    %v2174 = vshrl.u32 %v2173, 7
    %v2175 = vsub.s32 %v2172, %v2174
    %v2176 = vrot.slane %v2162, %v2175
    %v2177 = vcombine.low %v478, %v492
    %v2179 = vunpack.c.l.s4 1966171168
    %v2180 = vunpack.c.0.s8 %v2179
    %v2181 = vlaneseq
    %v2182 = vshrl.u32 %v2181, 7
    %v2183 = vsub.s32 %v2180, %v2182
    %v2184 = vrot.slane %v2177, %v2183
    %v2186 = vunpack.c.l.s4 1966171168
    %v2187 = vunpack.c.0.s8 %v2186
    %v2188 = vlaneseq
    %v2189 = vshrl.u32 %v2188, 7
    %v2190 = vsub.s32 %v2187, %v2189
    %v2191 = vrot.slane %v494, %v2190
    %v2192 = vcombine.low %v2184, %v2191
    %v2193 = vcombine.high %v2184, %v2191
    %v2195 = vunpack.c.l.s4 1966171168
    %v2196 = vunpack.c.0.s8 %v2195
    %v2197 = vlaneseq
    %v2198 = vshrl.u32 %v2197, 7
    %v2199 = vsub.s32 %v2196, %v2198
    %v2200 = vrot.slane %v2192, %v2199
    %v2202 = vunpack.c.l.s4 1966171168
    %v2203 = vunpack.c.0.s8 %v2202
    %v2204 = vlaneseq
    %v2205 = vshrl.u32 %v2204, 7
    %v2206 = vsub.s32 %v2203, %v2205
    %v2207 = vrot.slane %v2193, %v2206
    %v2208 = vcombine.low %v542, %v544
    %v2210 = vunpack.c.l.s4 1966171168
    %v2211 = vunpack.c.0.s8 %v2210
    %v2212 = vlaneseq
    %v2213 = vshrl.u32 %v2212, 7
    %v2214 = vsub.s32 %v2211, %v2213
    %v2215 = vrot.slane %v2208, %v2214
    %v2217 = vunpack.c.l.s4 1966171168
    %v2218 = vunpack.c.0.s8 %v2217
    %v2219 = vlaneseq
    %v2220 = vshrl.u32 %v2219, 7
    %v2221 = vsub.s32 %v2218, %v2220
    %v2222 = vrot.slane %v546, %v2221
    %v2223 = vcombine.low %v2215, %v2222
    %v2224 = vcombine.high %v2215, %v2222
    %v2226 = vunpack.c.l.s4 1966171168
    %v2227 = vunpack.c.0.s8 %v2226
    %v2228 = vlaneseq
    %v2229 = vshrl.u32 %v2228, 7
    %v2230 = vsub.s32 %v2227, %v2229
    %v2231 = vrot.slane %v2223, %v2230
    %v2233 = vunpack.c.l.s4 1966171168
    %v2234 = vunpack.c.0.s8 %v2233
    %v2235 = vlaneseq
    %v2236 = vshrl.u32 %v2235, 7
    %v2237 = vsub.s32 %v2234, %v2236
    %v2238 = vrot.slane %v2224, %v2237
    %v2239 = vcombine.low %v594, %v596
    %v2241 = vunpack.c.l.s4 1966171168
    %v2242 = vunpack.c.0.s8 %v2241
    %v2243 = vlaneseq
    %v2244 = vshrl.u32 %v2243, 7
    %v2245 = vsub.s32 %v2242, %v2244
    %v2246 = vrot.slane %v2239, %v2245
    %v2248 = vunpack.c.l.s4 1966171168
    %v2249 = vunpack.c.0.s8 %v2248
    %v2250 = vlaneseq
    %v2251 = vshrl.u32 %v2250, 7
    %v2252 = vsub.s32 %v2249, %v2251
    %v2253 = vrot.slane %v621, %v2252
    %v2254 = vcombine.low %v2246, %v2253
    %v2255 = vcombine.high %v2246, %v2253
    %v2257 = vunpack.c.l.s4 1966171168
    %v2258 = vunpack.c.0.s8 %v2257
    %v2259 = vlaneseq
    %v2260 = vshrl.u32 %v2259, 7
    %v2261 = vsub.s32 %v2258, %v2260
    %v2262 = vrot.slane %v2254, %v2261
    %v2264 = vunpack.c.l.s4 1966171168
    %v2265 = vunpack.c.0.s8 %v2264
    %v2266 = vlaneseq
    %v2267 = vshrl.u32 %v2266, 7
    %v2268 = vsub.s32 %v2265, %v2267
    %v2269 = vrot.slane %v2255, %v2268
    %v2270 = vcombine.low %v646, %v671
    %v2272 = vunpack.c.l.s4 1966171168
    %v2273 = vunpack.c.0.s8 %v2272
    %v2274 = vlaneseq
    %v2275 = vshrl.u32 %v2274, 7
    %v2276 = vsub.s32 %v2273, %v2275
    %v2277 = vrot.slane %v2270, %v2276
    %v2279 = vunpack.c.l.s4 1966171168
    %v2280 = vunpack.c.0.s8 %v2279
    %v2281 = vlaneseq
    %v2282 = vshrl.u32 %v2281, 7
    %v2283 = vsub.s32 %v2280, %v2282
    %v2284 = vrot.slane %v685, %v2283
    %v2285 = vcombine.low %v2277, %v2284
    %v2286 = vcombine.high %v2277, %v2284
    %v2288 = vunpack.c.l.s4 1966171168
    %v2289 = vunpack.c.0.s8 %v2288
    %v2290 = vlaneseq
    %v2291 = vshrl.u32 %v2290, 7
    %v2292 = vsub.s32 %v2289, %v2291
    %v2293 = vrot.slane %v2285, %v2292
    %v2295 = vunpack.c.l.s4 1966171168
    %v2296 = vunpack.c.0.s8 %v2295
    %v2297 = vlaneseq
    %v2298 = vshrl.u32 %v2297, 7
    %v2299 = vsub.s32 %v2296, %v2298
    %v2300 = vrot.slane %v2286, %v2299
    %v2301 = vcombine.low %v721, %v735
    %v2303 = vunpack.c.l.s4 1966171168
    %v2304 = vunpack.c.0.s8 %v2303
    %v2305 = vlaneseq
    %v2306 = vshrl.u32 %v2305, 7
    %v2307 = vsub.s32 %v2304, %v2306
    %v2308 = vrot.slane %v2301, %v2307
    %v2310 = vunpack.c.l.s4 1966171168
    %v2311 = vunpack.c.0.s8 %v2310
    %v2312 = vlaneseq
    %v2313 = vshrl.u32 %v2312, 7
    %v2314 = vsub.s32 %v2311, %v2313
    %v2315 = vrot.slane %v743, %v2314
    %v2316 = vcombine.low %v2308, %v2315
    %v2317 = vcombine.high %v2308, %v2315
    %v2319 = vunpack.c.l.s4 1966171168
    %v2320 = vunpack.c.0.s8 %v2319
    %v2321 = vlaneseq
    %v2322 = vshrl.u32 %v2321, 7
    %v2323 = vsub.s32 %v2320, %v2322
    %v2324 = vrot.slane %v2316, %v2323
    %v2326 = vunpack.c.l.s4 1966171168
    %v2327 = vunpack.c.0.s8 %v2326
    %v2328 = vlaneseq
    %v2329 = vshrl.u32 %v2328, 7
    %v2330 = vsub.s32 %v2327, %v2329
    %v2331 = vrot.slane %v2317, %v2330
    %v2332 = vcombine.low %v785, %v793
    %v2334 = vunpack.c.l.s4 1966171168
    %v2335 = vunpack.c.0.s8 %v2334
    %v2336 = vlaneseq
    %v2337 = vshrl.u32 %v2336, 7
    %v2338 = vsub.s32 %v2335, %v2337
    %v2339 = vrot.slane %v2332, %v2338
    %v2341 = vunpack.c.l.s4 1966171168
    %v2342 = vunpack.c.0.s8 %v2341
    %v2343 = vlaneseq
    %v2344 = vshrl.u32 %v2343, 7
    %v2345 = vsub.s32 %v2342, %v2344
    %v2346 = vrot.slane %v795, %v2345
    %v2347 = vcombine.low %v2339, %v2346
    %v2348 = vcombine.high %v2339, %v2346
    %v2350 = vunpack.c.l.s4 1966171168
    %v2351 = vunpack.c.0.s8 %v2350
    %v2352 = vlaneseq
    %v2353 = vshrl.u32 %v2352, 7
    %v2354 = vsub.s32 %v2351, %v2353
    %v2355 = vrot.slane %v2347, %v2354
    %v2357 = vunpack.c.l.s4 1966171168
    %v2358 = vunpack.c.0.s8 %v2357
    %v2359 = vlaneseq
    %v2360 = vshrl.u32 %v2359, 7
    %v2361 = vsub.s32 %v2358, %v2360
    %v2362 = vrot.slane %v2348, %v2361
    %v2363 = vcombine.low %v843, %v845
    %v2365 = vunpack.c.l.s4 1966171168
    %v2366 = vunpack.c.0.s8 %v2365
    %v2367 = vlaneseq
    %v2368 = vshrl.u32 %v2367, 7
    %v2369 = vsub.s32 %v2366, %v2368
    %v2370 = vrot.slane %v2363, %v2369
    %v2372 = vunpack.c.l.s4 1966171168
    %v2373 = vunpack.c.0.s8 %v2372
    %v2374 = vlaneseq
    %v2375 = vshrl.u32 %v2374, 7
    %v2376 = vsub.s32 %v2373, %v2375
    %v2377 = vrot.slane %v828, %v2376
    %v2378 = vcombine.low %v2370, %v2377
    %v2379 = vcombine.high %v2370, %v2377
    %v2381 = vunpack.c.l.s4 1966171168
    %v2382 = vunpack.c.0.s8 %v2381
    %v2383 = vlaneseq
    %v2384 = vshrl.u32 %v2383, 7
    %v2385 = vsub.s32 %v2382, %v2384
    %v2386 = vrot.slane %v2378, %v2385
    %v2388 = vunpack.c.l.s4 1966171168
    %v2389 = vunpack.c.0.s8 %v2388
    %v2390 = vlaneseq
    %v2391 = vshrl.u32 %v2390, 7
    %v2392 = vsub.s32 %v2389, %v2391
    %v2393 = vrot.slane %v2379, %v2392
    %v2394 = vcombine.low %v895, %v878
    %v2396 = vunpack.c.l.s4 1966171168
    %v2397 = vunpack.c.0.s8 %v2396
    %v2398 = vlaneseq
    %v2399 = vshrl.u32 %v2398, 7
    %v2400 = vsub.s32 %v2397, %v2399
    %v2401 = vrot.slane %v2394, %v2400
    %v2403 = vunpack.c.l.s4 1966171168
    %v2404 = vunpack.c.0.s8 %v2403
    %v2405 = vlaneseq
    %v2406 = vshrl.u32 %v2405, 7
    %v2407 = vsub.s32 %v2404, %v2406
    %v2408 = vrot.slane %v892, %v2407
    %v2409 = vcombine.low %v2401, %v2408
    %v2410 = vcombine.high %v2401, %v2408
    %v2412 = vunpack.c.l.s4 1966171168
    %v2413 = vunpack.c.0.s8 %v2412
    %v2414 = vlaneseq
    %v2415 = vshrl.u32 %v2414, 7
    %v2416 = vsub.s32 %v2413, %v2415
    %v2417 = vrot.slane %v2409, %v2416
    %v2419 = vunpack.c.l.s4 1966171168
    %v2420 = vunpack.c.0.s8 %v2419
    %v2421 = vlaneseq
    %v2422 = vshrl.u32 %v2421, 7
    %v2423 = vsub.s32 %v2420, %v2422
    %v2424 = vrot.slane %v2410, %v2423
    %v2425 = vcombine.low %v928, %v942
    %v2427 = vunpack.c.l.s4 1966171168
    %v2428 = vunpack.c.0.s8 %v2427
    %v2429 = vlaneseq
    %v2430 = vshrl.u32 %v2429, 7
    %v2431 = vsub.s32 %v2428, %v2430
    %v2432 = vrot.slane %v2425, %v2431
    %v2434 = vunpack.c.l.s4 1966171168
    %v2435 = vunpack.c.0.s8 %v2434
    %v2436 = vlaneseq
    %v2437 = vshrl.u32 %v2436, 7
    %v2438 = vsub.s32 %v2435, %v2437
    %v2439 = vrot.slane %v944, %v2438
    %v2440 = vcombine.low %v2432, %v2439
    %v2441 = vcombine.high %v2432, %v2439
    %v2443 = vunpack.c.l.s4 1966171168
    %v2444 = vunpack.c.0.s8 %v2443
    %v2445 = vlaneseq
    %v2446 = vshrl.u32 %v2445, 7
    %v2447 = vsub.s32 %v2444, %v2446
    %v2448 = vrot.slane %v2440, %v2447
    %v2450 = vunpack.c.l.s4 1966171168
    %v2451 = vunpack.c.0.s8 %v2450
    %v2452 = vlaneseq
    %v2453 = vshrl.u32 %v2452, 7
    %v2454 = vsub.s32 %v2451, %v2453
    %v2455 = vrot.slane %v2441, %v2454
    %v2456 = vcombine.low %v992, %v994
    %v2458 = vunpack.c.l.s4 1966171168
    %v2459 = vunpack.c.0.s8 %v2458
    %v2460 = vlaneseq
    %v2461 = vshrl.u32 %v2460, 7
    %v2462 = vsub.s32 %v2459, %v2461
    %v2463 = vrot.slane %v2456, %v2462
    %v2465 = vunpack.c.l.s4 1966171168
    %v2466 = vunpack.c.0.s8 %v2465
    %v2467 = vlaneseq
    %v2468 = vshrl.u32 %v2467, 7
    %v2469 = vsub.s32 %v2466, %v2468
    %v2470 = vrot.slane %v996, %v2469
    %v2471 = vcombine.low %v2463, %v2470
    %v2472 = vcombine.high %v2463, %v2470
    %v2474 = vunpack.c.l.s4 1966171168
    %v2475 = vunpack.c.0.s8 %v2474
    %v2476 = vlaneseq
    %v2477 = vshrl.u32 %v2476, 7
    %v2478 = vsub.s32 %v2475, %v2477
    %v2479 = vrot.slane %v2471, %v2478
    %v2481 = vunpack.c.l.s4 1966171168
    %v2482 = vunpack.c.0.s8 %v2481
    %v2483 = vlaneseq
    %v2484 = vshrl.u32 %v2483, 7
    %v2485 = vsub.s32 %v2482, %v2484
    %v2486 = vrot.slane %v2472, %v2485
    %v2487 = vcombine.low %v1044, %v1046
    %v2489 = vunpack.c.l.s4 1966171168
    %v2490 = vunpack.c.0.s8 %v2489
    %v2491 = vlaneseq
    %v2492 = vshrl.u32 %v2491, 7
    %v2493 = vsub.s32 %v2490, %v2492
    %v2494 = vrot.slane %v2487, %v2493
    %v2496 = vunpack.c.l.s4 1966171168
    %v2497 = vunpack.c.0.s8 %v2496
    %v2498 = vlaneseq
    %v2499 = vshrl.u32 %v2498, 7
    %v2500 = vsub.s32 %v2497, %v2499
    %v2501 = vrot.slane %v1071, %v2500
    %v2502 = vcombine.low %v2494, %v2501
    %v2503 = vcombine.high %v2494, %v2501
    %v2505 = vunpack.c.l.s4 1966171168
    %v2506 = vunpack.c.0.s8 %v2505
    %v2507 = vlaneseq
    %v2508 = vshrl.u32 %v2507, 7
    %v2509 = vsub.s32 %v2506, %v2508
    %v2510 = vrot.slane %v2502, %v2509
    %v2512 = vunpack.c.l.s4 1966171168
    %v2513 = vunpack.c.0.s8 %v2512
    %v2514 = vlaneseq
    %v2515 = vshrl.u32 %v2514, 7
    %v2516 = vsub.s32 %v2513, %v2515
    %v2517 = vrot.slane %v2503, %v2516
    %v2518 = vcombine.low %v1096, %v1121
    %v2520 = vunpack.c.l.s4 1966171168
    %v2521 = vunpack.c.0.s8 %v2520
    %v2522 = vlaneseq
    %v2523 = vshrl.u32 %v2522, 7
    %v2524 = vsub.s32 %v2521, %v2523
    %v2525 = vrot.slane %v2518, %v2524
    %v2527 = vunpack.c.l.s4 1966171168
    %v2528 = vunpack.c.0.s8 %v2527
    %v2529 = vlaneseq
    %v2530 = vshrl.u32 %v2529, 7
    %v2531 = vsub.s32 %v2528, %v2530
    %v2532 = vrot.slane %v1135, %v2531
    %v2533 = vcombine.low %v2525, %v2532
    %v2534 = vcombine.high %v2525, %v2532
    %v2536 = vunpack.c.l.s4 1966171168
    %v2537 = vunpack.c.0.s8 %v2536
    %v2538 = vlaneseq
    %v2539 = vshrl.u32 %v2538, 7
    %v2540 = vsub.s32 %v2537, %v2539
    %v2541 = vrot.slane %v2533, %v2540
    %v2543 = vunpack.c.l.s4 1966171168
    %v2544 = vunpack.c.0.s8 %v2543
    %v2545 = vlaneseq
    %v2546 = vshrl.u32 %v2545, 7
    %v2547 = vsub.s32 %v2544, %v2546
    %v2548 = vrot.slane %v2534, %v2547
    %v2549 = vcombine.low %v1171, %v1185
    %v2551 = vunpack.c.l.s4 1966171168
    %v2552 = vunpack.c.0.s8 %v2551
    %v2553 = vlaneseq
    %v2554 = vshrl.u32 %v2553, 7
    %v2555 = vsub.s32 %v2552, %v2554
    %v2556 = vrot.slane %v2549, %v2555
    %v2558 = vunpack.c.l.s4 1966171168
    %v2559 = vunpack.c.0.s8 %v2558
    %v2560 = vlaneseq
    %v2561 = vshrl.u32 %v2560, 7
    %v2562 = vsub.s32 %v2559, %v2561
    %v2563 = vrot.slane %v1193, %v2562
    %v2564 = vcombine.low %v2556, %v2563
    %v2565 = vcombine.high %v2556, %v2563
    %v2567 = vunpack.c.l.s4 1966171168
    %v2568 = vunpack.c.0.s8 %v2567
    %v2569 = vlaneseq
    %v2570 = vshrl.u32 %v2569, 7
    %v2571 = vsub.s32 %v2568, %v2570
    %v2572 = vrot.slane %v2564, %v2571
    %v2574 = vunpack.c.l.s4 1966171168
    %v2575 = vunpack.c.0.s8 %v2574
    %v2576 = vlaneseq
    %v2577 = vshrl.u32 %v2576, 7
    %v2578 = vsub.s32 %v2575, %v2577
    %v2579 = vrot.slane %v2565, %v2578
    %v2580 = vcombine.low %v1235, %v1243
    %v2582 = vunpack.c.l.s4 1966171168
    %v2583 = vunpack.c.0.s8 %v2582
    %v2584 = vlaneseq
    %v2585 = vshrl.u32 %v2584, 7
    %v2586 = vsub.s32 %v2583, %v2585
    %v2587 = vrot.slane %v2580, %v2586
    %v2589 = vunpack.c.l.s4 1966171168
    %v2590 = vunpack.c.0.s8 %v2589
    %v2591 = vlaneseq
    %v2592 = vshrl.u32 %v2591, 7
    %v2593 = vsub.s32 %v2590, %v2592
    %v2594 = vrot.slane %v1245, %v2593
    %v2595 = vcombine.low %v2587, %v2594
    %v2596 = vcombine.high %v2587, %v2594
    %v2598 = vunpack.c.l.s4 1966171168
    %v2599 = vunpack.c.0.s8 %v2598
    %v2600 = vlaneseq
    %v2601 = vshrl.u32 %v2600, 7
    %v2602 = vsub.s32 %v2599, %v2601
    %v2603 = vrot.slane %v2595, %v2602
    %v2605 = vunpack.c.l.s4 1966171168
    %v2606 = vunpack.c.0.s8 %v2605
    %v2607 = vlaneseq
    %v2608 = vshrl.u32 %v2607, 7
    %v2609 = vsub.s32 %v2606, %v2608
    %v2610 = vrot.slane %v2596, %v2609
    %v2611 = vcombine.low %v1293, %v1295
    %v2613 = vunpack.c.l.s4 1966171168
    %v2614 = vunpack.c.0.s8 %v2613
    %v2615 = vlaneseq
    %v2616 = vshrl.u32 %v2615, 7
    %v2617 = vsub.s32 %v2614, %v2616
    %v2618 = vrot.slane %v2611, %v2617
    %v2620 = vunpack.c.l.s4 1966171168
    %v2621 = vunpack.c.0.s8 %v2620
    %v2622 = vlaneseq
    %v2623 = vshrl.u32 %v2622, 7
    %v2624 = vsub.s32 %v2621, %v2623
    %v2625 = vrot.slane %v1278, %v2624
    %v2626 = vcombine.low %v2618, %v2625
    %v2627 = vcombine.high %v2618, %v2625
    %v2629 = vunpack.c.l.s4 1966171168
    %v2630 = vunpack.c.0.s8 %v2629
    %v2631 = vlaneseq
    %v2632 = vshrl.u32 %v2631, 7
    %v2633 = vsub.s32 %v2630, %v2632
    %v2634 = vrot.slane %v2626, %v2633
    %v2636 = vunpack.c.l.s4 1966171168
    %v2637 = vunpack.c.0.s8 %v2636
    %v2638 = vlaneseq
    %v2639 = vshrl.u32 %v2638, 7
    %v2640 = vsub.s32 %v2637, %v2639
    %v2641 = vrot.slane %v2627, %v2640
    %v2674 = vsel %vm1921, %v2169, -inf
    %v2675 = vrot.slane %v2674, 4
    %v2676 = vmax.f32 %v2674, %v2675
    %v2677 = vrot.slane %v2676, 2
    %v2678 = vmax.f32 %v2676, %v2677
    %v2679 = vrot.slane %v2678, 1
    %v2680 = vmax.f32 %v2678, %v2679
    %v2681 = vsel %vm1921, %v2176, -inf
    %v2682 = vrot.slane %v2681, 4
    %v2683 = vmax.f32 %v2681, %v2682
    %v2684 = vrot.slane %v2683, 2
    %v2685 = vmax.f32 %v2683, %v2684
    %v2686 = vrot.slane %v2685, 1
    %v2687 = vmax.f32 %v2685, %v2686
    %v2688 = vsel %vm1921, %v2200, -inf
    %v2689 = vrot.slane %v2688, 4
    %v2690 = vmax.f32 %v2688, %v2689
    %v2691 = vrot.slane %v2690, 2
    %v2692 = vmax.f32 %v2690, %v2691
    %v2693 = vrot.slane %v2692, 1
    %v2694 = vmax.f32 %v2692, %v2693
    %v2695 = vsel %vm1921, %v2207, -inf
    %v2696 = vrot.slane %v2695, 4
    %v2697 = vmax.f32 %v2695, %v2696
    %v2698 = vrot.slane %v2697, 2
    %v2699 = vmax.f32 %v2697, %v2698
    %v2700 = vrot.slane %v2699, 1
    %v2701 = vmax.f32 %v2699, %v2700
    %v2702 = vsel %vm1921, %v2231, -inf
    %v2703 = vrot.slane %v2702, 4
    %v2704 = vmax.f32 %v2702, %v2703
    %v2705 = vrot.slane %v2704, 2
    %v2706 = vmax.f32 %v2704, %v2705
    %v2707 = vrot.slane %v2706, 1
    %v2708 = vmax.f32 %v2706, %v2707
    %v2709 = vsel %vm1921, %v2238, -inf
    %v2710 = vrot.slane %v2709, 4
    %v2711 = vmax.f32 %v2709, %v2710
    %v2712 = vrot.slane %v2711, 2
    %v2713 = vmax.f32 %v2711, %v2712
    %v2714 = vrot.slane %v2713, 1
    %v2715 = vmax.f32 %v2713, %v2714
    %v2716 = vsel %vm1921, %v2262, -inf
    %v2717 = vrot.slane %v2716, 4
    %v2718 = vmax.f32 %v2716, %v2717
    %v2719 = vrot.slane %v2718, 2
    %v2720 = vmax.f32 %v2718, %v2719
    %v2721 = vrot.slane %v2720, 1
    %v2722 = vmax.f32 %v2720, %v2721
    %v2723 = vsel %vm1921, %v2269, -inf
    %v2724 = vrot.slane %v2723, 4
    %v2725 = vmax.f32 %v2723, %v2724
    %v2726 = vrot.slane %v2725, 2
    %v2727 = vmax.f32 %v2725, %v2726
    %v2728 = vrot.slane %v2727, 1
    %v2729 = vmax.f32 %v2727, %v2728
    %v2730 = vsel %vm1921, %v2293, -inf
    %v2731 = vrot.slane %v2730, 4
    %v2732 = vmax.f32 %v2730, %v2731
    %v2733 = vrot.slane %v2732, 2
    %v2734 = vmax.f32 %v2732, %v2733
    %v2735 = vrot.slane %v2734, 1
    %v2736 = vmax.f32 %v2734, %v2735
    %v2737 = vsel %vm1921, %v2300, -inf
    %v2738 = vrot.slane %v2737, 4
    %v2739 = vmax.f32 %v2737, %v2738
    %v2740 = vrot.slane %v2739, 2
    %v2741 = vmax.f32 %v2739, %v2740
    %v2742 = vrot.slane %v2741, 1
    %v2743 = vmax.f32 %v2741, %v2742
    %v2744 = vsel %vm1921, %v2324, -inf
    %v2745 = vrot.slane %v2744, 4
    %v2746 = vmax.f32 %v2744, %v2745
    %v2747 = vrot.slane %v2746, 2
    %v2748 = vmax.f32 %v2746, %v2747
    %v2749 = vrot.slane %v2748, 1
    %v2750 = vmax.f32 %v2748, %v2749
    %v2751 = vsel %vm1921, %v2331, -inf
    %v2752 = vrot.slane %v2751, 4
    %v2753 = vmax.f32 %v2751, %v2752
    %v2754 = vrot.slane %v2753, 2
    %v2755 = vmax.f32 %v2753, %v2754
    %v2756 = vrot.slane %v2755, 1
    %v2757 = vmax.f32 %v2755, %v2756
    %v2758 = vsel %vm1921, %v2355, -inf
    %v2759 = vrot.slane %v2758, 4
    %v2760 = vmax.f32 %v2758, %v2759
    %v2761 = vrot.slane %v2760, 2
    %v2762 = vmax.f32 %v2760, %v2761
    %v2763 = vrot.slane %v2762, 1
    %v2764 = vmax.f32 %v2762, %v2763
    %v2765 = vsel %vm1921, %v2362, -inf
    %v2766 = vrot.slane %v2765, 4
    %v2767 = vmax.f32 %v2765, %v2766
    %v2768 = vrot.slane %v2767, 2
    %v2769 = vmax.f32 %v2767, %v2768
    %v2770 = vrot.slane %v2769, 1
    %v2771 = vmax.f32 %v2769, %v2770
    %v2772 = vsel %vm1921, %v2386, -inf
    %v2773 = vrot.slane %v2772, 4
    %v2774 = vmax.f32 %v2772, %v2773
    %v2775 = vrot.slane %v2774, 2
    %v2776 = vmax.f32 %v2774, %v2775
    %v2777 = vrot.slane %v2776, 1
    %v2778 = vmax.f32 %v2776, %v2777
    %v2779 = vsel %vm1921, %v2393, -inf
    %v2780 = vrot.slane %v2779, 4
    %v2781 = vmax.f32 %v2779, %v2780
    %v2782 = vrot.slane %v2781, 2
    %v2783 = vmax.f32 %v2781, %v2782
    %v2784 = vrot.slane %v2783, 1
    %v2785 = vmax.f32 %v2783, %v2784
    %v2786 = vsel %vm1921, %v2417, -inf
    %v2787 = vrot.slane %v2786, 4
    %v2788 = vmax.f32 %v2786, %v2787
    %v2789 = vrot.slane %v2788, 2
    %v2790 = vmax.f32 %v2788, %v2789
    %v2791 = vrot.slane %v2790, 1
    %v2792 = vmax.f32 %v2790, %v2791
    %v2793 = vsel %vm1921, %v2424, -inf
    %v2794 = vrot.slane %v2793, 4
    %v2795 = vmax.f32 %v2793, %v2794
    %v2796 = vrot.slane %v2795, 2
    %v2797 = vmax.f32 %v2795, %v2796
    %v2798 = vrot.slane %v2797, 1
    %v2799 = vmax.f32 %v2797, %v2798
    %v2800 = vsel %vm1921, %v2448, -inf
    %v2801 = vrot.slane %v2800, 4
    %v2802 = vmax.f32 %v2800, %v2801
    %v2803 = vrot.slane %v2802, 2
    %v2804 = vmax.f32 %v2802, %v2803
    %v2805 = vrot.slane %v2804, 1
    %v2806 = vmax.f32 %v2804, %v2805
    %v2807 = vsel %vm1921, %v2455, -inf
    %v2808 = vrot.slane %v2807, 4
    %v2809 = vmax.f32 %v2807, %v2808
    %v2810 = vrot.slane %v2809, 2
    %v2811 = vmax.f32 %v2809, %v2810
    %v2812 = vrot.slane %v2811, 1
    %v2813 = vmax.f32 %v2811, %v2812
    %v2814 = vsel %vm1921, %v2479, -inf
    %v2815 = vrot.slane %v2814, 4
    %v2816 = vmax.f32 %v2814, %v2815
    %v2817 = vrot.slane %v2816, 2
    %v2818 = vmax.f32 %v2816, %v2817
    %v2819 = vrot.slane %v2818, 1
    %v2820 = vmax.f32 %v2818, %v2819
    %v2821 = vsel %vm1921, %v2486, -inf
    %v2822 = vrot.slane %v2821, 4
    %v2823 = vmax.f32 %v2821, %v2822
    %v2824 = vrot.slane %v2823, 2
    %v2825 = vmax.f32 %v2823, %v2824
    %v2826 = vrot.slane %v2825, 1
    %v2827 = vmax.f32 %v2825, %v2826
    %v2828 = vsel %vm1921, %v2510, -inf
    %v2829 = vrot.slane %v2828, 4
    %v2830 = vmax.f32 %v2828, %v2829
    %v2831 = vrot.slane %v2830, 2
    %v2832 = vmax.f32 %v2830, %v2831
    %v2833 = vrot.slane %v2832, 1
    %v2834 = vmax.f32 %v2832, %v2833
    %v2835 = vsel %vm1921, %v2517, -inf
    %v2836 = vrot.slane %v2835, 4
    %v2837 = vmax.f32 %v2835, %v2836
    %v2838 = vrot.slane %v2837, 2
    %v2839 = vmax.f32 %v2837, %v2838
    %v2840 = vrot.slane %v2839, 1
    %v2841 = vmax.f32 %v2839, %v2840
    %v2842 = vsel %vm1921, %v2541, -inf
    %v2843 = vrot.slane %v2842, 4
    %v2844 = vmax.f32 %v2842, %v2843
    %v2845 = vrot.slane %v2844, 2
    %v2846 = vmax.f32 %v2844, %v2845
    %v2847 = vrot.slane %v2846, 1
    %v2848 = vmax.f32 %v2846, %v2847
    %v2849 = vsel %vm1921, %v2548, -inf
    %v2850 = vrot.slane %v2849, 4
    %v2851 = vmax.f32 %v2849, %v2850
    %v2852 = vrot.slane %v2851, 2
    %v2853 = vmax.f32 %v2851, %v2852
    %v2854 = vrot.slane %v2853, 1
    %v2855 = vmax.f32 %v2853, %v2854
    %v2856 = vsel %vm1921, %v2572, -inf
    %v2857 = vrot.slane %v2856, 4
    %v2858 = vmax.f32 %v2856, %v2857
    %v2859 = vrot.slane %v2858, 2
    %v2860 = vmax.f32 %v2858, %v2859
    %v2861 = vrot.slane %v2860, 1
    %v2862 = vmax.f32 %v2860, %v2861
    %v2863 = vsel %vm1921, %v2579, -inf
    %v2864 = vrot.slane %v2863, 4
    %v2865 = vmax.f32 %v2863, %v2864
    %v2866 = vrot.slane %v2865, 2
    %v2867 = vmax.f32 %v2865, %v2866
    %v2868 = vrot.slane %v2867, 1
    %v2869 = vmax.f32 %v2867, %v2868
    %v2870 = vsel %vm1921, %v2603, -inf
    %v2871 = vrot.slane %v2870, 4
    %v2872 = vmax.f32 %v2870, %v2871
    %v2873 = vrot.slane %v2872, 2
    %v2874 = vmax.f32 %v2872, %v2873
    %v2875 = vrot.slane %v2874, 1
    %v2876 = vmax.f32 %v2874, %v2875
    %v2877 = vsel %vm1921, %v2610, -inf
    %v2878 = vrot.slane %v2877, 4
    %v2879 = vmax.f32 %v2877, %v2878
    %v2880 = vrot.slane %v2879, 2
    %v2881 = vmax.f32 %v2879, %v2880
    %v2882 = vrot.slane %v2881, 1
    %v2883 = vmax.f32 %v2881, %v2882
    %v2884 = vsel %vm1921, %v2634, -inf
    %v2885 = vrot.slane %v2884, 4
    %v2886 = vmax.f32 %v2884, %v2885
    %v2887 = vrot.slane %v2886, 2
    %v2888 = vmax.f32 %v2886, %v2887
    %v2889 = vrot.slane %v2888, 1
    %v2890 = vmax.f32 %v2888, %v2889
    %v2891 = vsel %vm1921, %v2641, -inf
    %v2892 = vrot.slane %v2891, 4
    %v2893 = vmax.f32 %v2891, %v2892
    %v2894 = vrot.slane %v2893, 2
    %v2895 = vmax.f32 %v2893, %v2894
    %v2896 = vrot.slane %v2895, 1
    %v2897 = vmax.f32 %v2895, %v2896
    %vm2930 = vcmask 1041409
    %v2931 = vsel %vm2930, %v2694, %v2680
    %vm2932 = vcmask 1042434
    %v2933 = vsel %vm2932, %v2708, %v2931
    %vm2934 = vcmask 1043459
    %v2935 = vsel %vm2934, %v2722, %v2933
    %vm2936 = vcmask 1044484
    %v2937 = vsel %vm2936, %v2736, %v2935
    %vm2938 = vcmask 1045509
    %v2939 = vsel %vm2938, %v2750, %v2937
    %vm2940 = vcmask 1046534
    %v2941 = vsel %vm2940, %v2764, %v2939
    %vm2942 = vcmask 1047559
    %v2943 = vsel %vm2942, %v2778, %v2941
    %v2944 = vsel %vm2930, %v2701, %v2687
    %v2945 = vsel %vm2932, %v2715, %v2944
    %v2946 = vsel %vm2934, %v2729, %v2945
    %v2947 = vsel %vm2936, %v2743, %v2946
    %v2948 = vsel %vm2938, %v2757, %v2947
    %v2949 = vsel %vm2940, %v2771, %v2948
    %v2950 = vsel %vm2942, %v2785, %v2949
    %v2951 = vsel %vm2930, %v2806, %v2792
    %v2952 = vsel %vm2932, %v2820, %v2951
    %v2953 = vsel %vm2934, %v2834, %v2952
    %v2954 = vsel %vm2936, %v2848, %v2953
    %v2955 = vsel %vm2938, %v2862, %v2954
    %v2956 = vsel %vm2940, %v2876, %v2955
    %v2957 = vsel %vm2942, %v2890, %v2956
    %v2958 = vsel %vm2930, %v2813, %v2799
    %v2959 = vsel %vm2932, %v2827, %v2958
    %v2960 = vsel %vm2934, %v2841, %v2959
    %v2961 = vsel %vm2936, %v2855, %v2960
    %v2962 = vsel %vm2938, %v2869, %v2961
    %v2963 = vsel %vm2940, %v2883, %v2962
    %v2964 = vsel %vm2942, %v2897, %v2963
    %2969 = vmatprep.subr.mxu0 0.0
    %2970 = vmatpush1.msra.mxu0 %v1329
    %2971 = vmatprep.subr.mxu0 0.0
    %2972 = vmatpush1.msra.mxu0 %v1330
    %2973 = vmatprep.subr.mxu0 0.0
    %2974 = vmatpush1.msra.mxu0 %v1331
    %2975 = vmatprep.subr.mxu0 0.0
    %2976 = vmatpush1.msra.mxu0 %v1332
    %2977 = vmatprep.subr.mxu0 0.0
    %2978 = vmatpush1.msra.mxu0 %v1333
    %2979 = vmatprep.subr.mxu0 0.0
    %2980 = vmatpush1.msra.mxu0 %v1334
    %2981 = vmatprep.subr.mxu0 0.0
    %2982 = vmatpush1.msra.mxu0 %v1335
    %2983 = vmatprep.subr.mxu0 0.0
    %2984 = vmatpush1.msra.mxu0 %v1336
    %2985 = vmatprep.subr.mxu0 0.0
    %2986 = vmatpush1.msra.mxu0 %v1337
    %2987 = vmatprep.subr.mxu0 0.0
    %2988 = vmatpush1.msra.mxu0 %v1338
    %2989 = vmatprep.subr.mxu0 0.0
    %2990 = vmatpush1.msra.mxu0 %v1339
    %2991 = vmatprep.subr.mxu0 0.0
    %2992 = vmatpush1.msra.mxu0 %v1340
    %2993 = vmatprep.subr.mxu0 0.0
    %2994 = vmatpush1.msra.mxu0 %v1341
    %2995 = vmatprep.subr.mxu0 0.0
    %2996 = vmatpush1.msra.mxu0 %v1342
    %2997 = vmatprep.subr.mxu0 0.0
    %2998 = vmatpush1.msra.mxu0 %v1343
    %2999 = vmatprep.subr.mxu0 0.0
    %3000 = vmatpush1.msra.mxu0 %v1344
    %3001 = vmatprep.subr.mxu0 0.0
    %3002 = vmatpush1.msra.mxu0 %v1345
    %3003 = vmatprep.subr.mxu0 0.0
    %3004 = vmatpush1.msra.mxu0 %v1346
    %3005 = vmatprep.subr.mxu0 0.0
    %3006 = vmatpush1.msra.mxu0 %v1347
    %3007 = vmatprep.subr.mxu0 0.0
    %3008 = vmatpush1.msra.mxu0 %v1348
    %3009 = vmatprep.subr.mxu0 0.0
    %3010 = vmatpush1.msra.mxu0 %v1349
    %3011 = vmatprep.subr.mxu0 0.0
    %3012 = vmatpush1.msra.mxu0 %v1350
    %3013 = vmatprep.subr.mxu0 0.0
    %3014 = vmatpush1.msra.mxu0 %v1351
    %3015 = vmatprep.subr.mxu0 0.0
    %3016 = vmatpush1.msra.mxu0 %v1352
    %3017 = vmatprep.subr.mxu0 0.0
    %3018 = vmatpush1.msra.mxu0 %v1353
    %3019 = vmatprep.subr.mxu0 0.0
    %3020 = vmatpush1.msra.mxu0 %v1354
    %3021 = vmatprep.subr.mxu0 0.0
    %3022 = vmatpush1.msra.mxu0 %v1355
    %3023 = vmatprep.subr.mxu0 0.0
    %3024 = vmatpush1.msra.mxu0 %v1356
    %3025 = vmatprep.subr.mxu0 0.0
    %3026 = vmatpush1.msra.mxu0 %v1357
    %3027 = vmatprep.subr.mxu0 0.0
    %3028 = vmatpush1.msra.mxu0 %v1358
    %3029 = vmatprep.subr.mxu0 0.0
    %3030 = vmatpush1.msra.mxu0 %v1359
    %3031 = vmatprep.subr.mxu0 0.0
    %3032 = vmatpush1.msra.mxu0 %v1360
    %3033 = vmatprep.mubr.f32.mxu0 %v2950
    %3034 = vmatmul.mubr.f32.gmra.mrb[0].mxu0 %v2943
    %v3035 = vpop.f32.mrb[0].mxu0
    %v3036 = vadd.f32 0.0, %v3035
    %v3037 = vpop.f32.mrb[0].mxu0
    %3038 = vmatprep.mubr.f32.mxu0 %v2964
    %3039 = vmatmul.mubr.f32.gmra.mrb[0].mxu0 %v2957
    %v3040 = vpop.f32.mrb[0].mxu0
    %v3041 = vadd.f32 0.0, %v3040
    %v3042 = vpop.f32.mrb[0].mxu0
    %3043 = vdwg.mxu0
    %v3076 = vsel %vm2930, %v1942, %v1928
    %v3077 = vsel %vm2932, %v1956, %v3076
    %v3078 = vsel %vm2934, %v1970, %v3077
    %v3079 = vsel %vm2936, %v1984, %v3078
    %v3080 = vsel %vm2938, %v1998, %v3079
    %v3081 = vsel %vm2940, %v2012, %v3080
    %v3082 = vsel %vm2942, %v2026, %v3081
    %v3083 = vsel %vm2930, %v1949, %v1935
    %v3084 = vsel %vm2932, %v1963, %v3083
    %v3085 = vsel %vm2934, %v1977, %v3084
    %v3086 = vsel %vm2936, %v1991, %v3085
    %v3087 = vsel %vm2938, %v2005, %v3086
    %v3088 = vsel %vm2940, %v2019, %v3087
    %v3089 = vsel %vm2942, %v2033, %v3088
    %v3090 = vsel %vm2930, %v2054, %v2040
    %v3091 = vsel %vm2932, %v2068, %v3090
    %v3092 = vsel %vm2934, %v2082, %v3091
    %v3093 = vsel %vm2936, %v2096, %v3092
    %v3094 = vsel %vm2938, %v2110, %v3093
    %v3095 = vsel %vm2940, %v2124, %v3094
    %v3096 = vsel %vm2942, %v2138, %v3095
    %v3097 = vsel %vm2930, %v2061, %v2047
    %v3098 = vsel %vm2932, %v2075, %v3097
    %v3099 = vsel %vm2934, %v2089, %v3098
    %v3100 = vsel %vm2936, %v2103, %v3099
    %v3101 = vsel %vm2938, %v2117, %v3100
    %v3102 = vsel %vm2940, %v2131, %v3101
    %v3103 = vsel %vm2942, %v2145, %v3102
    %3108 = vmatprep.subr.mxu0 0.0
    %3109 = vmatpush1.msra.mxu0 %v1297
    %3110 = vmatprep.subr.mxu0 0.0
    %3111 = vmatpush1.msra.mxu0 %v1298
    %3112 = vmatprep.subr.mxu0 0.0
    %3113 = vmatpush1.msra.mxu0 %v1299
    %3114 = vmatprep.subr.mxu0 0.0
    %3115 = vmatpush1.msra.mxu0 %v1300
    %3116 = vmatprep.subr.mxu0 0.0
    %3117 = vmatpush1.msra.mxu0 %v1301
    %3118 = vmatprep.subr.mxu0 0.0
    %3119 = vmatpush1.msra.mxu0 %v1302
    %3120 = vmatprep.subr.mxu0 0.0
    %3121 = vmatpush1.msra.mxu0 %v1303
    %3122 = vmatprep.subr.mxu0 0.0
    %3123 = vmatpush1.msra.mxu0 %v1304
    %3124 = vmatprep.subr.mxu0 0.0
    %3125 = vmatpush1.msra.mxu0 %v1305
    %3126 = vmatprep.subr.mxu0 0.0
    %3127 = vmatpush1.msra.mxu0 %v1306
    %3128 = vmatprep.subr.mxu0 0.0
    %3129 = vmatpush1.msra.mxu0 %v1307
    %3130 = vmatprep.subr.mxu0 0.0
    %3131 = vmatpush1.msra.mxu0 %v1308
    %3132 = vmatprep.subr.mxu0 0.0
    %3133 = vmatpush1.msra.mxu0 %v1309
    %3134 = vmatprep.subr.mxu0 0.0
    %3135 = vmatpush1.msra.mxu0 %v1310
    %3136 = vmatprep.subr.mxu0 0.0
    %3137 = vmatpush1.msra.mxu0 %v1311
    %3138 = vmatprep.subr.mxu0 0.0
    %3139 = vmatpush1.msra.mxu0 %v1312
    %3140 = vmatprep.subr.mxu0 0.0
    %3141 = vmatpush1.msra.mxu0 %v1313
    %3142 = vmatprep.subr.mxu0 0.0
    %3143 = vmatpush1.msra.mxu0 %v1314
    %3144 = vmatprep.subr.mxu0 0.0
    %3145 = vmatpush1.msra.mxu0 %v1315
    %3146 = vmatprep.subr.mxu0 0.0
    %3147 = vmatpush1.msra.mxu0 %v1316
    %3148 = vmatprep.subr.mxu0 0.0
    %3149 = vmatpush1.msra.mxu0 %v1317
    %3150 = vmatprep.subr.mxu0 0.0
    %3151 = vmatpush1.msra.mxu0 %v1318
    %3152 = vmatprep.subr.mxu0 0.0
    %3153 = vmatpush1.msra.mxu0 %v1319
    %3154 = vmatprep.subr.mxu0 0.0
    %3155 = vmatpush1.msra.mxu0 %v1320
    %3156 = vmatprep.subr.mxu0 0.0
    %3157 = vmatpush1.msra.mxu0 %v1321
    %3158 = vmatprep.subr.mxu0 0.0
    %3159 = vmatpush1.msra.mxu0 %v1322
    %3160 = vmatprep.subr.mxu0 0.0
    %3161 = vmatpush1.msra.mxu0 %v1323
    %3162 = vmatprep.subr.mxu0 0.0
    %3163 = vmatpush1.msra.mxu0 %v1324
    %3164 = vmatprep.subr.mxu0 0.0
    %3165 = vmatpush1.msra.mxu0 %v1325
    %3166 = vmatprep.subr.mxu0 0.0
    %3167 = vmatpush1.msra.mxu0 %v1326
    %3168 = vmatprep.subr.mxu0 0.0
    %3169 = vmatpush1.msra.mxu0 %v1327
    %3170 = vmatprep.subr.mxu0 0.0
    %3171 = vmatpush1.msra.mxu0 %v1328
    %3172 = vmatprep.mubr.f32.mxu0 %v3089
    %3173 = vmatmul.mubr.f32.gmra.mrb[0].mxu0 %v3082
    %v3174 = vpop.f32.mrb[0].mxu0
    %v3175 = vadd.f32 %v3036, %v3174
    %v3176 = vpop.f32.mrb[0].mxu0
    %3177 = vmatprep.mubr.f32.mxu0 %v3103
    %3178 = vmatmul.mubr.f32.gmra.mrb[0].mxu0 %v3096
    %v3179 = vpop.f32.mrb[0].mxu0
    %v3180 = vadd.f32 %v3041, %v3179
    %v3181 = vpop.f32.mrb[0].mxu0
    %3182 = vdwg.mxu0
    %v3183 = vcombine.low %v444, %v446
    %v3185 = vunpack.c.l.s4 1966171168
    %v3186 = vunpack.c.0.s8 %v3185
    %v3187 = vlaneseq
    %v3188 = vshrl.u32 %v3187, 7
    %v3189 = vsub.s32 %v3186, %v3188
    %v3190 = vrot.slane %v3183, %v3189
    %v3192 = vunpack.c.l.s4 1966171168
    %v3193 = vunpack.c.0.s8 %v3192
    %v3194 = vlaneseq
    %v3195 = vshrl.u32 %v3194, 7
    %v3196 = vsub.s32 %v3193, %v3195
    %v3197 = vrot.slane %v471, %v3196
    %v3198 = vcombine.low %v3190, %v3197
    %v3199 = vcombine.high %v3190, %v3197
    %v3201 = vunpack.c.l.s4 1966171168
    %v3202 = vunpack.c.0.s8 %v3201
    %v3203 = vlaneseq
    %v3204 = vshrl.u32 %v3203, 7
    %v3205 = vsub.s32 %v3202, %v3204
    %v3206 = vrot.slane %v3198, %v3205
    %v3208 = vunpack.c.l.s4 1966171168
    %v3209 = vunpack.c.0.s8 %v3208
    %v3210 = vlaneseq
    %v3211 = vshrl.u32 %v3210, 7
    %v3212 = vsub.s32 %v3209, %v3211
    %v3213 = vrot.slane %v3199, %v3212
    %v3214 = vcombine.low %v496, %v521
    %v3216 = vunpack.c.l.s4 1966171168
    %v3217 = vunpack.c.0.s8 %v3216
    %v3218 = vlaneseq
    %v3219 = vshrl.u32 %v3218, 7
    %v3220 = vsub.s32 %v3217, %v3219
    %v3221 = vrot.slane %v3214, %v3220
    %v3223 = vunpack.c.l.s4 1966171168
    %v3224 = vunpack.c.0.s8 %v3223
    %v3225 = vlaneseq
    %v3226 = vshrl.u32 %v3225, 7
    %v3227 = vsub.s32 %v3224, %v3226
    %v3228 = vrot.slane %v535, %v3227
    %v3229 = vcombine.low %v3221, %v3228
    %v3230 = vcombine.high %v3221, %v3228
    %v3232 = vunpack.c.l.s4 1966171168
    %v3233 = vunpack.c.0.s8 %v3232
    %v3234 = vlaneseq
    %v3235 = vshrl.u32 %v3234, 7
    %v3236 = vsub.s32 %v3233, %v3235
    %v3237 = vrot.slane %v3229, %v3236
    %v3239 = vunpack.c.l.s4 1966171168
    %v3240 = vunpack.c.0.s8 %v3239
    %v3241 = vlaneseq
    %v3242 = vshrl.u32 %v3241, 7
    %v3243 = vsub.s32 %v3240, %v3242
    %v3244 = vrot.slane %v3230, %v3243
    %v3245 = vcombine.low %v571, %v585
    %v3247 = vunpack.c.l.s4 1966171168
    %v3248 = vunpack.c.0.s8 %v3247
    %v3249 = vlaneseq
    %v3250 = vshrl.u32 %v3249, 7
    %v3251 = vsub.s32 %v3248, %v3250
    %v3252 = vrot.slane %v3245, %v3251
    %v3254 = vunpack.c.l.s4 1966171168
    %v3255 = vunpack.c.0.s8 %v3254
    %v3256 = vlaneseq
    %v3257 = vshrl.u32 %v3256, 7
    %v3258 = vsub.s32 %v3255, %v3257
    %v3259 = vrot.slane %v593, %v3258
    %v3260 = vcombine.low %v3252, %v3259
    %v3261 = vcombine.high %v3252, %v3259
    %v3263 = vunpack.c.l.s4 1966171168
    %v3264 = vunpack.c.0.s8 %v3263
    %v3265 = vlaneseq
    %v3266 = vshrl.u32 %v3265, 7
    %v3267 = vsub.s32 %v3264, %v3266
    %v3268 = vrot.slane %v3260, %v3267
    %v3270 = vunpack.c.l.s4 1966171168
    %v3271 = vunpack.c.0.s8 %v3270
    %v3272 = vlaneseq
    %v3273 = vshrl.u32 %v3272, 7
    %v3274 = vsub.s32 %v3271, %v3273
    %v3275 = vrot.slane %v3261, %v3274
    %v3276 = vcombine.low %v635, %v643
    %v3278 = vunpack.c.l.s4 1966171168
    %v3279 = vunpack.c.0.s8 %v3278
    %v3280 = vlaneseq
    %v3281 = vshrl.u32 %v3280, 7
    %v3282 = vsub.s32 %v3279, %v3281
    %v3283 = vrot.slane %v3276, %v3282
    %v3285 = vunpack.c.l.s4 1966171168
    %v3286 = vunpack.c.0.s8 %v3285
    %v3287 = vlaneseq
    %v3288 = vshrl.u32 %v3287, 7
    %v3289 = vsub.s32 %v3286, %v3288
    %v3290 = vrot.slane %v645, %v3289
    %v3291 = vcombine.low %v3283, %v3290
    %v3292 = vcombine.high %v3283, %v3290
    %v3294 = vunpack.c.l.s4 1966171168
    %v3295 = vunpack.c.0.s8 %v3294
    %v3296 = vlaneseq
    %v3297 = vshrl.u32 %v3296, 7
    %v3298 = vsub.s32 %v3295, %v3297
    %v3299 = vrot.slane %v3291, %v3298
    %v3301 = vunpack.c.l.s4 1966171168
    %v3302 = vunpack.c.0.s8 %v3301
    %v3303 = vlaneseq
    %v3304 = vshrl.u32 %v3303, 7
    %v3305 = vsub.s32 %v3302, %v3304
    %v3306 = vrot.slane %v3292, %v3305
    %v3307 = vcombine.low %v693, %v695
    %v3309 = vunpack.c.l.s4 1966171168
    %v3310 = vunpack.c.0.s8 %v3309
    %v3311 = vlaneseq
    %v3312 = vshrl.u32 %v3311, 7
    %v3313 = vsub.s32 %v3310, %v3312
    %v3314 = vrot.slane %v3307, %v3313
    %v3316 = vunpack.c.l.s4 1966171168
    %v3317 = vunpack.c.0.s8 %v3316
    %v3318 = vlaneseq
    %v3319 = vshrl.u32 %v3318, 7
    %v3320 = vsub.s32 %v3317, %v3319
    %v3321 = vrot.slane %v678, %v3320
    %v3322 = vcombine.low %v3314, %v3321
    %v3323 = vcombine.high %v3314, %v3321
    %v3325 = vunpack.c.l.s4 1966171168
    %v3326 = vunpack.c.0.s8 %v3325
    %v3327 = vlaneseq
    %v3328 = vshrl.u32 %v3327, 7
    %v3329 = vsub.s32 %v3326, %v3328
    %v3330 = vrot.slane %v3322, %v3329
    %v3332 = vunpack.c.l.s4 1966171168
    %v3333 = vunpack.c.0.s8 %v3332
    %v3334 = vlaneseq
    %v3335 = vshrl.u32 %v3334, 7
    %v3336 = vsub.s32 %v3333, %v3335
    %v3337 = vrot.slane %v3323, %v3336
    %v3338 = vcombine.low %v745, %v728
    %v3340 = vunpack.c.l.s4 1966171168
    %v3341 = vunpack.c.0.s8 %v3340
    %v3342 = vlaneseq
    %v3343 = vshrl.u32 %v3342, 7
    %v3344 = vsub.s32 %v3341, %v3343
    %v3345 = vrot.slane %v3338, %v3344
    %v3347 = vunpack.c.l.s4 1966171168
    %v3348 = vunpack.c.0.s8 %v3347
    %v3349 = vlaneseq
    %v3350 = vshrl.u32 %v3349, 7
    %v3351 = vsub.s32 %v3348, %v3350
    %v3352 = vrot.slane %v742, %v3351
    %v3353 = vcombine.low %v3345, %v3352
    %v3354 = vcombine.high %v3345, %v3352
    %v3356 = vunpack.c.l.s4 1966171168
    %v3357 = vunpack.c.0.s8 %v3356
    %v3358 = vlaneseq
    %v3359 = vshrl.u32 %v3358, 7
    %v3360 = vsub.s32 %v3357, %v3359
    %v3361 = vrot.slane %v3353, %v3360
    %v3363 = vunpack.c.l.s4 1966171168
    %v3364 = vunpack.c.0.s8 %v3363
    %v3365 = vlaneseq
    %v3366 = vshrl.u32 %v3365, 7
    %v3367 = vsub.s32 %v3364, %v3366
    %v3368 = vrot.slane %v3354, %v3367
    %v3369 = vcombine.low %v778, %v792
    %v3371 = vunpack.c.l.s4 1966171168
    %v3372 = vunpack.c.0.s8 %v3371
    %v3373 = vlaneseq
    %v3374 = vshrl.u32 %v3373, 7
    %v3375 = vsub.s32 %v3372, %v3374
    %v3376 = vrot.slane %v3369, %v3375
    %v3378 = vunpack.c.l.s4 1966171168
    %v3379 = vunpack.c.0.s8 %v3378
    %v3380 = vlaneseq
    %v3381 = vshrl.u32 %v3380, 7
    %v3382 = vsub.s32 %v3379, %v3381
    %v3383 = vrot.slane %v794, %v3382
    %v3384 = vcombine.low %v3376, %v3383
    %v3385 = vcombine.high %v3376, %v3383
    %v3387 = vunpack.c.l.s4 1966171168
    %v3388 = vunpack.c.0.s8 %v3387
    %v3389 = vlaneseq
    %v3390 = vshrl.u32 %v3389, 7
    %v3391 = vsub.s32 %v3388, %v3390
    %v3392 = vrot.slane %v3384, %v3391
    %v3394 = vunpack.c.l.s4 1966171168
    %v3395 = vunpack.c.0.s8 %v3394
    %v3396 = vlaneseq
    %v3397 = vshrl.u32 %v3396, 7
    %v3398 = vsub.s32 %v3395, %v3397
    %v3399 = vrot.slane %v3385, %v3398
    %v3400 = vcombine.low %v842, %v844
    %v3402 = vunpack.c.l.s4 1966171168
    %v3403 = vunpack.c.0.s8 %v3402
    %v3404 = vlaneseq
    %v3405 = vshrl.u32 %v3404, 7
    %v3406 = vsub.s32 %v3403, %v3405
    %v3407 = vrot.slane %v3400, %v3406
    %v3409 = vunpack.c.l.s4 1966171168
    %v3410 = vunpack.c.0.s8 %v3409
    %v3411 = vlaneseq
    %v3412 = vshrl.u32 %v3411, 7
    %v3413 = vsub.s32 %v3410, %v3412
    %v3414 = vrot.slane %v846, %v3413
    %v3415 = vcombine.low %v3407, %v3414
    %v3416 = vcombine.high %v3407, %v3414
    %v3418 = vunpack.c.l.s4 1966171168
    %v3419 = vunpack.c.0.s8 %v3418
    %v3420 = vlaneseq
    %v3421 = vshrl.u32 %v3420, 7
    %v3422 = vsub.s32 %v3419, %v3421
    %v3423 = vrot.slane %v3415, %v3422
    %v3425 = vunpack.c.l.s4 1966171168
    %v3426 = vunpack.c.0.s8 %v3425
    %v3427 = vlaneseq
    %v3428 = vshrl.u32 %v3427, 7
    %v3429 = vsub.s32 %v3426, %v3428
    %v3430 = vrot.slane %v3416, %v3429
    %v3431 = vcombine.low %v894, %v896
    %v3433 = vunpack.c.l.s4 1966171168
    %v3434 = vunpack.c.0.s8 %v3433
    %v3435 = vlaneseq
    %v3436 = vshrl.u32 %v3435, 7
    %v3437 = vsub.s32 %v3434, %v3436
    %v3438 = vrot.slane %v3431, %v3437
    %v3440 = vunpack.c.l.s4 1966171168
    %v3441 = vunpack.c.0.s8 %v3440
    %v3442 = vlaneseq
    %v3443 = vshrl.u32 %v3442, 7
    %v3444 = vsub.s32 %v3441, %v3443
    %v3445 = vrot.slane %v921, %v3444
    %v3446 = vcombine.low %v3438, %v3445
    %v3447 = vcombine.high %v3438, %v3445
    %v3449 = vunpack.c.l.s4 1966171168
    %v3450 = vunpack.c.0.s8 %v3449
    %v3451 = vlaneseq
    %v3452 = vshrl.u32 %v3451, 7
    %v3453 = vsub.s32 %v3450, %v3452
    %v3454 = vrot.slane %v3446, %v3453
    %v3456 = vunpack.c.l.s4 1966171168
    %v3457 = vunpack.c.0.s8 %v3456
    %v3458 = vlaneseq
    %v3459 = vshrl.u32 %v3458, 7
    %v3460 = vsub.s32 %v3457, %v3459
    %v3461 = vrot.slane %v3447, %v3460
    %v3462 = vcombine.low %v946, %v971
    %v3464 = vunpack.c.l.s4 1966171168
    %v3465 = vunpack.c.0.s8 %v3464
    %v3466 = vlaneseq
    %v3467 = vshrl.u32 %v3466, 7
    %v3468 = vsub.s32 %v3465, %v3467
    %v3469 = vrot.slane %v3462, %v3468
    %v3471 = vunpack.c.l.s4 1966171168
    %v3472 = vunpack.c.0.s8 %v3471
    %v3473 = vlaneseq
    %v3474 = vshrl.u32 %v3473, 7
    %v3475 = vsub.s32 %v3472, %v3474
    %v3476 = vrot.slane %v985, %v3475
    %v3477 = vcombine.low %v3469, %v3476
    %v3478 = vcombine.high %v3469, %v3476
    %v3480 = vunpack.c.l.s4 1966171168
    %v3481 = vunpack.c.0.s8 %v3480
    %v3482 = vlaneseq
    %v3483 = vshrl.u32 %v3482, 7
    %v3484 = vsub.s32 %v3481, %v3483
    %v3485 = vrot.slane %v3477, %v3484
    %v3487 = vunpack.c.l.s4 1966171168
    %v3488 = vunpack.c.0.s8 %v3487
    %v3489 = vlaneseq
    %v3490 = vshrl.u32 %v3489, 7
    %v3491 = vsub.s32 %v3488, %v3490
    %v3492 = vrot.slane %v3478, %v3491
    %v3493 = vcombine.low %v1021, %v1035
    %v3495 = vunpack.c.l.s4 1966171168
    %v3496 = vunpack.c.0.s8 %v3495
    %v3497 = vlaneseq
    %v3498 = vshrl.u32 %v3497, 7
    %v3499 = vsub.s32 %v3496, %v3498
    %v3500 = vrot.slane %v3493, %v3499
    %v3502 = vunpack.c.l.s4 1966171168
    %v3503 = vunpack.c.0.s8 %v3502
    %v3504 = vlaneseq
    %v3505 = vshrl.u32 %v3504, 7
    %v3506 = vsub.s32 %v3503, %v3505
    %v3507 = vrot.slane %v1043, %v3506
    %v3508 = vcombine.low %v3500, %v3507
    %v3509 = vcombine.high %v3500, %v3507
    %v3511 = vunpack.c.l.s4 1966171168
    %v3512 = vunpack.c.0.s8 %v3511
    %v3513 = vlaneseq
    %v3514 = vshrl.u32 %v3513, 7
    %v3515 = vsub.s32 %v3512, %v3514
    %v3516 = vrot.slane %v3508, %v3515
    %v3518 = vunpack.c.l.s4 1966171168
    %v3519 = vunpack.c.0.s8 %v3518
    %v3520 = vlaneseq
    %v3521 = vshrl.u32 %v3520, 7
    %v3522 = vsub.s32 %v3519, %v3521
    %v3523 = vrot.slane %v3509, %v3522
    %v3524 = vcombine.low %v1085, %v1093
    %v3526 = vunpack.c.l.s4 1966171168
    %v3527 = vunpack.c.0.s8 %v3526
    %v3528 = vlaneseq
    %v3529 = vshrl.u32 %v3528, 7
    %v3530 = vsub.s32 %v3527, %v3529
    %v3531 = vrot.slane %v3524, %v3530
    %v3533 = vunpack.c.l.s4 1966171168
    %v3534 = vunpack.c.0.s8 %v3533
    %v3535 = vlaneseq
    %v3536 = vshrl.u32 %v3535, 7
    %v3537 = vsub.s32 %v3534, %v3536
    %v3538 = vrot.slane %v1095, %v3537
    %v3539 = vcombine.low %v3531, %v3538
    %v3540 = vcombine.high %v3531, %v3538
    %v3542 = vunpack.c.l.s4 1966171168
    %v3543 = vunpack.c.0.s8 %v3542
    %v3544 = vlaneseq
    %v3545 = vshrl.u32 %v3544, 7
    %v3546 = vsub.s32 %v3543, %v3545
    %v3547 = vrot.slane %v3539, %v3546
    %v3549 = vunpack.c.l.s4 1966171168
    %v3550 = vunpack.c.0.s8 %v3549
    %v3551 = vlaneseq
    %v3552 = vshrl.u32 %v3551, 7
    %v3553 = vsub.s32 %v3550, %v3552
    %v3554 = vrot.slane %v3540, %v3553
    %v3555 = vcombine.low %v1143, %v1145
    %v3557 = vunpack.c.l.s4 1966171168
    %v3558 = vunpack.c.0.s8 %v3557
    %v3559 = vlaneseq
    %v3560 = vshrl.u32 %v3559, 7
    %v3561 = vsub.s32 %v3558, %v3560
    %v3562 = vrot.slane %v3555, %v3561
    %v3564 = vunpack.c.l.s4 1966171168
    %v3565 = vunpack.c.0.s8 %v3564
    %v3566 = vlaneseq
    %v3567 = vshrl.u32 %v3566, 7
    %v3568 = vsub.s32 %v3565, %v3567
    %v3569 = vrot.slane %v1128, %v3568
    %v3570 = vcombine.low %v3562, %v3569
    %v3571 = vcombine.high %v3562, %v3569
    %v3573 = vunpack.c.l.s4 1966171168
    %v3574 = vunpack.c.0.s8 %v3573
    %v3575 = vlaneseq
    %v3576 = vshrl.u32 %v3575, 7
    %v3577 = vsub.s32 %v3574, %v3576
    %v3578 = vrot.slane %v3570, %v3577
    %v3580 = vunpack.c.l.s4 1966171168
    %v3581 = vunpack.c.0.s8 %v3580
    %v3582 = vlaneseq
    %v3583 = vshrl.u32 %v3582, 7
    %v3584 = vsub.s32 %v3581, %v3583
    %v3585 = vrot.slane %v3571, %v3584
    %v3586 = vcombine.low %v1195, %v1178
    %v3588 = vunpack.c.l.s4 1966171168
    %v3589 = vunpack.c.0.s8 %v3588
    %v3590 = vlaneseq
    %v3591 = vshrl.u32 %v3590, 7
    %v3592 = vsub.s32 %v3589, %v3591
    %v3593 = vrot.slane %v3586, %v3592
    %v3595 = vunpack.c.l.s4 1966171168
    %v3596 = vunpack.c.0.s8 %v3595
    %v3597 = vlaneseq
    %v3598 = vshrl.u32 %v3597, 7
    %v3599 = vsub.s32 %v3596, %v3598
    %v3600 = vrot.slane %v1192, %v3599
    %v3601 = vcombine.low %v3593, %v3600
    %v3602 = vcombine.high %v3593, %v3600
    %v3604 = vunpack.c.l.s4 1966171168
    %v3605 = vunpack.c.0.s8 %v3604
    %v3606 = vlaneseq
    %v3607 = vshrl.u32 %v3606, 7
    %v3608 = vsub.s32 %v3605, %v3607
    %v3609 = vrot.slane %v3601, %v3608
    %v3611 = vunpack.c.l.s4 1966171168
    %v3612 = vunpack.c.0.s8 %v3611
    %v3613 = vlaneseq
    %v3614 = vshrl.u32 %v3613, 7
    %v3615 = vsub.s32 %v3612, %v3614
    %v3616 = vrot.slane %v3602, %v3615
    %v3617 = vcombine.low %v1228, %v1242
    %v3619 = vunpack.c.l.s4 1966171168
    %v3620 = vunpack.c.0.s8 %v3619
    %v3621 = vlaneseq
    %v3622 = vshrl.u32 %v3621, 7
    %v3623 = vsub.s32 %v3620, %v3622
    %v3624 = vrot.slane %v3617, %v3623
    %v3626 = vunpack.c.l.s4 1966171168
    %v3627 = vunpack.c.0.s8 %v3626
    %v3628 = vlaneseq
    %v3629 = vshrl.u32 %v3628, 7
    %v3630 = vsub.s32 %v3627, %v3629
    %v3631 = vrot.slane %v1244, %v3630
    %v3632 = vcombine.low %v3624, %v3631
    %v3633 = vcombine.high %v3624, %v3631
    %v3635 = vunpack.c.l.s4 1966171168
    %v3636 = vunpack.c.0.s8 %v3635
    %v3637 = vlaneseq
    %v3638 = vshrl.u32 %v3637, 7
    %v3639 = vsub.s32 %v3636, %v3638
    %v3640 = vrot.slane %v3632, %v3639
    %v3642 = vunpack.c.l.s4 1966171168
    %v3643 = vunpack.c.0.s8 %v3642
    %v3644 = vlaneseq
    %v3645 = vshrl.u32 %v3644, 7
    %v3646 = vsub.s32 %v3643, %v3645
    %v3647 = vrot.slane %v3633, %v3646
    %v3648 = vcombine.low %v1292, %v1294
    %v3650 = vunpack.c.l.s4 1966171168
    %v3651 = vunpack.c.0.s8 %v3650
    %v3652 = vlaneseq
    %v3653 = vshrl.u32 %v3652, 7
    %v3654 = vsub.s32 %v3651, %v3653
    %v3655 = vrot.slane %v3648, %v3654
    %v3657 = vunpack.c.l.s4 1966171168
    %v3658 = vunpack.c.0.s8 %v3657
    %v3659 = vlaneseq
    %v3660 = vshrl.u32 %v3659, 7
    %v3661 = vsub.s32 %v3658, %v3660
    %v3662 = vrot.slane %v1296, %v3661
    %v3663 = vcombine.low %v3655, %v3662
    %v3664 = vcombine.high %v3655, %v3662
    %v3666 = vunpack.c.l.s4 1966171168
    %v3667 = vunpack.c.0.s8 %v3666
    %v3668 = vlaneseq
    %v3669 = vshrl.u32 %v3668, 7
    %v3670 = vsub.s32 %v3667, %v3669
    %v3671 = vrot.slane %v3663, %v3670
    %v3673 = vunpack.c.l.s4 1966171168
    %v3674 = vunpack.c.0.s8 %v3673
    %v3675 = vlaneseq
    %v3676 = vshrl.u32 %v3675, 7
    %v3677 = vsub.s32 %v3674, %v3676
    %v3678 = vrot.slane %v3664, %v3677
    %v3711 = vsel %vm1921, %v3206, -inf
    %v3712 = vrot.slane %v3711, 4
    %v3713 = vmax.f32 %v3711, %v3712
    %v3714 = vrot.slane %v3713, 2
    %v3715 = vmax.f32 %v3713, %v3714
    %v3716 = vrot.slane %v3715, 1
    %v3717 = vmax.f32 %v3715, %v3716
    %v3718 = vsel %vm1921, %v3213, -inf
    %v3719 = vrot.slane %v3718, 4
    %v3720 = vmax.f32 %v3718, %v3719
    %v3721 = vrot.slane %v3720, 2
    %v3722 = vmax.f32 %v3720, %v3721
    %v3723 = vrot.slane %v3722, 1
    %v3724 = vmax.f32 %v3722, %v3723
    %v3725 = vsel %vm1921, %v3237, -inf
    %v3726 = vrot.slane %v3725, 4
    %v3727 = vmax.f32 %v3725, %v3726
    %v3728 = vrot.slane %v3727, 2
    %v3729 = vmax.f32 %v3727, %v3728
    %v3730 = vrot.slane %v3729, 1
    %v3731 = vmax.f32 %v3729, %v3730
    %v3732 = vsel %vm1921, %v3244, -inf
    %v3733 = vrot.slane %v3732, 4
    %v3734 = vmax.f32 %v3732, %v3733
    %v3735 = vrot.slane %v3734, 2
    %v3736 = vmax.f32 %v3734, %v3735
    %v3737 = vrot.slane %v3736, 1
    %v3738 = vmax.f32 %v3736, %v3737
    %v3739 = vsel %vm1921, %v3268, -inf
    %v3740 = vrot.slane %v3739, 4
    %v3741 = vmax.f32 %v3739, %v3740
    %v3742 = vrot.slane %v3741, 2
    %v3743 = vmax.f32 %v3741, %v3742
    %v3744 = vrot.slane %v3743, 1
    %v3745 = vmax.f32 %v3743, %v3744
    %v3746 = vsel %vm1921, %v3275, -inf
    %v3747 = vrot.slane %v3746, 4
    %v3748 = vmax.f32 %v3746, %v3747
    %v3749 = vrot.slane %v3748, 2
    %v3750 = vmax.f32 %v3748, %v3749
    %v3751 = vrot.slane %v3750, 1
    %v3752 = vmax.f32 %v3750, %v3751
    %v3753 = vsel %vm1921, %v3299, -inf
    %v3754 = vrot.slane %v3753, 4
    %v3755 = vmax.f32 %v3753, %v3754
    %v3756 = vrot.slane %v3755, 2
    %v3757 = vmax.f32 %v3755, %v3756
    %v3758 = vrot.slane %v3757, 1
    %v3759 = vmax.f32 %v3757, %v3758
    %v3760 = vsel %vm1921, %v3306, -inf
    %v3761 = vrot.slane %v3760, 4
    %v3762 = vmax.f32 %v3760, %v3761
    %v3763 = vrot.slane %v3762, 2
    %v3764 = vmax.f32 %v3762, %v3763
    %v3765 = vrot.slane %v3764, 1
    %v3766 = vmax.f32 %v3764, %v3765
    %v3767 = vsel %vm1921, %v3330, -inf
    %v3768 = vrot.slane %v3767, 4
    %v3769 = vmax.f32 %v3767, %v3768
    %v3770 = vrot.slane %v3769, 2
    %v3771 = vmax.f32 %v3769, %v3770
    %v3772 = vrot.slane %v3771, 1
    %v3773 = vmax.f32 %v3771, %v3772
    %v3774 = vsel %vm1921, %v3337, -inf
    %v3775 = vrot.slane %v3774, 4
    %v3776 = vmax.f32 %v3774, %v3775
    %v3777 = vrot.slane %v3776, 2
    %v3778 = vmax.f32 %v3776, %v3777
    %v3779 = vrot.slane %v3778, 1
    %v3780 = vmax.f32 %v3778, %v3779
    %v3781 = vsel %vm1921, %v3361, -inf
    %v3782 = vrot.slane %v3781, 4
    %v3783 = vmax.f32 %v3781, %v3782
    %v3784 = vrot.slane %v3783, 2
    %v3785 = vmax.f32 %v3783, %v3784
    %v3786 = vrot.slane %v3785, 1
    %v3787 = vmax.f32 %v3785, %v3786
    %v3788 = vsel %vm1921, %v3368, -inf
    %v3789 = vrot.slane %v3788, 4
    %v3790 = vmax.f32 %v3788, %v3789
    %v3791 = vrot.slane %v3790, 2
    %v3792 = vmax.f32 %v3790, %v3791
    %v3793 = vrot.slane %v3792, 1
    %v3794 = vmax.f32 %v3792, %v3793
    %v3795 = vsel %vm1921, %v3392, -inf
    %v3796 = vrot.slane %v3795, 4
    %v3797 = vmax.f32 %v3795, %v3796
    %v3798 = vrot.slane %v3797, 2
    %v3799 = vmax.f32 %v3797, %v3798
    %v3800 = vrot.slane %v3799, 1
    %v3801 = vmax.f32 %v3799, %v3800
    %v3802 = vsel %vm1921, %v3399, -inf
    %v3803 = vrot.slane %v3802, 4
    %v3804 = vmax.f32 %v3802, %v3803
    %v3805 = vrot.slane %v3804, 2
    %v3806 = vmax.f32 %v3804, %v3805
    %v3807 = vrot.slane %v3806, 1
    %v3808 = vmax.f32 %v3806, %v3807
    %v3809 = vsel %vm1921, %v3423, -inf
    %v3810 = vrot.slane %v3809, 4
    %v3811 = vmax.f32 %v3809, %v3810
    %v3812 = vrot.slane %v3811, 2
    %v3813 = vmax.f32 %v3811, %v3812
    %v3814 = vrot.slane %v3813, 1
    %v3815 = vmax.f32 %v3813, %v3814
    %v3816 = vsel %vm1921, %v3430, -inf
    %v3817 = vrot.slane %v3816, 4
    %v3818 = vmax.f32 %v3816, %v3817
    %v3819 = vrot.slane %v3818, 2
    %v3820 = vmax.f32 %v3818, %v3819
    %v3821 = vrot.slane %v3820, 1
    %v3822 = vmax.f32 %v3820, %v3821
    %v3823 = vsel %vm1921, %v3454, -inf
    %v3824 = vrot.slane %v3823, 4
    %v3825 = vmax.f32 %v3823, %v3824
    %v3826 = vrot.slane %v3825, 2
    %v3827 = vmax.f32 %v3825, %v3826
    %v3828 = vrot.slane %v3827, 1
    %v3829 = vmax.f32 %v3827, %v3828
    %v3830 = vsel %vm1921, %v3461, -inf
    %v3831 = vrot.slane %v3830, 4
    %v3832 = vmax.f32 %v3830, %v3831
    %v3833 = vrot.slane %v3832, 2
    %v3834 = vmax.f32 %v3832, %v3833
    %v3835 = vrot.slane %v3834, 1
    %v3836 = vmax.f32 %v3834, %v3835
    %v3837 = vsel %vm1921, %v3485, -inf
    %v3838 = vrot.slane %v3837, 4
    %v3839 = vmax.f32 %v3837, %v3838
    %v3840 = vrot.slane %v3839, 2
    %v3841 = vmax.f32 %v3839, %v3840
    %v3842 = vrot.slane %v3841, 1
    %v3843 = vmax.f32 %v3841, %v3842
    %v3844 = vsel %vm1921, %v3492, -inf
    %v3845 = vrot.slane %v3844, 4
    %v3846 = vmax.f32 %v3844, %v3845
    %v3847 = vrot.slane %v3846, 2
    %v3848 = vmax.f32 %v3846, %v3847
    %v3849 = vrot.slane %v3848, 1
    %v3850 = vmax.f32 %v3848, %v3849
    %v3851 = vsel %vm1921, %v3516, -inf
    %v3852 = vrot.slane %v3851, 4
    %v3853 = vmax.f32 %v3851, %v3852
    %v3854 = vrot.slane %v3853, 2
    %v3855 = vmax.f32 %v3853, %v3854
    %v3856 = vrot.slane %v3855, 1
    %v3857 = vmax.f32 %v3855, %v3856
    %v3858 = vsel %vm1921, %v3523, -inf
    %v3859 = vrot.slane %v3858, 4
    %v3860 = vmax.f32 %v3858, %v3859
    %v3861 = vrot.slane %v3860, 2
    %v3862 = vmax.f32 %v3860, %v3861
    %v3863 = vrot.slane %v3862, 1
    %v3864 = vmax.f32 %v3862, %v3863
    %v3865 = vsel %vm1921, %v3547, -inf
    %v3866 = vrot.slane %v3865, 4
    %v3867 = vmax.f32 %v3865, %v3866
    %v3868 = vrot.slane %v3867, 2
    %v3869 = vmax.f32 %v3867, %v3868
    %v3870 = vrot.slane %v3869, 1
    %v3871 = vmax.f32 %v3869, %v3870
    %v3872 = vsel %vm1921, %v3554, -inf
    %v3873 = vrot.slane %v3872, 4
    %v3874 = vmax.f32 %v3872, %v3873
    %v3875 = vrot.slane %v3874, 2
    %v3876 = vmax.f32 %v3874, %v3875
    %v3877 = vrot.slane %v3876, 1
    %v3878 = vmax.f32 %v3876, %v3877
    %v3879 = vsel %vm1921, %v3578, -inf
    %v3880 = vrot.slane %v3879, 4
    %v3881 = vmax.f32 %v3879, %v3880
    %v3882 = vrot.slane %v3881, 2
    %v3883 = vmax.f32 %v3881, %v3882
    %v3884 = vrot.slane %v3883, 1
    %v3885 = vmax.f32 %v3883, %v3884
    %v3886 = vsel %vm1921, %v3585, -inf
    %v3887 = vrot.slane %v3886, 4
    %v3888 = vmax.f32 %v3886, %v3887
    %v3889 = vrot.slane %v3888, 2
    %v3890 = vmax.f32 %v3888, %v3889
    %v3891 = vrot.slane %v3890, 1
    %v3892 = vmax.f32 %v3890, %v3891
    %v3893 = vsel %vm1921, %v3609, -inf
    %v3894 = vrot.slane %v3893, 4
    %v3895 = vmax.f32 %v3893, %v3894
    %v3896 = vrot.slane %v3895, 2
    %v3897 = vmax.f32 %v3895, %v3896
    %v3898 = vrot.slane %v3897, 1
    %v3899 = vmax.f32 %v3897, %v3898
    %v3900 = vsel %vm1921, %v3616, -inf
    %v3901 = vrot.slane %v3900, 4
    %v3902 = vmax.f32 %v3900, %v3901
    %v3903 = vrot.slane %v3902, 2
    %v3904 = vmax.f32 %v3902, %v3903
    %v3905 = vrot.slane %v3904, 1
    %v3906 = vmax.f32 %v3904, %v3905
    %v3907 = vsel %vm1921, %v3640, -inf
    %v3908 = vrot.slane %v3907, 4
    %v3909 = vmax.f32 %v3907, %v3908
    %v3910 = vrot.slane %v3909, 2
    %v3911 = vmax.f32 %v3909, %v3910
    %v3912 = vrot.slane %v3911, 1
    %v3913 = vmax.f32 %v3911, %v3912
    %v3914 = vsel %vm1921, %v3647, -inf
    %v3915 = vrot.slane %v3914, 4
    %v3916 = vmax.f32 %v3914, %v3915
    %v3917 = vrot.slane %v3916, 2
    %v3918 = vmax.f32 %v3916, %v3917
    %v3919 = vrot.slane %v3918, 1
    %v3920 = vmax.f32 %v3918, %v3919
    %v3921 = vsel %vm1921, %v3671, -inf
    %v3922 = vrot.slane %v3921, 4
    %v3923 = vmax.f32 %v3921, %v3922
    %v3924 = vrot.slane %v3923, 2
    %v3925 = vmax.f32 %v3923, %v3924
    %v3926 = vrot.slane %v3925, 1
    %v3927 = vmax.f32 %v3925, %v3926
    %v3928 = vsel %vm1921, %v3678, -inf
    %v3929 = vrot.slane %v3928, 4
    %v3930 = vmax.f32 %v3928, %v3929
    %v3931 = vrot.slane %v3930, 2
    %v3932 = vmax.f32 %v3930, %v3931
    %v3933 = vrot.slane %v3932, 1
    %v3934 = vmax.f32 %v3932, %v3933
    %v3967 = vsel %vm2930, %v3731, %v3717
    %v3968 = vsel %vm2932, %v3745, %v3967
    %v3969 = vsel %vm2934, %v3759, %v3968
    %v3970 = vsel %vm2936, %v3773, %v3969
    %v3971 = vsel %vm2938, %v3787, %v3970
    %v3972 = vsel %vm2940, %v3801, %v3971
    %v3973 = vsel %vm2942, %v3815, %v3972
    %v3974 = vsel %vm2930, %v3738, %v3724
    %v3975 = vsel %vm2932, %v3752, %v3974
    %v3976 = vsel %vm2934, %v3766, %v3975
    %v3977 = vsel %vm2936, %v3780, %v3976
    %v3978 = vsel %vm2938, %v3794, %v3977
    %v3979 = vsel %vm2940, %v3808, %v3978
    %v3980 = vsel %vm2942, %v3822, %v3979
    %v3981 = vsel %vm2930, %v3843, %v3829
    %v3982 = vsel %vm2932, %v3857, %v3981
    %v3983 = vsel %vm2934, %v3871, %v3982
    %v3984 = vsel %vm2936, %v3885, %v3983
    %v3985 = vsel %vm2938, %v3899, %v3984
    %v3986 = vsel %vm2940, %v3913, %v3985
    %v3987 = vsel %vm2942, %v3927, %v3986
    %v3988 = vsel %vm2930, %v3850, %v3836
    %v3989 = vsel %vm2932, %v3864, %v3988
    %v3990 = vsel %vm2934, %v3878, %v3989
    %v3991 = vsel %vm2936, %v3892, %v3990
    %v3992 = vsel %vm2938, %v3906, %v3991
    %v3993 = vsel %vm2940, %v3920, %v3992
    %v3994 = vsel %vm2942, %v3934, %v3993
    %3999 = vmatprep.subr.mxu0 0.0
    %4000 = vmatpush1.msra.mxu0 %v1361
    %4001 = vmatprep.subr.mxu0 0.0
    %4002 = vmatpush1.msra.mxu0 %v1362
    %4003 = vmatprep.subr.mxu0 0.0
    %4004 = vmatpush1.msra.mxu0 %v1363
    %4005 = vmatprep.subr.mxu0 0.0
    %4006 = vmatpush1.msra.mxu0 %v1364
    %4007 = vmatprep.subr.mxu0 0.0
    %4008 = vmatpush1.msra.mxu0 %v1365
    %4009 = vmatprep.subr.mxu0 0.0
    %4010 = vmatpush1.msra.mxu0 %v1366
    %4011 = vmatprep.subr.mxu0 0.0
    %4012 = vmatpush1.msra.mxu0 %v1367
    %4013 = vmatprep.subr.mxu0 0.0
    %4014 = vmatpush1.msra.mxu0 %v1368
    %4015 = vmatprep.subr.mxu0 0.0
    %4016 = vmatpush1.msra.mxu0 %v1369
    %4017 = vmatprep.subr.mxu0 0.0
    %4018 = vmatpush1.msra.mxu0 %v1370
    %4019 = vmatprep.subr.mxu0 0.0
    %4020 = vmatpush1.msra.mxu0 %v1371
    %4021 = vmatprep.subr.mxu0 0.0
    %4022 = vmatpush1.msra.mxu0 %v1372
    %4023 = vmatprep.subr.mxu0 0.0
    %4024 = vmatpush1.msra.mxu0 %v1373
    %4025 = vmatprep.subr.mxu0 0.0
    %4026 = vmatpush1.msra.mxu0 %v1374
    %4027 = vmatprep.subr.mxu0 0.0
    %4028 = vmatpush1.msra.mxu0 %v1375
    %4029 = vmatprep.subr.mxu0 0.0
    %4030 = vmatpush1.msra.mxu0 %v1376
    %4031 = vmatprep.subr.mxu0 0.0
    %4032 = vmatpush1.msra.mxu0 %v1377
    %4033 = vmatprep.subr.mxu0 0.0
    %4034 = vmatpush1.msra.mxu0 %v1378
    %4035 = vmatprep.subr.mxu0 0.0
    %4036 = vmatpush1.msra.mxu0 %v1379
    %4037 = vmatprep.subr.mxu0 0.0
    %4038 = vmatpush1.msra.mxu0 %v1380
    %4039 = vmatprep.subr.mxu0 0.0
    %4040 = vmatpush1.msra.mxu0 %v1381
    %4041 = vmatprep.subr.mxu0 0.0
    %4042 = vmatpush1.msra.mxu0 %v1382
    %4043 = vmatprep.subr.mxu0 0.0
    %4044 = vmatpush1.msra.mxu0 %v1383
    %4045 = vmatprep.subr.mxu0 0.0
    %4046 = vmatpush1.msra.mxu0 %v1384
    %4047 = vmatprep.subr.mxu0 0.0
    %4048 = vmatpush1.msra.mxu0 %v1385
    %4049 = vmatprep.subr.mxu0 0.0
    %4050 = vmatpush1.msra.mxu0 %v1386
    %4051 = vmatprep.subr.mxu0 0.0
    %4052 = vmatpush1.msra.mxu0 %v1387
    %4053 = vmatprep.subr.mxu0 0.0
    %4054 = vmatpush1.msra.mxu0 %v1388
    %4055 = vmatprep.subr.mxu0 0.0
    %4056 = vmatpush1.msra.mxu0 %v1389
    %4057 = vmatprep.subr.mxu0 0.0
    %4058 = vmatpush1.msra.mxu0 %v1390
    %4059 = vmatprep.subr.mxu0 0.0
    %4060 = vmatpush1.msra.mxu0 %v1391
    %4061 = vmatprep.subr.mxu0 0.0
    %4062 = vmatpush1.msra.mxu0 %v1392
    %4063 = vmatprep.mubr.f32.mxu0 %v3980
    %4064 = vmatmul.mubr.f32.gmra.mrb[0].mxu0 %v3973
    %v4065 = vpop.f32.mrb[0].mxu0
    %v4066 = vadd.f32 0.0, %v4065
    %v4067 = vpop.f32.mrb[0].mxu0
    %4068 = vmatprep.mubr.f32.mxu0 %v3994
    %4069 = vmatmul.mubr.f32.gmra.mrb[0].mxu0 %v3987
    %v4070 = vpop.f32.mrb[0].mxu0
    %v4071 = vadd.f32 0.0, %v4070
    %v4072 = vpop.f32.mrb[0].mxu0
    %4073 = vdwg.mxu0
    %v4074 = vadd.f32 %v3175, %v4066
    %v4075 = vadd.f32 %v3180, %v4071
    %v4076 = vld [vmem:[%s4] sm:$0x1]
    %v4078 = vlaneseq
    %v4079 = vshrl.u32 %v4078, 7
    %v4080 = vsub.s32 0, %v4079
    %v4081 = vrot.slane %v4076, %v4080
    %v4083 = vadd.f32 %v4074, %v4081
    %v4084 = vadd.f32 %v4075, %v4081
    %4085 = vst [vmem:[#allocation2] sm:$0xff] %v4083
    %4086 = vst [vmem:[#allocation2 + $0x8] sm:$0xff] %v4084
    // Predicated region
    $region22: #{recruitment2_forward.1} parent=1 // pred_check
      _
    $region23: #{recruitment2_forward.1} parent=1 // pred_check_branch
      %4088 = sbr.rel (0) target = $region25
    $region24: #{recruitment2_forward.1} parent=1 // pred_region
      %s4090 = ssub.s32 256, 256
      %4091 = vsyncadd [#allocation3], %s4090
      %s4092 = sshll.u32 [#allocation2], 4
      %s4093 = int_to_ptr.vmem [resolvable:$true] %s4092
      %4098 = dma.vmem_to_hbm [thread:$0]  %s4093, 256, %s5, [#allocation3], 128, 128, 8
    $region25: #{recruitment2_forward.1} parent=1 // pred_fallthru
      _
    // Predicated region
    $region26: #{recruitment2_forward.1} parent=1 // pred_check
      _
    $region27: #{recruitment2_forward.1} parent=1 // pred_check_branch
      %4100 = sbr.rel (0) target = $region29
    $region28: #{recruitment2_forward.1} parent=1 // pred_region
      %4101 = dma.done [#allocation3], 256
    $region29: #{recruitment2_forward.1} parent=1 // pred_fallthru
      _
    %4102 = vsyncpa [#allocation3], 1

</llo_original>
